<compile_context>
chip_gen: v7x
topology: tpu7x:2x2x1
jax: 0.10.0
libtpu: 0.0.40
codegen_flags: <defaults>
</compile_context>

<pallas_src>
import jax
import jax.numpy as jnp
from jax.experimental import pallas as pl
from jax.experimental.pallas import tpu as pltpu

_LANES = 128     # lane width of a vreg
_N_TILES = 2     # channel-grid steps (2 -> both v7x TensorCores get work)


def _dw_conv3x3_kernel(x_ref, w_ref, o_ref):
    # x_ref: (N, H+2, W+2, tc)   spatially pre-padded input tile (NHWC)
    # w_ref: (3, 3, tc)          per-channel 3x3 filters
    # o_ref: (N, H, W, tc)       output tile
    N, Hp, Wp, tc = x_ref.shape
    H, W = Hp - 2, Wp - 2
    for n in range(N):
        # 128-lane sub-tiles keep acc (+ one shifted slab) inside the 64-vreg
        # register file instead of spilling a tc-wide accumulator to VMEM.
        for ci in range(tc // _LANES):
            c0 = ci * _LANES
            acc = jnp.zeros((1, H, W, _LANES), jnp.float32)
            for kw in range(3):
                # One sublane(W)-shifted load per kw; the 3 kh taps below are
                # pure major-axis (H) slices of this value, i.e. no additional
                # sublane-misaligned accesses.
                slab = x_ref[n:n + 1, :, kw:kw + W, c0:c0 + _LANES].astype(
                    jnp.float32)                                   # (1, Hp, W, 128)
                for kh in range(3):
                    wk = w_ref[kh, kw, c0:c0 + _LANES].astype(jnp.float32)  # (128,)
                    acc = acc + slab[:, kh:kh + H] * wk
            o_ref[n:n + 1, :, :, c0:c0 + _LANES] = acc.astype(o_ref.dtype)


@jax.jit
def depthwise_conv3x3(x_nchw, w_oihw):
    """Depthwise 3x3 conv, stride 1, padding 1, no bias.

    x_nchw: (N, C, H, W); w_oihw: (C, 1, 3, 3)  (PyTorch depthwise layout).
    """
    N, C, H, W = x_nchw.shape
    assert w_oihw.shape == (C, 1, 3, 3)

    # Per-step channel tile: multiple of 128 lanes, _N_TILES steps total.
    tc = _LANES * (-(-C // (_LANES * _N_TILES)))
    Cp = tc * _N_TILES

    # NCHW -> NHWC, then ONE pad op covering the spatial halo and lane padding.
    # Under jit the transpose + pad fuse into a single HBM pass.
    x = jnp.transpose(x_nchw, (0, 2, 3, 1))                      # (N, H, W, C)
    x = jnp.pad(x, ((0, 0), (1, 1), (1, 1), (0, Cp - C)))        # (N, H+2, W+2, Cp)
    w = jnp.transpose(w_oihw[:, 0, :, :], (1, 2, 0))             # (3, 3, C)
    w = jnp.pad(w, ((0, 0), (0, 0), (0, Cp - C)))                # (3, 3, Cp)
    Hp, Wp = H + 2, W + 2

    out = pl.pallas_call(
        _dw_conv3x3_kernel,
        out_shape=jax.ShapeDtypeStruct((N, H, W, Cp), x_nchw.dtype),
        grid_spec=pltpu.PrefetchScalarGridSpec(
            num_scalar_prefetch=0,
            grid=(_N_TILES,),
            in_specs=[
                pl.BlockSpec((N, Hp, Wp, tc), lambda c: (0, 0, 0, c)),
                pl.BlockSpec((3, 3, tc), lambda c: (0, 0, c)),
            ],
            out_specs=pl.BlockSpec((N, H, W, tc), lambda c: (0, 0, 0, c)),
        ),
        compiler_params=pltpu.CompilerParams(
            dimension_semantics=("parallel",)),
    )(x, w)

    # Drop lane padding and return to NCHW (slice + transpose fuse under jit).
    out = out[..., :C]
    return jnp.transpose(out, (0, 3, 1, 2))


if __name__ == "__main__":
    key = jax.random.PRNGKey(0)
    kx, kw = jax.random.split(key)

    # Shapes implied by the module: input (1, 864, 14, 14), depthwise 3x3 weight.
    N, C, H, W = 1, 864, 14, 14
    x = jax.random.normal(kx, (N, C, H, W), dtype=jnp.float32)
    weight = jax.random.normal(kw, (C, 1, 3, 3), dtype=jnp.float32) * 0.1

    y = depthwise_conv3x3(x, weight)
    y = jax.block_until_ready(y)

    # Reference check against XLA's grouped conv (same semantics as PyTorch's
    # Conv2d(864, 864, 3, stride=1, padding=1, groups=864, bias=False)).
    y_ref = jax.lax.conv_general_dilated(
        x, weight, window_strides=(1, 1), padding=((1, 1), (1, 1)),
        dimension_numbers=("NCHW", "OIHW", "NCHW"),
        feature_group_count=C)
    assert y.shape == (N, C, H, W)
    assert jnp.allclose(y, y_ref, rtol=1e-5, atol=1e-5)

    print("KERNEL_OK")
</pallas_src>

<mosaic_0001>
module attributes {stable_mosaic.version = 11 : i64} {
  func.func @_dw_conv3x3_kernel(%arg0: i32, %arg1: memref<1x16x16x512xf32, #tpu.memory_space<vmem>>, %arg2: memref<3x3x512xf32, #tpu.memory_space<vmem>>, %arg3: memref<1x14x14x512xf32, #tpu.memory_space<vmem>>) attributes {dimension_semantics = [#tpu.dimension_semantics<parallel>], iteration_bounds = array<i64: 2>, scalar_prefetch = 0 : i64, scratch_operands = 0 : i64, tpu.core_type = #tpu.core_type<tc>, window_params = [{transform_indices = @transform_0, window_bounds = array<i64: 1, 16, 16, 512>}, {transform_indices = @transform_1, window_bounds = array<i64: 3, 3, 512>}, {transform_indices = @transform_2, window_bounds = array<i64: 1, 14, 14, 512>}]} {
    %cst = arith.constant 0.000000e+00 : f32
    %0 = vector.broadcast %cst : f32 to vector<1x14x14x128xf32>
    %c0 = arith.constant 0 : index
    %c0_0 = arith.constant 0 : index
    %c0_1 = arith.constant 0 : index
    %c0_2 = arith.constant 0 : index
    %1 = vector.load %arg1[%c0, %c0_0, %c0_1, %c0_2] : memref<1x16x16x512xf32, #tpu.memory_space<vmem>>, vector<1x16x14x128xf32>
    %c0_3 = arith.constant 0 : index
    %c0_4 = arith.constant 0 : index
    %c0_5 = arith.constant 0 : index
    %2 = vector.load %arg2[%c0_3, %c0_4, %c0_5] : memref<3x3x512xf32, #tpu.memory_space<vmem>>, vector<1x1x128xf32>
    %3 = vector.shape_cast %2 : vector<1x1x128xf32> to vector<128xf32>
    %4 = vector.extract_strided_slice %1 {offsets = [0, 0, 0, 0], sizes = [1, 14, 14, 128], strides = [1, 1, 1, 1]} : vector<1x16x14x128xf32> to vector<1x14x14x128xf32>
    %5 = vector.shape_cast %3 : vector<128xf32> to vector<1x1x1x128xf32>
    %6 = vector.broadcast %5 : vector<1x1x1x128xf32> to vector<1x14x14x128xf32>
    %7 = arith.mulf %4, %6 : vector<1x14x14x128xf32>
    %8 = arith.addf %0, %7 : vector<1x14x14x128xf32>
    %c1 = arith.constant 1 : index
    %c0_6 = arith.constant 0 : index
    %c0_7 = arith.constant 0 : index
    %9 = vector.load %arg2[%c1, %c0_6, %c0_7] : memref<3x3x512xf32, #tpu.memory_space<vmem>>, vector<1x1x128xf32>
    %10 = vector.shape_cast %9 : vector<1x1x128xf32> to vector<128xf32>
    %11 = vector.extract_strided_slice %1 {offsets = [0, 1, 0, 0], sizes = [1, 14, 14, 128], strides = [1, 1, 1, 1]} : vector<1x16x14x128xf32> to vector<1x14x14x128xf32>
    %12 = vector.shape_cast %10 : vector<128xf32> to vector<1x1x1x128xf32>
    %13 = vector.broadcast %12 : vector<1x1x1x128xf32> to vector<1x14x14x128xf32>
    %14 = arith.mulf %11, %13 : vector<1x14x14x128xf32>
    %15 = arith.addf %8, %14 : vector<1x14x14x128xf32>
    %c2 = arith.constant 2 : index
    %c0_8 = arith.constant 0 : index
    %c0_9 = arith.constant 0 : index
    %16 = vector.load %arg2[%c2, %c0_8, %c0_9] : memref<3x3x512xf32, #tpu.memory_space<vmem>>, vector<1x1x128xf32>
    %17 = vector.shape_cast %16 : vector<1x1x128xf32> to vector<128xf32>
    %18 = vector.extract_strided_slice %1 {offsets = [0, 2, 0, 0], sizes = [1, 14, 14, 128], strides = [1, 1, 1, 1]} : vector<1x16x14x128xf32> to vector<1x14x14x128xf32>
    %19 = vector.shape_cast %17 : vector<128xf32> to vector<1x1x1x128xf32>
    %20 = vector.broadcast %19 : vector<1x1x1x128xf32> to vector<1x14x14x128xf32>
    %21 = arith.mulf %18, %20 : vector<1x14x14x128xf32>
    %22 = arith.addf %15, %21 : vector<1x14x14x128xf32>
    %c0_10 = arith.constant 0 : index
    %c0_11 = arith.constant 0 : index
    %c1_12 = arith.constant 1 : index
    %c0_13 = arith.constant 0 : index
    %23 = vector.load %arg1[%c0_10, %c0_11, %c1_12, %c0_13] : memref<1x16x16x512xf32, #tpu.memory_space<vmem>>, vector<1x16x14x128xf32>
    %c0_14 = arith.constant 0 : index
    %c1_15 = arith.constant 1 : index
    %c0_16 = arith.constant 0 : index
    %24 = vector.load %arg2[%c0_14, %c1_15, %c0_16] : memref<3x3x512xf32, #tpu.memory_space<vmem>>, vector<1x1x128xf32>
    %25 = vector.shape_cast %24 : vector<1x1x128xf32> to vector<128xf32>
    %26 = vector.extract_strided_slice %23 {offsets = [0, 0, 0, 0], sizes = [1, 14, 14, 128], strides = [1, 1, 1, 1]} : vector<1x16x14x128xf32> to vector<1x14x14x128xf32>
    %27 = vector.shape_cast %25 : vector<128xf32> to vector<1x1x1x128xf32>
    %28 = vector.broadcast %27 : vector<1x1x1x128xf32> to vector<1x14x14x128xf32>
    %29 = arith.mulf %26, %28 : vector<1x14x14x128xf32>
    %30 = arith.addf %22, %29 : vector<1x14x14x128xf32>
    %c1_17 = arith.constant 1 : index
    %c1_18 = arith.constant 1 : index
    %c0_19 = arith.constant 0 : index
    %31 = vector.load %arg2[%c1_17, %c1_18, %c0_19] : memref<3x3x512xf32, #tpu.memory_space<vmem>>, vector<1x1x128xf32>
    %32 = vector.shape_cast %31 : vector<1x1x128xf32> to vector<128xf32>
    %33 = vector.extract_strided_slice %23 {offsets = [0, 1, 0, 0], sizes = [1, 14, 14, 128], strides = [1, 1, 1, 1]} : vector<1x16x14x128xf32> to vector<1x14x14x128xf32>
    %34 = vector.shape_cast %32 : vector<128xf32> to vector<1x1x1x128xf32>
    %35 = vector.broadcast %34 : vector<1x1x1x128xf32> to vector<1x14x14x128xf32>
    %36 = arith.mulf %33, %35 : vector<1x14x14x128xf32>
    %37 = arith.addf %30, %36 : vector<1x14x14x128xf32>
    %c2_20 = arith.constant 2 : index
    %c1_21 = arith.constant 1 : index
    %c0_22 = arith.constant 0 : index
    %38 = vector.load %arg2[%c2_20, %c1_21, %c0_22] : memref<3x3x512xf32, #tpu.memory_space<vmem>>, vector<1x1x128xf32>
    %39 = vector.shape_cast %38 : vector<1x1x128xf32> to vector<128xf32>
    %40 = vector.extract_strided_slice %23 {offsets = [0, 2, 0, 0], sizes = [1, 14, 14, 128], strides = [1, 1, 1, 1]} : vector<1x16x14x128xf32> to vector<1x14x14x128xf32>
    %41 = vector.shape_cast %39 : vector<128xf32> to vector<1x1x1x128xf32>
    %42 = vector.broadcast %41 : vector<1x1x1x128xf32> to vector<1x14x14x128xf32>
    %43 = arith.mulf %40, %42 : vector<1x14x14x128xf32>
    %44 = arith.addf %37, %43 : vector<1x14x14x128xf32>
    %c0_23 = arith.constant 0 : index
    %c0_24 = arith.constant 0 : index
    %c2_25 = arith.constant 2 : index
    %c0_26 = arith.constant 0 : index
    %45 = vector.load %arg1[%c0_23, %c0_24, %c2_25, %c0_26] : memref<1x16x16x512xf32, #tpu.memory_space<vmem>>, vector<1x16x14x128xf32>
    %c0_27 = arith.constant 0 : index
    %c2_28 = arith.constant 2 : index
    %c0_29 = arith.constant 0 : index
    %46 = vector.load %arg2[%c0_27, %c2_28, %c0_29] : memref<3x3x512xf32, #tpu.memory_space<vmem>>, vector<1x1x128xf32>
    %47 = vector.shape_cast %46 : vector<1x1x128xf32> to vector<128xf32>
    %48 = vector.extract_strided_slice %45 {offsets = [0, 0, 0, 0], sizes = [1, 14, 14, 128], strides = [1, 1, 1, 1]} : vector<1x16x14x128xf32> to vector<1x14x14x128xf32>
    %49 = vector.shape_cast %47 : vector<128xf32> to vector<1x1x1x128xf32>
    %50 = vector.broadcast %49 : vector<1x1x1x128xf32> to vector<1x14x14x128xf32>
    %51 = arith.mulf %48, %50 : vector<1x14x14x128xf32>
    %52 = arith.addf %44, %51 : vector<1x14x14x128xf32>
    %c1_30 = arith.constant 1 : index
    %c2_31 = arith.constant 2 : index
    %c0_32 = arith.constant 0 : index
    %53 = vector.load %arg2[%c1_30, %c2_31, %c0_32] : memref<3x3x512xf32, #tpu.memory_space<vmem>>, vector<1x1x128xf32>
    %54 = vector.shape_cast %53 : vector<1x1x128xf32> to vector<128xf32>
    %55 = vector.extract_strided_slice %45 {offsets = [0, 1, 0, 0], sizes = [1, 14, 14, 128], strides = [1, 1, 1, 1]} : vector<1x16x14x128xf32> to vector<1x14x14x128xf32>
    %56 = vector.shape_cast %54 : vector<128xf32> to vector<1x1x1x128xf32>
    %57 = vector.broadcast %56 : vector<1x1x1x128xf32> to vector<1x14x14x128xf32>
    %58 = arith.mulf %55, %57 : vector<1x14x14x128xf32>
    %59 = arith.addf %52, %58 : vector<1x14x14x128xf32>
    %c2_33 = arith.constant 2 : index
    %c2_34 = arith.constant 2 : index
    %c0_35 = arith.constant 0 : index
    %60 = vector.load %arg2[%c2_33, %c2_34, %c0_35] : memref<3x3x512xf32, #tpu.memory_space<vmem>>, vector<1x1x128xf32>
    %61 = vector.shape_cast %60 : vector<1x1x128xf32> to vector<128xf32>
    %62 = vector.extract_strided_slice %45 {offsets = [0, 2, 0, 0], sizes = [1, 14, 14, 128], strides = [1, 1, 1, 1]} : vector<1x16x14x128xf32> to vector<1x14x14x128xf32>
    %63 = vector.shape_cast %61 : vector<128xf32> to vector<1x1x1x128xf32>
    %64 = vector.broadcast %63 : vector<1x1x1x128xf32> to vector<1x14x14x128xf32>
    %65 = arith.mulf %62, %64 : vector<1x14x14x128xf32>
    %66 = arith.addf %59, %65 : vector<1x14x14x128xf32>
    %c0_36 = arith.constant 0 : index
    %c0_37 = arith.constant 0 : index
    %c0_38 = arith.constant 0 : index
    %c0_39 = arith.constant 0 : index
    %67 = vector.load %arg3[%c0_36, %c0_37, %c0_38, %c0_39] : memref<1x14x14x512xf32, #tpu.memory_space<vmem>>, vector<1x14x14x128xf32>
    tpu.vector_store %arg3[%c0_36, %c0_37, %c0_38, %c0_39], %66 {strides = array<i32>} : memref<1x14x14x512xf32, #tpu.memory_space<vmem>>, vector<1x14x14x128xf32>,
    %cst_40 = arith.constant 0.000000e+00 : f32
    %68 = vector.broadcast %cst_40 : f32 to vector<1x14x14x128xf32>
    %c0_41 = arith.constant 0 : index
    %c0_42 = arith.constant 0 : index
    %c0_43 = arith.constant 0 : index
    %c128 = arith.constant 128 : index
    %69 = vector.load %arg1[%c0_41, %c0_42, %c0_43, %c128] : memref<1x16x16x512xf32, #tpu.memory_space<vmem>>, vector<1x16x14x128xf32>
    %c0_44 = arith.constant 0 : index
    %c0_45 = arith.constant 0 : index
    %c128_46 = arith.constant 128 : index
    %70 = vector.load %arg2[%c0_44, %c0_45, %c128_46] : memref<3x3x512xf32, #tpu.memory_space<vmem>>, vector<1x1x128xf32>
    %71 = vector.shape_cast %70 : vector<1x1x128xf32> to vector<128xf32>
    %72 = vector.extract_strided_slice %69 {offsets = [0, 0, 0, 0], sizes = [1, 14, 14, 128], strides = [1, 1, 1, 1]} : vector<1x16x14x128xf32> to vector<1x14x14x128xf32>
    %73 = vector.shape_cast %71 : vector<128xf32> to vector<1x1x1x128xf32>
    %74 = vector.broadcast %73 : vector<1x1x1x128xf32> to vector<1x14x14x128xf32>
    %75 = arith.mulf %72, %74 : vector<1x14x14x128xf32>
    %76 = arith.addf %68, %75 : vector<1x14x14x128xf32>
    %c1_47 = arith.constant 1 : index
    %c0_48 = arith.constant 0 : index
    %c128_49 = arith.constant 128 : index
    %77 = vector.load %arg2[%c1_47, %c0_48, %c128_49] : memref<3x3x512xf32, #tpu.memory_space<vmem>>, vector<1x1x128xf32>
    %78 = vector.shape_cast %77 : vector<1x1x128xf32> to vector<128xf32>
    %79 = vector.extract_strided_slice %69 {offsets = [0, 1, 0, 0], sizes = [1, 14, 14, 128], strides = [1, 1, 1, 1]} : vector<1x16x14x128xf32> to vector<1x14x14x128xf32>
    %80 = vector.shape_cast %78 : vector<128xf32> to vector<1x1x1x128xf32>
    %81 = vector.broadcast %80 : vector<1x1x1x128xf32> to vector<1x14x14x128xf32>
    %82 = arith.mulf %79, %81 : vector<1x14x14x128xf32>
    %83 = arith.addf %76, %82 : vector<1x14x14x128xf32>
    %c2_50 = arith.constant 2 : index
    %c0_51 = arith.constant 0 : index
    %c128_52 = arith.constant 128 : index
    %84 = vector.load %arg2[%c2_50, %c0_51, %c128_52] : memref<3x3x512xf32, #tpu.memory_space<vmem>>, vector<1x1x128xf32>
    %85 = vector.shape_cast %84 : vector<1x1x128xf32> to vector<128xf32>
    %86 = vector.extract_strided_slice %69 {offsets = [0, 2, 0, 0], sizes = [1, 14, 14, 128], strides = [1, 1, 1, 1]} : vector<1x16x14x128xf32> to vector<1x14x14x128xf32>
    %87 = vector.shape_cast %85 : vector<128xf32> to vector<1x1x1x128xf32>
    %88 = vector.broadcast %87 : vector<1x1x1x128xf32> to vector<1x14x14x128xf32>
    %89 = arith.mulf %86, %88 : vector<1x14x14x128xf32>
    %90 = arith.addf %83, %89 : vector<1x14x14x128xf32>
    %c0_53 = arith.constant 0 : index
    %c0_54 = arith.constant 0 : index
    %c1_55 = arith.constant 1 : index
    %c128_56 = arith.constant 128 : index
    %91 = vector.load %arg1[%c0_53, %c0_54, %c1_55, %c128_56] : memref<1x16x16x512xf32, #tpu.memory_space<vmem>>, vector<1x16x14x128xf32>
    %c0_57 = arith.constant 0 : index
    %c1_58 = arith.constant 1 : index
    %c128_59 = arith.constant 128 : index
    %92 = vector.load %arg2[%c0_57, %c1_58, %c128_59] : memref<3x3x512xf32, #tpu.memory_space<vmem>>, vector<1x1x128xf32>
    %93 = vector.shape_cast %92 : vector<1x1x128xf32> to vector<128xf32>
    %94 = vector.extract_strided_slice %91 {offsets = [0, 0, 0, 0], sizes = [1, 14, 14, 128], strides = [1, 1, 1, 1]} : vector<1x16x14x128xf32> to vector<1x14x14x128xf32>
    %95 = vector.shape_cast %93 : vector<128xf32> to vector<1x1x1x128xf32>
    %96 = vector.broadcast %95 : vector<1x1x1x128xf32> to vector<1x14x14x128xf32>
    %97 = arith.mulf %94, %96 : vector<1x14x14x128xf32>
    %98 = arith.addf %90, %97 : vector<1x14x14x128xf32>
    %c1_60 = arith.constant 1 : index
    %c1_61 = arith.constant 1 : index
    %c128_62 = arith.constant 128 : index
    %99 = vector.load %arg2[%c1_60, %c1_61, %c128_62] : memref<3x3x512xf32, #tpu.memory_space<vmem>>, vector<1x1x128xf32>
    %100 = vector.shape_cast %99 : vector<1x1x128xf32> to vector<128xf32>
    %101 = vector.extract_strided_slice %91 {offsets = [0, 1, 0, 0], sizes = [1, 14, 14, 128], strides = [1, 1, 1, 1]} : vector<1x16x14x128xf32> to vector<1x14x14x128xf32>
    %102 = vector.shape_cast %100 : vector<128xf32> to vector<1x1x1x128xf32>
    %103 = vector.broadcast %102 : vector<1x1x1x128xf32> to vector<1x14x14x128xf32>
    %104 = arith.mulf %101, %103 : vector<1x14x14x128xf32>
    %105 = arith.addf %98, %104 : vector<1x14x14x128xf32>
    %c2_63 = arith.constant 2 : index
    %c1_64 = arith.constant 1 : index
    %c128_65 = arith.constant 128 : index
    %106 = vector.load %arg2[%c2_63, %c1_64, %c128_65] : memref<3x3x512xf32, #tpu.memory_space<vmem>>, vector<1x1x128xf32>
    %107 = vector.shape_cast %106 : vector<1x1x128xf32> to vector<128xf32>
    %108 = vector.extract_strided_slice %91 {offsets = [0, 2, 0, 0], sizes = [1, 14, 14, 128], strides = [1, 1, 1, 1]} : vector<1x16x14x128xf32> to vector<1x14x14x128xf32>
    %109 = vector.shape_cast %107 : vector<128xf32> to vector<1x1x1x128xf32>
    %110 = vector.broadcast %109 : vector<1x1x1x128xf32> to vector<1x14x14x128xf32>
    %111 = arith.mulf %108, %110 : vector<1x14x14x128xf32>
    %112 = arith.addf %105, %111 : vector<1x14x14x128xf32>
    %c0_66 = arith.constant 0 : index
    %c0_67 = arith.constant 0 : index
    %c2_68 = arith.constant 2 : index
    %c128_69 = arith.constant 128 : index
    %113 = vector.load %arg1[%c0_66, %c0_67, %c2_68, %c128_69] : memref<1x16x16x512xf32, #tpu.memory_space<vmem>>, vector<1x16x14x128xf32>
    %c0_70 = arith.constant 0 : index
    %c2_71 = arith.constant 2 : index
    %c128_72 = arith.constant 128 : index
    %114 = vector.load %arg2[%c0_70, %c2_71, %c128_72] : memref<3x3x512xf32, #tpu.memory_space<vmem>>, vector<1x1x128xf32>
    %115 = vector.shape_cast %114 : vector<1x1x128xf32> to vector<128xf32>
    %116 = vector.extract_strided_slice %113 {offsets = [0, 0, 0, 0], sizes = [1, 14, 14, 128], strides = [1, 1, 1, 1]} : vector<1x16x14x128xf32> to vector<1x14x14x128xf32>
    %117 = vector.shape_cast %115 : vector<128xf32> to vector<1x1x1x128xf32>
    %118 = vector.broadcast %117 : vector<1x1x1x128xf32> to vector<1x14x14x128xf32>
    %119 = arith.mulf %116, %118 : vector<1x14x14x128xf32>
    %120 = arith.addf %112, %119 : vector<1x14x14x128xf32>
    %c1_73 = arith.constant 1 : index
    %c2_74 = arith.constant 2 : index
    %c128_75 = arith.constant 128 : index
    %121 = vector.load %arg2[%c1_73, %c2_74, %c128_75] : memref<3x3x512xf32, #tpu.memory_space<vmem>>, vector<1x1x128xf32>
    %122 = vector.shape_cast %121 : vector<1x1x128xf32> to vector<128xf32>
    %123 = vector.extract_strided_slice %113 {offsets = [0, 1, 0, 0], sizes = [1, 14, 14, 128], strides = [1, 1, 1, 1]} : vector<1x16x14x128xf32> to vector<1x14x14x128xf32>
    %124 = vector.shape_cast %122 : vector<128xf32> to vector<1x1x1x128xf32>
    %125 = vector.broadcast %124 : vector<1x1x1x128xf32> to vector<1x14x14x128xf32>
    %126 = arith.mulf %123, %125 : vector<1x14x14x128xf32>
    %127 = arith.addf %120, %126 : vector<1x14x14x128xf32>
    %c2_76 = arith.constant 2 : index
    %c2_77 = arith.constant 2 : index
    %c128_78 = arith.constant 128 : index
    %128 = vector.load %arg2[%c2_76, %c2_77, %c128_78] : memref<3x3x512xf32, #tpu.memory_space<vmem>>, vector<1x1x128xf32>
    %129 = vector.shape_cast %128 : vector<1x1x128xf32> to vector<128xf32>
    %130 = vector.extract_strided_slice %113 {offsets = [0, 2, 0, 0], sizes = [1, 14, 14, 128], strides = [1, 1, 1, 1]} : vector<1x16x14x128xf32> to vector<1x14x14x128xf32>
    %131 = vector.shape_cast %129 : vector<128xf32> to vector<1x1x1x128xf32>
    %132 = vector.broadcast %131 : vector<1x1x1x128xf32> to vector<1x14x14x128xf32>
    %133 = arith.mulf %130, %132 : vector<1x14x14x128xf32>
    %134 = arith.addf %127, %133 : vector<1x14x14x128xf32>
    %c0_79 = arith.constant 0 : index
    %c0_80 = arith.constant 0 : index
    %c0_81 = arith.constant 0 : index
    %c128_82 = arith.constant 128 : index
    %135 = vector.load %arg3[%c0_79, %c0_80, %c0_81, %c128_82] : memref<1x14x14x512xf32, #tpu.memory_space<vmem>>, vector<1x14x14x128xf32>
    tpu.vector_store %arg3[%c0_79, %c0_80, %c0_81, %c128_82], %134 {strides = array<i32>} : memref<1x14x14x512xf32, #tpu.memory_space<vmem>>, vector<1x14x14x128xf32>,
    %cst_83 = arith.constant 0.000000e+00 : f32
    %136 = vector.broadcast %cst_83 : f32 to vector<1x14x14x128xf32>
    %c0_84 = arith.constant 0 : index
    %c0_85 = arith.constant 0 : index
    %c0_86 = arith.constant 0 : index
    %c256 = arith.constant 256 : index
    %137 = vector.load %arg1[%c0_84, %c0_85, %c0_86, %c256] : memref<1x16x16x512xf32, #tpu.memory_space<vmem>>, vector<1x16x14x128xf32>
    %c0_87 = arith.constant 0 : index
    %c0_88 = arith.constant 0 : index
    %c256_89 = arith.constant 256 : index
    %138 = vector.load %arg2[%c0_87, %c0_88, %c256_89] : memref<3x3x512xf32, #tpu.memory_space<vmem>>, vector<1x1x128xf32>
    %139 = vector.shape_cast %138 : vector<1x1x128xf32> to vector<128xf32>
    %140 = vector.extract_strided_slice %137 {offsets = [0, 0, 0, 0], sizes = [1, 14, 14, 128], strides = [1, 1, 1, 1]} : vector<1x16x14x128xf32> to vector<1x14x14x128xf32>
    %141 = vector.shape_cast %139 : vector<128xf32> to vector<1x1x1x128xf32>
    %142 = vector.broadcast %141 : vector<1x1x1x128xf32> to vector<1x14x14x128xf32>
    %143 = arith.mulf %140, %142 : vector<1x14x14x128xf32>
    %144 = arith.addf %136, %143 : vector<1x14x14x128xf32>
    %c1_90 = arith.constant 1 : index
    %c0_91 = arith.constant 0 : index
    %c256_92 = arith.constant 256 : index
    %145 = vector.load %arg2[%c1_90, %c0_91, %c256_92] : memref<3x3x512xf32, #tpu.memory_space<vmem>>, vector<1x1x128xf32>
    %146 = vector.shape_cast %145 : vector<1x1x128xf32> to vector<128xf32>
    %147 = vector.extract_strided_slice %137 {offsets = [0, 1, 0, 0], sizes = [1, 14, 14, 128], strides = [1, 1, 1, 1]} : vector<1x16x14x128xf32> to vector<1x14x14x128xf32>
    %148 = vector.shape_cast %146 : vector<128xf32> to vector<1x1x1x128xf32>
    %149 = vector.broadcast %148 : vector<1x1x1x128xf32> to vector<1x14x14x128xf32>
    %150 = arith.mulf %147, %149 : vector<1x14x14x128xf32>
    %151 = arith.addf %144, %150 : vector<1x14x14x128xf32>
    %c2_93 = arith.constant 2 : index
    %c0_94 = arith.constant 0 : index
    %c256_95 = arith.constant 256 : index
    %152 = vector.load %arg2[%c2_93, %c0_94, %c256_95] : memref<3x3x512xf32, #tpu.memory_space<vmem>>, vector<1x1x128xf32>
    %153 = vector.shape_cast %152 : vector<1x1x128xf32> to vector<128xf32>
    %154 = vector.extract_strided_slice %137 {offsets = [0, 2, 0, 0], sizes = [1, 14, 14, 128], strides = [1, 1, 1, 1]} : vector<1x16x14x128xf32> to vector<1x14x14x128xf32>
    %155 = vector.shape_cast %153 : vector<128xf32> to vector<1x1x1x128xf32>
    %156 = vector.broadcast %155 : vector<1x1x1x128xf32> to vector<1x14x14x128xf32>
    %157 = arith.mulf %154, %156 : vector<1x14x14x128xf32>
    %158 = arith.addf %151, %157 : vector<1x14x14x128xf32>
    %c0_96 = arith.constant 0 : index
    %c0_97 = arith.constant 0 : index
    %c1_98 = arith.constant 1 : index
    %c256_99 = arith.constant 256 : index
    %159 = vector.load %arg1[%c0_96, %c0_97, %c1_98, %c256_99] : memref<1x16x16x512xf32, #tpu.memory_space<vmem>>, vector<1x16x14x128xf32>
    %c0_100 = arith.constant 0 : index
    %c1_101 = arith.constant 1 : index
    %c256_102 = arith.constant 256 : index
    %160 = vector.load %arg2[%c0_100, %c1_101, %c256_102] : memref<3x3x512xf32, #tpu.memory_space<vmem>>, vector<1x1x128xf32>
    %161 = vector.shape_cast %160 : vector<1x1x128xf32> to vector<128xf32>
    %162 = vector.extract_strided_slice %159 {offsets = [0, 0, 0, 0], sizes = [1, 14, 14, 128], strides = [1, 1, 1, 1]} : vector<1x16x14x128xf32> to vector<1x14x14x128xf32>
    %163 = vector.shape_cast %161 : vector<128xf32> to vector<1x1x1x128xf32>
    %164 = vector.broadcast %163 : vector<1x1x1x128xf32> to vector<1x14x14x128xf32>
    %165 = arith.mulf %162, %164 : vector<1x14x14x128xf32>
    %166 = arith.addf %158, %165 : vector<1x14x14x128xf32>
    %c1_103 = arith.constant 1 : index
    %c1_104 = arith.constant 1 : index
    %c256_105 = arith.constant 256 : index
    %167 = vector.load %arg2[%c1_103, %c1_104, %c256_105] : memref<3x3x512xf32, #tpu.memory_space<vmem>>, vector<1x1x128xf32>
    %168 = vector.shape_cast %167 : vector<1x1x128xf32> to vector<128xf32>
    %169 = vector.extract_strided_slice %159 {offsets = [0, 1, 0, 0], sizes = [1, 14, 14, 128], strides = [1, 1, 1, 1]} : vector<1x16x14x128xf32> to vector<1x14x14x128xf32>
    %170 = vector.shape_cast %168 : vector<128xf32> to vector<1x1x1x128xf32>
    %171 = vector.broadcast %170 : vector<1x1x1x128xf32> to vector<1x14x14x128xf32>
    %172 = arith.mulf %169, %171 : vector<1x14x14x128xf32>
    %173 = arith.addf %166, %172 : vector<1x14x14x128xf32>
    %c2_106 = arith.constant 2 : index
    %c1_107 = arith.constant 1 : index
    %c256_108 = arith.constant 256 : index
    %174 = vector.load %arg2[%c2_106, %c1_107, %c256_108] : memref<3x3x512xf32, #tpu.memory_space<vmem>>, vector<1x1x128xf32>
    %175 = vector.shape_cast %174 : vector<1x1x128xf32> to vector<128xf32>
    %176 = vector.extract_strided_slice %159 {offsets = [0, 2, 0, 0], sizes = [1, 14, 14, 128], strides = [1, 1, 1, 1]} : vector<1x16x14x128xf32> to vector<1x14x14x128xf32>
    %177 = vector.shape_cast %175 : vector<128xf32> to vector<1x1x1x128xf32>
    %178 = vector.broadcast %177 : vector<1x1x1x128xf32> to vector<1x14x14x128xf32>
    %179 = arith.mulf %176, %178 : vector<1x14x14x128xf32>
    %180 = arith.addf %173, %179 : vector<1x14x14x128xf32>
    %c0_109 = arith.constant 0 : index
    %c0_110 = arith.constant 0 : index
    %c2_111 = arith.constant 2 : index
    %c256_112 = arith.constant 256 : index
    %181 = vector.load %arg1[%c0_109, %c0_110, %c2_111, %c256_112] : memref<1x16x16x512xf32, #tpu.memory_space<vmem>>, vector<1x16x14x128xf32>
    %c0_113 = arith.constant 0 : index
    %c2_114 = arith.constant 2 : index
    %c256_115 = arith.constant 256 : index
    %182 = vector.load %arg2[%c0_113, %c2_114, %c256_115] : memref<3x3x512xf32, #tpu.memory_space<vmem>>, vector<1x1x128xf32>
    %183 = vector.shape_cast %182 : vector<1x1x128xf32> to vector<128xf32>
    %184 = vector.extract_strided_slice %181 {offsets = [0, 0, 0, 0], sizes = [1, 14, 14, 128], strides = [1, 1, 1, 1]} : vector<1x16x14x128xf32> to vector<1x14x14x128xf32>
    %185 = vector.shape_cast %183 : vector<128xf32> to vector<1x1x1x128xf32>
    %186 = vector.broadcast %185 : vector<1x1x1x128xf32> to vector<1x14x14x128xf32>
    %187 = arith.mulf %184, %186 : vector<1x14x14x128xf32>
    %188 = arith.addf %180, %187 : vector<1x14x14x128xf32>
    %c1_116 = arith.constant 1 : index
    %c2_117 = arith.constant 2 : index
    %c256_118 = arith.constant 256 : index
    %189 = vector.load %arg2[%c1_116, %c2_117, %c256_118] : memref<3x3x512xf32, #tpu.memory_space<vmem>>, vector<1x1x128xf32>
    %190 = vector.shape_cast %189 : vector<1x1x128xf32> to vector<128xf32>
    %191 = vector.extract_strided_slice %181 {offsets = [0, 1, 0, 0], sizes = [1, 14, 14, 128], strides = [1, 1, 1, 1]} : vector<1x16x14x128xf32> to vector<1x14x14x128xf32>
    %192 = vector.shape_cast %190 : vector<128xf32> to vector<1x1x1x128xf32>
    %193 = vector.broadcast %192 : vector<1x1x1x128xf32> to vector<1x14x14x128xf32>
    %194 = arith.mulf %191, %193 : vector<1x14x14x128xf32>
    %195 = arith.addf %188, %194 : vector<1x14x14x128xf32>
    %c2_119 = arith.constant 2 : index
    %c2_120 = arith.constant 2 : index
    %c256_121 = arith.constant 256 : index
    %196 = vector.load %arg2[%c2_119, %c2_120, %c256_121] : memref<3x3x512xf32, #tpu.memory_space<vmem>>, vector<1x1x128xf32>
    %197 = vector.shape_cast %196 : vector<1x1x128xf32> to vector<128xf32>
    %198 = vector.extract_strided_slice %181 {offsets = [0, 2, 0, 0], sizes = [1, 14, 14, 128], strides = [1, 1, 1, 1]} : vector<1x16x14x128xf32> to vector<1x14x14x128xf32>
    %199 = vector.shape_cast %197 : vector<128xf32> to vector<1x1x1x128xf32>
    %200 = vector.broadcast %199 : vector<1x1x1x128xf32> to vector<1x14x14x128xf32>
    %201 = arith.mulf %198, %200 : vector<1x14x14x128xf32>
    %202 = arith.addf %195, %201 : vector<1x14x14x128xf32>
    %c0_122 = arith.constant 0 : index
    %c0_123 = arith.constant 0 : index
    %c0_124 = arith.constant 0 : index
    %c256_125 = arith.constant 256 : index
    %203 = vector.load %arg3[%c0_122, %c0_123, %c0_124, %c256_125] : memref<1x14x14x512xf32, #tpu.memory_space<vmem>>, vector<1x14x14x128xf32>
    tpu.vector_store %arg3[%c0_122, %c0_123, %c0_124, %c256_125], %202 {strides = array<i32>} : memref<1x14x14x512xf32, #tpu.memory_space<vmem>>, vector<1x14x14x128xf32>,
    %cst_126 = arith.constant 0.000000e+00 : f32
    %204 = vector.broadcast %cst_126 : f32 to vector<1x14x14x128xf32>
    %c0_127 = arith.constant 0 : index
    %c0_128 = arith.constant 0 : index
    %c0_129 = arith.constant 0 : index
    %c384 = arith.constant 384 : index
    %205 = vector.load %arg1[%c0_127, %c0_128, %c0_129, %c384] : memref<1x16x16x512xf32, #tpu.memory_space<vmem>>, vector<1x16x14x128xf32>
    %c0_130 = arith.constant 0 : index
    %c0_131 = arith.constant 0 : index
    %c384_132 = arith.constant 384 : index
    %206 = vector.load %arg2[%c0_130, %c0_131, %c384_132] : memref<3x3x512xf32, #tpu.memory_space<vmem>>, vector<1x1x128xf32>
    %207 = vector.shape_cast %206 : vector<1x1x128xf32> to vector<128xf32>
    %208 = vector.extract_strided_slice %205 {offsets = [0, 0, 0, 0], sizes = [1, 14, 14, 128], strides = [1, 1, 1, 1]} : vector<1x16x14x128xf32> to vector<1x14x14x128xf32>
    %209 = vector.shape_cast %207 : vector<128xf32> to vector<1x1x1x128xf32>
    %210 = vector.broadcast %209 : vector<1x1x1x128xf32> to vector<1x14x14x128xf32>
    %211 = arith.mulf %208, %210 : vector<1x14x14x128xf32>
    %212 = arith.addf %204, %211 : vector<1x14x14x128xf32>
    %c1_133 = arith.constant 1 : index
    %c0_134 = arith.constant 0 : index
    %c384_135 = arith.constant 384 : index
    %213 = vector.load %arg2[%c1_133, %c0_134, %c384_135] : memref<3x3x512xf32, #tpu.memory_space<vmem>>, vector<1x1x128xf32>
    %214 = vector.shape_cast %213 : vector<1x1x128xf32> to vector<128xf32>
    %215 = vector.extract_strided_slice %205 {offsets = [0, 1, 0, 0], sizes = [1, 14, 14, 128], strides = [1, 1, 1, 1]} : vector<1x16x14x128xf32> to vector<1x14x14x128xf32>
    %216 = vector.shape_cast %214 : vector<128xf32> to vector<1x1x1x128xf32>
    %217 = vector.broadcast %216 : vector<1x1x1x128xf32> to vector<1x14x14x128xf32>
    %218 = arith.mulf %215, %217 : vector<1x14x14x128xf32>
    %219 = arith.addf %212, %218 : vector<1x14x14x128xf32>
    %c2_136 = arith.constant 2 : index
    %c0_137 = arith.constant 0 : index
    %c384_138 = arith.constant 384 : index
    %220 = vector.load %arg2[%c2_136, %c0_137, %c384_138] : memref<3x3x512xf32, #tpu.memory_space<vmem>>, vector<1x1x128xf32>
    %221 = vector.shape_cast %220 : vector<1x1x128xf32> to vector<128xf32>
    %222 = vector.extract_strided_slice %205 {offsets = [0, 2, 0, 0], sizes = [1, 14, 14, 128], strides = [1, 1, 1, 1]} : vector<1x16x14x128xf32> to vector<1x14x14x128xf32>
    %223 = vector.shape_cast %221 : vector<128xf32> to vector<1x1x1x128xf32>
    %224 = vector.broadcast %223 : vector<1x1x1x128xf32> to vector<1x14x14x128xf32>
    %225 = arith.mulf %222, %224 : vector<1x14x14x128xf32>
    %226 = arith.addf %219, %225 : vector<1x14x14x128xf32>
    %c0_139 = arith.constant 0 : index
    %c0_140 = arith.constant 0 : index
    %c1_141 = arith.constant 1 : index
    %c384_142 = arith.constant 384 : index
    %227 = vector.load %arg1[%c0_139, %c0_140, %c1_141, %c384_142] : memref<1x16x16x512xf32, #tpu.memory_space<vmem>>, vector<1x16x14x128xf32>
    %c0_143 = arith.constant 0 : index
    %c1_144 = arith.constant 1 : index
    %c384_145 = arith.constant 384 : index
    %228 = vector.load %arg2[%c0_143, %c1_144, %c384_145] : memref<3x3x512xf32, #tpu.memory_space<vmem>>, vector<1x1x128xf32>
    %229 = vector.shape_cast %228 : vector<1x1x128xf32> to vector<128xf32>
    %230 = vector.extract_strided_slice %227 {offsets = [0, 0, 0, 0], sizes = [1, 14, 14, 128], strides = [1, 1, 1, 1]} : vector<1x16x14x128xf32> to vector<1x14x14x128xf32>
    %231 = vector.shape_cast %229 : vector<128xf32> to vector<1x1x1x128xf32>
    %232 = vector.broadcast %231 : vector<1x1x1x128xf32> to vector<1x14x14x128xf32>
    %233 = arith.mulf %230, %232 : vector<1x14x14x128xf32>
    %234 = arith.addf %226, %233 : vector<1x14x14x128xf32>
    %c1_146 = arith.constant 1 : index
    %c1_147 = arith.constant 1 : index
    %c384_148 = arith.constant 384 : index
    %235 = vector.load %arg2[%c1_146, %c1_147, %c384_148] : memref<3x3x512xf32, #tpu.memory_space<vmem>>, vector<1x1x128xf32>
    %236 = vector.shape_cast %235 : vector<1x1x128xf32> to vector<128xf32>
    %237 = vector.extract_strided_slice %227 {offsets = [0, 1, 0, 0], sizes = [1, 14, 14, 128], strides = [1, 1, 1, 1]} : vector<1x16x14x128xf32> to vector<1x14x14x128xf32>
    %238 = vector.shape_cast %236 : vector<128xf32> to vector<1x1x1x128xf32>
    %239 = vector.broadcast %238 : vector<1x1x1x128xf32> to vector<1x14x14x128xf32>
    %240 = arith.mulf %237, %239 : vector<1x14x14x128xf32>
    %241 = arith.addf %234, %240 : vector<1x14x14x128xf32>
    %c2_149 = arith.constant 2 : index
    %c1_150 = arith.constant 1 : index
    %c384_151 = arith.constant 384 : index
    %242 = vector.load %arg2[%c2_149, %c1_150, %c384_151] : memref<3x3x512xf32, #tpu.memory_space<vmem>>, vector<1x1x128xf32>
    %243 = vector.shape_cast %242 : vector<1x1x128xf32> to vector<128xf32>
    %244 = vector.extract_strided_slice %227 {offsets = [0, 2, 0, 0], sizes = [1, 14, 14, 128], strides = [1, 1, 1, 1]} : vector<1x16x14x128xf32> to vector<1x14x14x128xf32>
    %245 = vector.shape_cast %243 : vector<128xf32> to vector<1x1x1x128xf32>
    %246 = vector.broadcast %245 : vector<1x1x1x128xf32> to vector<1x14x14x128xf32>
    %247 = arith.mulf %244, %246 : vector<1x14x14x128xf32>
    %248 = arith.addf %241, %247 : vector<1x14x14x128xf32>
    %c0_152 = arith.constant 0 : index
    %c0_153 = arith.constant 0 : index
    %c2_154 = arith.constant 2 : index
    %c384_155 = arith.constant 384 : index
    %249 = vector.load %arg1[%c0_152, %c0_153, %c2_154, %c384_155] : memref<1x16x16x512xf32, #tpu.memory_space<vmem>>, vector<1x16x14x128xf32>
    %c0_156 = arith.constant 0 : index
    %c2_157 = arith.constant 2 : index
    %c384_158 = arith.constant 384 : index
    %250 = vector.load %arg2[%c0_156, %c2_157, %c384_158] : memref<3x3x512xf32, #tpu.memory_space<vmem>>, vector<1x1x128xf32>
    %251 = vector.shape_cast %250 : vector<1x1x128xf32> to vector<128xf32>
    %252 = vector.extract_strided_slice %249 {offsets = [0, 0, 0, 0], sizes = [1, 14, 14, 128], strides = [1, 1, 1, 1]} : vector<1x16x14x128xf32> to vector<1x14x14x128xf32>
    %253 = vector.shape_cast %251 : vector<128xf32> to vector<1x1x1x128xf32>
    %254 = vector.broadcast %253 : vector<1x1x1x128xf32> to vector<1x14x14x128xf32>
    %255 = arith.mulf %252, %254 : vector<1x14x14x128xf32>
    %256 = arith.addf %248, %255 : vector<1x14x14x128xf32>
    %c1_159 = arith.constant 1 : index
    %c2_160 = arith.constant 2 : index
    %c384_161 = arith.constant 384 : index
    %257 = vector.load %arg2[%c1_159, %c2_160, %c384_161] : memref<3x3x512xf32, #tpu.memory_space<vmem>>, vector<1x1x128xf32>
    %258 = vector.shape_cast %257 : vector<1x1x128xf32> to vector<128xf32>
    %259 = vector.extract_strided_slice %249 {offsets = [0, 1, 0, 0], sizes = [1, 14, 14, 128], strides = [1, 1, 1, 1]} : vector<1x16x14x128xf32> to vector<1x14x14x128xf32>
    %260 = vector.shape_cast %258 : vector<128xf32> to vector<1x1x1x128xf32>
    %261 = vector.broadcast %260 : vector<1x1x1x128xf32> to vector<1x14x14x128xf32>
    %262 = arith.mulf %259, %261 : vector<1x14x14x128xf32>
    %263 = arith.addf %256, %262 : vector<1x14x14x128xf32>
    %c2_162 = arith.constant 2 : index
    %c2_163 = arith.constant 2 : index
    %c384_164 = arith.constant 384 : index
    %264 = vector.load %arg2[%c2_162, %c2_163, %c384_164] : memref<3x3x512xf32, #tpu.memory_space<vmem>>, vector<1x1x128xf32>
    %265 = vector.shape_cast %264 : vector<1x1x128xf32> to vector<128xf32>
    %266 = vector.extract_strided_slice %249 {offsets = [0, 2, 0, 0], sizes = [1, 14, 14, 128], strides = [1, 1, 1, 1]} : vector<1x16x14x128xf32> to vector<1x14x14x128xf32>
    %267 = vector.shape_cast %265 : vector<128xf32> to vector<1x1x1x128xf32>
    %268 = vector.broadcast %267 : vector<1x1x1x128xf32> to vector<1x14x14x128xf32>
    %269 = arith.mulf %266, %268 : vector<1x14x14x128xf32>
    %270 = arith.addf %263, %269 : vector<1x14x14x128xf32>
    %c0_165 = arith.constant 0 : index
    %c0_166 = arith.constant 0 : index
    %c0_167 = arith.constant 0 : index
    %c384_168 = arith.constant 384 : index
    %271 = vector.load %arg3[%c0_165, %c0_166, %c0_167, %c384_168] : memref<1x14x14x512xf32, #tpu.memory_space<vmem>>, vector<1x14x14x128xf32>
    tpu.vector_store %arg3[%c0_165, %c0_166, %c0_167, %c384_168], %270 {strides = array<i32>} : memref<1x14x14x512xf32, #tpu.memory_space<vmem>>, vector<1x14x14x128xf32>,
    return
  }
  func.func @transform_0(%arg0: i32) -> (i32, i32, i32, i32) {
    %c0_i32 = arith.constant 0 : i32
    %c0_i32_0 = arith.constant 0 : i32
    %c0_i32_1 = arith.constant 0 : i32
    %c0_i32_2 = arith.constant 0 : i32
    return %c0_i32, %c0_i32_0, %c0_i32_1, %arg0 : i32, i32, i32, i32
  }
  func.func @transform_1(%arg0: i32) -> (i32, i32, i32) {
    %c0_i32 = arith.constant 0 : i32
    %c0_i32_0 = arith.constant 0 : i32
    %c0_i32_1 = arith.constant 0 : i32
    return %c0_i32, %c0_i32_0, %arg0 : i32, i32, i32
  }
  func.func @transform_2(%arg0: i32) -> (i32, i32, i32, i32) {
    %c0_i32 = arith.constant 0 : i32
    %c0_i32_0 = arith.constant 0 : i32
    %c0_i32_1 = arith.constant 0 : i32
    %c0_i32_2 = arith.constant 0 : i32
    return %c0_i32, %c0_i32_0, %c0_i32_1, %arg0 : i32, i32, i32, i32
  }
}

</mosaic_0001>

<llo_original>
// kernel: depthwise_conv3x3.1
$region0: #{depthwise_conv3x3.1}
  #allocation0 [shape = 'u32[]', space=smem, size = 0x4, offset = 0x4, fixed_abs, tag = 'smem constant byte address 0x4 - core index']
  #allocation1 [shape = 'u32[144,128]{1,0:T(1,128)}', space=vmem, size = 0x12000, scoped, tag = 'internal scratch']
  %s0 = inlined_call_operand.vmem [shape: f32[1,16,16,1024], index: 0, kind: input, shape index: {}]
  %s1 = inlined_call_operand.vmem [shape: f32[3,3,1024], index: 1, kind: input, shape index: {}]
  %s2 = inlined_call_operand.vmem [shape: f32[1,14,14,1024], index: 2, kind: output, shape index: {}]
  %s3 = sld [smem:[#allocation0]]
  $region106: #{depthwise_conv3x3.1} parent=0
    _
  %s5 = ssub.s32 1, %s3
  %s6 = scalar_select 0, %s5, %s3
  $region1: #{depthwise_conv3x3.1} parent=0
    #allocation2 [shape = 'u8[1048576]{0}', space=vmem, size = 0x100000, scoped, tag = 'input window, operand 0']
    #allocation3 [shape = 'u8[49152]{0}', space=vmem, size = 0xc000, scoped, tag = 'input window, operand 1']
    #allocation4 [shape = 'u8[917504]{0}', space=vmem, size = 0xe0000, scoped, tag = 'output window, operand 0']
    loop: start=0, step=1, limit=4
    $region2: #{depthwise_conv3x3.1} parent=1 // loop_pre_header
      _
    $region3: #{depthwise_conv3x3.1} parent=1 // loop_header
      %s8 = sphi 0, %s12
      %p9 = scmp.ge.s32.totalorder %s8, 4
      %s18 = sphi 0, %s20
      %s21 = sphi 0, %s18
      %s22 = sphi 0, %s21
      %s38 = sphi 0, %s22
      %s44 = sphi 0, %s46
      %s47 = sphi 0, %s44
      %s48 = sphi 0, %s47
      %s64 = sphi 0, %s48
      %s70 = sphi 0, %s72
      %s73 = sphi 0, %s70
      %s74 = sphi 0, %s73
      %s90 = sphi 0, %s74
    $region4: #{depthwise_conv3x3.1} parent=1 // loop_header_branch
      %11 = sbr.rel (%p9) target = $region8
    $region5: #{depthwise_conv3x3.1} parent=1 // loop_body
      %s13 = ssub.s32 %s8, 1
      %s14 = ssub.s32 %s8, 2
      %s15 = sadd.s32 %s8, 1
      %s16 = ssub.s32 %s8, %s15
      %p17 = scmp.eq.s32.totalorder %s16, 0
      %s19 = sadd.s32 %s18, 1
      %s20 = scalar_select %p17, %s18, %s19
      %p23 = pneg %p17
      %p24 = scmp.eq.s32.totalorder %s8, 1
      %p25 = por %p23, %p24
      %p26 = scmp.ne.s32.totalorder %s18, %s21
      %p27 = scmp.eq.s32.totalorder %s8, 0
      %p28 = por %p26, %p27
      %p29 = scmp.ne.s32.totalorder %s18, %s21
      %p30 = scmp.eq.s32.totalorder %s13, 1
      %p31 = por %p29, %p30
      %p32 = scmp.ne.s32.totalorder %s21, %s22
      %p33 = scmp.eq.s32.totalorder %s13, 0
      %p34 = por %p32, %p33
      %p35 = scmp.ne.s32.totalorder %s21, %s22
      %p36 = scmp.eq.s32.totalorder %s14, 1
      %p37 = por %p35, %p36
      %p39 = scmp.ne.s32.totalorder %s22, %s38
      %p40 = scmp.eq.s32.totalorder %s14, 0
      %p41 = por %p39, %p40
      %s42 = ssub.s32 %s8, %s15
      %p43 = scmp.eq.s32.totalorder %s42, 0
      %s45 = sadd.s32 %s44, 1
      %s46 = scalar_select %p43, %s44, %s45
      %p49 = pneg %p43
      %p50 = scmp.eq.s32.totalorder %s8, 1
      %p51 = por %p49, %p50
      %p52 = scmp.ne.s32.totalorder %s44, %s47
      %p53 = scmp.eq.s32.totalorder %s8, 0
      %p54 = por %p52, %p53
      %p55 = scmp.ne.s32.totalorder %s44, %s47
      %p56 = scmp.eq.s32.totalorder %s13, 1
      %p57 = por %p55, %p56
      %p58 = scmp.ne.s32.totalorder %s47, %s48
      %p59 = scmp.eq.s32.totalorder %s13, 0
      %p60 = por %p58, %p59
      %p61 = scmp.ne.s32.totalorder %s47, %s48
      %p62 = scmp.eq.s32.totalorder %s14, 1
      %p63 = por %p61, %p62
      %p65 = scmp.ne.s32.totalorder %s48, %s64
      %p66 = scmp.eq.s32.totalorder %s14, 0
      %p67 = por %p65, %p66
      %s68 = ssub.s32 %s8, %s15
      %p69 = scmp.eq.s32.totalorder %s68, 0
      %s71 = sadd.s32 %s70, 1
      %s72 = scalar_select %p69, %s70, %s71
      %p75 = pneg %p69
      %p76 = scmp.eq.s32.totalorder %s8, 1
      %p77 = por %p75, %p76
      %p78 = scmp.ne.s32.totalorder %s70, %s73
      %p79 = scmp.eq.s32.totalorder %s8, 0
      %p80 = por %p78, %p79
      %p81 = scmp.ne.s32.totalorder %s70, %s73
      %p82 = scmp.eq.s32.totalorder %s13, 1
      %p83 = por %p81, %p82
      %p84 = scmp.ne.s32.totalorder %s73, %s74
      %p85 = scmp.eq.s32.totalorder %s13, 0
      %p86 = por %p84, %p85
      %p87 = scmp.ne.s32.totalorder %s73, %s74
      %p88 = scmp.eq.s32.totalorder %s14, 1
      %p89 = por %p87, %p88
      %p91 = scmp.ne.s32.totalorder %s74, %s90
      %p92 = scmp.eq.s32.totalorder %s14, 0
      %p93 = por %p91, %p92
      %p94 = scmp.le.s32.totalorder 1, %s8
      %p95 = scmp.lt.s32.totalorder %s8, 3
      %p96 = pnand %p94, %p95
      %p97 = pneg %p96
      // Predicated region
      $region9: #{depthwise_conv3x3.1} parent=5 // pred_check
        _
      $region10: #{depthwise_conv3x3.1} parent=5 // pred_check_branch
        %99 = sbr.rel (%p96) target = $region12
      $region11: #{depthwise_conv3x3.1} parent=5 // pred_region
        %s100 = ssub.s32 %s8, 1
      $region12: #{depthwise_conv3x3.1} parent=5 // pred_fallthru
        _
      %p101 = scmp.lt.s32.totalorder %s8, 2
      // Predicated region
      $region13: #{depthwise_conv3x3.1} parent=5 // pred_check
        %p102 = pneg %p101
      $region14: #{depthwise_conv3x3.1} parent=5 // pred_check_branch
        %104 = sbr.rel (%p102) target = $region16
      $region15: #{depthwise_conv3x3.1} parent=5 // pred_region
        // Predicated region
        $region17: #{depthwise_conv3x3.1} parent=15 // pred_check
          %p105 = pneg %p28
        $region18: #{depthwise_conv3x3.1} parent=15 // pred_check_branch
          %107 = sbr.rel (%p105) target = $region20
        $region19: #{depthwise_conv3x3.1} parent=15 // pred_region
          %s108 = sand.u32 %s18, 1
          %s109 = sand.u32 %s18, 1
          %s110 = smul.addr %s109, 1024
          %s111 = scalar_lea.vmem [#allocation2], %s110
          %s112 = smul.u32 4, %s8
          %s113 = smul.addr %s112, 8
          %s114 = scalar_lea.vmem %s0, %s113
          // Predicated region
          $region21: #{depthwise_conv3x3.1} parent=19 // pred_check
            _
          $region22: #{depthwise_conv3x3.1} parent=19 // pred_check_branch
            %116 = sbr.rel (0) target = $region24
          $region23: #{depthwise_conv3x3.1} parent=19 // pred_region
            // Predicated region
            $region25: #{depthwise_conv3x3.1} parent=23 // pred_check
              _
            $region26: #{depthwise_conv3x3.1} parent=23 // pred_check_branch
              %118 = sbr.rel (0) target = $region28
            $region27: #{depthwise_conv3x3.1} parent=23 // pred_region
              loop: start=0, step=1, limit=1
              $region29: #{depthwise_conv3x3.1} parent=27 // loop_pre_header
                _
              $region30: #{depthwise_conv3x3.1} parent=27 // loop_header
                %s120 = sphi 0, %s124
                %p121 = scmp.ge.s32.totalorder %s120, 1
                %s125 = sphi %s114, %s114
                %s126 = sphi %s111, %s111
              $region31: #{depthwise_conv3x3.1} parent=27 // loop_header_branch
                %123 = sbr.rel (%p121) target = $region35
              $region32: #{depthwise_conv3x3.1} parent=27 // loop_body
                %v127 = vld [vmem:[%s125] sm:$0xff]
                %128 = vst [vmem:[%s126] sm:$0xff] %v127
                %v129 = vld [vmem:[%s125 + $0x8] sm:$0xff]
                %130 = vst [vmem:[%s126 + $0x8] sm:$0xff] %v129
                %v131 = vld [vmem:[%s125 + $0x10] sm:$0xff]
                %132 = vst [vmem:[%s126 + $0x10] sm:$0xff] %v131
                %v133 = vld [vmem:[%s125 + $0x18] sm:$0xff]
                %134 = vst [vmem:[%s126 + $0x18] sm:$0xff] %v133
                %v135 = vld [vmem:[%s125 + $0x40] sm:$0xff]
                %136 = vst [vmem:[%s126 + $0x20] sm:$0xff] %v135
                %v137 = vld [vmem:[%s125 + $0x48] sm:$0xff]
                %138 = vst [vmem:[%s126 + $0x28] sm:$0xff] %v137
                %v139 = vld [vmem:[%s125 + $0x50] sm:$0xff]
                %140 = vst [vmem:[%s126 + $0x30] sm:$0xff] %v139
                %v141 = vld [vmem:[%s125 + $0x58] sm:$0xff]
                %142 = vst [vmem:[%s126 + $0x38] sm:$0xff] %v141
                %v143 = vld [vmem:[%s125 + $0x80] sm:$0xff]
                %144 = vst [vmem:[%s126 + $0x40] sm:$0xff] %v143
                %v145 = vld [vmem:[%s125 + $0x88] sm:$0xff]
                %146 = vst [vmem:[%s126 + $0x48] sm:$0xff] %v145
                %v147 = vld [vmem:[%s125 + $0x90] sm:$0xff]
                %148 = vst [vmem:[%s126 + $0x50] sm:$0xff] %v147
                %v149 = vld [vmem:[%s125 + $0x98] sm:$0xff]
                %150 = vst [vmem:[%s126 + $0x58] sm:$0xff] %v149
                %v151 = vld [vmem:[%s125 + $0xc0] sm:$0xff]
                %152 = vst [vmem:[%s126 + $0x60] sm:$0xff] %v151
                %v153 = vld [vmem:[%s125 + $0xc8] sm:$0xff]
                %154 = vst [vmem:[%s126 + $0x68] sm:$0xff] %v153
                %v155 = vld [vmem:[%s125 + $0xd0] sm:$0xff]
                %156 = vst [vmem:[%s126 + $0x70] sm:$0xff] %v155
                %v157 = vld [vmem:[%s125 + $0xd8] sm:$0xff]
                %158 = vst [vmem:[%s126 + $0x78] sm:$0xff] %v157
                %v159 = vld [vmem:[%s125 + $0x100] sm:$0xff]
                %160 = vst [vmem:[%s126 + $0x80] sm:$0xff] %v159
                %v161 = vld [vmem:[%s125 + $0x108] sm:$0xff]
                %162 = vst [vmem:[%s126 + $0x88] sm:$0xff] %v161
                %v163 = vld [vmem:[%s125 + $0x110] sm:$0xff]
                %164 = vst [vmem:[%s126 + $0x90] sm:$0xff] %v163
                %v165 = vld [vmem:[%s125 + $0x118] sm:$0xff]
                %166 = vst [vmem:[%s126 + $0x98] sm:$0xff] %v165
                %v167 = vld [vmem:[%s125 + $0x140] sm:$0xff]
                %168 = vst [vmem:[%s126 + $0xa0] sm:$0xff] %v167
                %v169 = vld [vmem:[%s125 + $0x148] sm:$0xff]
                %170 = vst [vmem:[%s126 + $0xa8] sm:$0xff] %v169
                %v171 = vld [vmem:[%s125 + $0x150] sm:$0xff]
                %172 = vst [vmem:[%s126 + $0xb0] sm:$0xff] %v171
                %v173 = vld [vmem:[%s125 + $0x158] sm:$0xff]
                %174 = vst [vmem:[%s126 + $0xb8] sm:$0xff] %v173
                %v175 = vld [vmem:[%s125 + $0x180] sm:$0xff]
                %176 = vst [vmem:[%s126 + $0xc0] sm:$0xff] %v175
                %v177 = vld [vmem:[%s125 + $0x188] sm:$0xff]
                %178 = vst [vmem:[%s126 + $0xc8] sm:$0xff] %v177
                %v179 = vld [vmem:[%s125 + $0x190] sm:$0xff]
                %180 = vst [vmem:[%s126 + $0xd0] sm:$0xff] %v179
                %v181 = vld [vmem:[%s125 + $0x198] sm:$0xff]
                %182 = vst [vmem:[%s126 + $0xd8] sm:$0xff] %v181
                %v183 = vld [vmem:[%s125 + $0x1c0] sm:$0xff]
                %184 = vst [vmem:[%s126 + $0xe0] sm:$0xff] %v183
                %v185 = vld [vmem:[%s125 + $0x1c8] sm:$0xff]
                %186 = vst [vmem:[%s126 + $0xe8] sm:$0xff] %v185
                %v187 = vld [vmem:[%s125 + $0x1d0] sm:$0xff]
                %188 = vst [vmem:[%s126 + $0xf0] sm:$0xff] %v187
                %v189 = vld [vmem:[%s125 + $0x1d8] sm:$0xff]
                %190 = vst [vmem:[%s126 + $0xf8] sm:$0xff] %v189
                %v191 = vld [vmem:[%s125 + $0x200] sm:$0xff]
                %192 = vst [vmem:[%s126 + $0x100] sm:$0xff] %v191
                %v193 = vld [vmem:[%s125 + $0x208] sm:$0xff]
                %194 = vst [vmem:[%s126 + $0x108] sm:$0xff] %v193
                %v195 = vld [vmem:[%s125 + $0x210] sm:$0xff]
                %196 = vst [vmem:[%s126 + $0x110] sm:$0xff] %v195
                %v197 = vld [vmem:[%s125 + $0x218] sm:$0xff]
                %198 = vst [vmem:[%s126 + $0x118] sm:$0xff] %v197
                %v199 = vld [vmem:[%s125 + $0x240] sm:$0xff]
                %200 = vst [vmem:[%s126 + $0x120] sm:$0xff] %v199
                %v201 = vld [vmem:[%s125 + $0x248] sm:$0xff]
                %202 = vst [vmem:[%s126 + $0x128] sm:$0xff] %v201
                %v203 = vld [vmem:[%s125 + $0x250] sm:$0xff]
                %204 = vst [vmem:[%s126 + $0x130] sm:$0xff] %v203
                %v205 = vld [vmem:[%s125 + $0x258] sm:$0xff]
                %206 = vst [vmem:[%s126 + $0x138] sm:$0xff] %v205
                %v207 = vld [vmem:[%s125 + $0x280] sm:$0xff]
                %208 = vst [vmem:[%s126 + $0x140] sm:$0xff] %v207
                %v209 = vld [vmem:[%s125 + $0x288] sm:$0xff]
                %210 = vst [vmem:[%s126 + $0x148] sm:$0xff] %v209
                %v211 = vld [vmem:[%s125 + $0x290] sm:$0xff]
                %212 = vst [vmem:[%s126 + $0x150] sm:$0xff] %v211
                %v213 = vld [vmem:[%s125 + $0x298] sm:$0xff]
                %214 = vst [vmem:[%s126 + $0x158] sm:$0xff] %v213
                %v215 = vld [vmem:[%s125 + $0x2c0] sm:$0xff]
                %216 = vst [vmem:[%s126 + $0x160] sm:$0xff] %v215
                %v217 = vld [vmem:[%s125 + $0x2c8] sm:$0xff]
                %218 = vst [vmem:[%s126 + $0x168] sm:$0xff] %v217
                %v219 = vld [vmem:[%s125 + $0x2d0] sm:$0xff]
                %220 = vst [vmem:[%s126 + $0x170] sm:$0xff] %v219
                %v221 = vld [vmem:[%s125 + $0x2d8] sm:$0xff]
                %222 = vst [vmem:[%s126 + $0x178] sm:$0xff] %v221
                %v223 = vld [vmem:[%s125 + $0x300] sm:$0xff]
                %224 = vst [vmem:[%s126 + $0x180] sm:$0xff] %v223
                %v225 = vld [vmem:[%s125 + $0x308] sm:$0xff]
                %226 = vst [vmem:[%s126 + $0x188] sm:$0xff] %v225
                %v227 = vld [vmem:[%s125 + $0x310] sm:$0xff]
                %228 = vst [vmem:[%s126 + $0x190] sm:$0xff] %v227
                %v229 = vld [vmem:[%s125 + $0x318] sm:$0xff]
                %230 = vst [vmem:[%s126 + $0x198] sm:$0xff] %v229
                %v231 = vld [vmem:[%s125 + $0x340] sm:$0xff]
                %232 = vst [vmem:[%s126 + $0x1a0] sm:$0xff] %v231
                %v233 = vld [vmem:[%s125 + $0x348] sm:$0xff]
                %234 = vst [vmem:[%s126 + $0x1a8] sm:$0xff] %v233
                %v235 = vld [vmem:[%s125 + $0x350] sm:$0xff]
                %236 = vst [vmem:[%s126 + $0x1b0] sm:$0xff] %v235
                %v237 = vld [vmem:[%s125 + $0x358] sm:$0xff]
                %238 = vst [vmem:[%s126 + $0x1b8] sm:$0xff] %v237
                %v239 = vld [vmem:[%s125 + $0x380] sm:$0xff]
                %240 = vst [vmem:[%s126 + $0x1c0] sm:$0xff] %v239
                %v241 = vld [vmem:[%s125 + $0x388] sm:$0xff]
                %242 = vst [vmem:[%s126 + $0x1c8] sm:$0xff] %v241
                %v243 = vld [vmem:[%s125 + $0x390] sm:$0xff]
                %244 = vst [vmem:[%s126 + $0x1d0] sm:$0xff] %v243
                %v245 = vld [vmem:[%s125 + $0x398] sm:$0xff]
                %246 = vst [vmem:[%s126 + $0x1d8] sm:$0xff] %v245
                %v247 = vld [vmem:[%s125 + $0x3c0] sm:$0xff]
                %248 = vst [vmem:[%s126 + $0x1e0] sm:$0xff] %v247
                %v249 = vld [vmem:[%s125 + $0x3c8] sm:$0xff]
                %250 = vst [vmem:[%s126 + $0x1e8] sm:$0xff] %v249
                %v251 = vld [vmem:[%s125 + $0x3d0] sm:$0xff]
                %252 = vst [vmem:[%s126 + $0x1f0] sm:$0xff] %v251
                %v253 = vld [vmem:[%s125 + $0x3d8] sm:$0xff]
                %254 = vst [vmem:[%s126 + $0x1f8] sm:$0xff] %v253
                %v255 = vld [vmem:[%s125 + $0x400] sm:$0xff]
                %256 = vst [vmem:[%s126 + $0x200] sm:$0xff] %v255
                %v257 = vld [vmem:[%s125 + $0x408] sm:$0xff]
                %258 = vst [vmem:[%s126 + $0x208] sm:$0xff] %v257
                %v259 = vld [vmem:[%s125 + $0x410] sm:$0xff]
                %260 = vst [vmem:[%s126 + $0x210] sm:$0xff] %v259
                %v261 = vld [vmem:[%s125 + $0x418] sm:$0xff]
                %262 = vst [vmem:[%s126 + $0x218] sm:$0xff] %v261
                %v263 = vld [vmem:[%s125 + $0x440] sm:$0xff]
                %264 = vst [vmem:[%s126 + $0x220] sm:$0xff] %v263
                %v265 = vld [vmem:[%s125 + $0x448] sm:$0xff]
                %266 = vst [vmem:[%s126 + $0x228] sm:$0xff] %v265
                %v267 = vld [vmem:[%s125 + $0x450] sm:$0xff]
                %268 = vst [vmem:[%s126 + $0x230] sm:$0xff] %v267
                %v269 = vld [vmem:[%s125 + $0x458] sm:$0xff]
                %270 = vst [vmem:[%s126 + $0x238] sm:$0xff] %v269
                %v271 = vld [vmem:[%s125 + $0x480] sm:$0xff]
                %272 = vst [vmem:[%s126 + $0x240] sm:$0xff] %v271
                %v273 = vld [vmem:[%s125 + $0x488] sm:$0xff]
                %274 = vst [vmem:[%s126 + $0x248] sm:$0xff] %v273
                %v275 = vld [vmem:[%s125 + $0x490] sm:$0xff]
                %276 = vst [vmem:[%s126 + $0x250] sm:$0xff] %v275
                %v277 = vld [vmem:[%s125 + $0x498] sm:$0xff]
                %278 = vst [vmem:[%s126 + $0x258] sm:$0xff] %v277
                %v279 = vld [vmem:[%s125 + $0x4c0] sm:$0xff]
                %280 = vst [vmem:[%s126 + $0x260] sm:$0xff] %v279
                %v281 = vld [vmem:[%s125 + $0x4c8] sm:$0xff]
                %282 = vst [vmem:[%s126 + $0x268] sm:$0xff] %v281
                %v283 = vld [vmem:[%s125 + $0x4d0] sm:$0xff]
                %284 = vst [vmem:[%s126 + $0x270] sm:$0xff] %v283
                %v285 = vld [vmem:[%s125 + $0x4d8] sm:$0xff]
                %286 = vst [vmem:[%s126 + $0x278] sm:$0xff] %v285
                %v287 = vld [vmem:[%s125 + $0x500] sm:$0xff]
                %288 = vst [vmem:[%s126 + $0x280] sm:$0xff] %v287
                %v289 = vld [vmem:[%s125 + $0x508] sm:$0xff]
                %290 = vst [vmem:[%s126 + $0x288] sm:$0xff] %v289
                %v291 = vld [vmem:[%s125 + $0x510] sm:$0xff]
                %292 = vst [vmem:[%s126 + $0x290] sm:$0xff] %v291
                %v293 = vld [vmem:[%s125 + $0x518] sm:$0xff]
                %294 = vst [vmem:[%s126 + $0x298] sm:$0xff] %v293
                %v295 = vld [vmem:[%s125 + $0x540] sm:$0xff]
                %296 = vst [vmem:[%s126 + $0x2a0] sm:$0xff] %v295
                %v297 = vld [vmem:[%s125 + $0x548] sm:$0xff]
                %298 = vst [vmem:[%s126 + $0x2a8] sm:$0xff] %v297
                %v299 = vld [vmem:[%s125 + $0x550] sm:$0xff]
                %300 = vst [vmem:[%s126 + $0x2b0] sm:$0xff] %v299
                %v301 = vld [vmem:[%s125 + $0x558] sm:$0xff]
                %302 = vst [vmem:[%s126 + $0x2b8] sm:$0xff] %v301
                %v303 = vld [vmem:[%s125 + $0x580] sm:$0xff]
                %304 = vst [vmem:[%s126 + $0x2c0] sm:$0xff] %v303
                %v305 = vld [vmem:[%s125 + $0x588] sm:$0xff]
                %306 = vst [vmem:[%s126 + $0x2c8] sm:$0xff] %v305
                %v307 = vld [vmem:[%s125 + $0x590] sm:$0xff]
                %308 = vst [vmem:[%s126 + $0x2d0] sm:$0xff] %v307
                %v309 = vld [vmem:[%s125 + $0x598] sm:$0xff]
                %310 = vst [vmem:[%s126 + $0x2d8] sm:$0xff] %v309
                %v311 = vld [vmem:[%s125 + $0x5c0] sm:$0xff]
                %312 = vst [vmem:[%s126 + $0x2e0] sm:$0xff] %v311
                %v313 = vld [vmem:[%s125 + $0x5c8] sm:$0xff]
                %314 = vst [vmem:[%s126 + $0x2e8] sm:$0xff] %v313
                %v315 = vld [vmem:[%s125 + $0x5d0] sm:$0xff]
                %316 = vst [vmem:[%s126 + $0x2f0] sm:$0xff] %v315
                %v317 = vld [vmem:[%s125 + $0x5d8] sm:$0xff]
                %318 = vst [vmem:[%s126 + $0x2f8] sm:$0xff] %v317
                %v319 = vld [vmem:[%s125 + $0x600] sm:$0xff]
                %320 = vst [vmem:[%s126 + $0x300] sm:$0xff] %v319
                %v321 = vld [vmem:[%s125 + $0x608] sm:$0xff]
                %322 = vst [vmem:[%s126 + $0x308] sm:$0xff] %v321
                %v323 = vld [vmem:[%s125 + $0x610] sm:$0xff]
                %324 = vst [vmem:[%s126 + $0x310] sm:$0xff] %v323
                %v325 = vld [vmem:[%s125 + $0x618] sm:$0xff]
                %326 = vst [vmem:[%s126 + $0x318] sm:$0xff] %v325
                %v327 = vld [vmem:[%s125 + $0x640] sm:$0xff]
                %328 = vst [vmem:[%s126 + $0x320] sm:$0xff] %v327
                %v329 = vld [vmem:[%s125 + $0x648] sm:$0xff]
                %330 = vst [vmem:[%s126 + $0x328] sm:$0xff] %v329
                %v331 = vld [vmem:[%s125 + $0x650] sm:$0xff]
                %332 = vst [vmem:[%s126 + $0x330] sm:$0xff] %v331
                %v333 = vld [vmem:[%s125 + $0x658] sm:$0xff]
                %334 = vst [vmem:[%s126 + $0x338] sm:$0xff] %v333
                %v335 = vld [vmem:[%s125 + $0x680] sm:$0xff]
                %336 = vst [vmem:[%s126 + $0x340] sm:$0xff] %v335
                %v337 = vld [vmem:[%s125 + $0x688] sm:$0xff]
                %338 = vst [vmem:[%s126 + $0x348] sm:$0xff] %v337
                %v339 = vld [vmem:[%s125 + $0x690] sm:$0xff]
                %340 = vst [vmem:[%s126 + $0x350] sm:$0xff] %v339
                %v341 = vld [vmem:[%s125 + $0x698] sm:$0xff]
                %342 = vst [vmem:[%s126 + $0x358] sm:$0xff] %v341
                %v343 = vld [vmem:[%s125 + $0x6c0] sm:$0xff]
                %344 = vst [vmem:[%s126 + $0x360] sm:$0xff] %v343
                %v345 = vld [vmem:[%s125 + $0x6c8] sm:$0xff]
                %346 = vst [vmem:[%s126 + $0x368] sm:$0xff] %v345
                %v347 = vld [vmem:[%s125 + $0x6d0] sm:$0xff]
                %348 = vst [vmem:[%s126 + $0x370] sm:$0xff] %v347
                %v349 = vld [vmem:[%s125 + $0x6d8] sm:$0xff]
                %350 = vst [vmem:[%s126 + $0x378] sm:$0xff] %v349
                %v351 = vld [vmem:[%s125 + $0x700] sm:$0xff]
                %352 = vst [vmem:[%s126 + $0x380] sm:$0xff] %v351
                %v353 = vld [vmem:[%s125 + $0x708] sm:$0xff]
                %354 = vst [vmem:[%s126 + $0x388] sm:$0xff] %v353
                %v355 = vld [vmem:[%s125 + $0x710] sm:$0xff]
                %356 = vst [vmem:[%s126 + $0x390] sm:$0xff] %v355
                %v357 = vld [vmem:[%s125 + $0x718] sm:$0xff]
                %358 = vst [vmem:[%s126 + $0x398] sm:$0xff] %v357
                %v359 = vld [vmem:[%s125 + $0x740] sm:$0xff]
                %360 = vst [vmem:[%s126 + $0x3a0] sm:$0xff] %v359
                %v361 = vld [vmem:[%s125 + $0x748] sm:$0xff]
                %362 = vst [vmem:[%s126 + $0x3a8] sm:$0xff] %v361
                %v363 = vld [vmem:[%s125 + $0x750] sm:$0xff]
                %364 = vst [vmem:[%s126 + $0x3b0] sm:$0xff] %v363
                %v365 = vld [vmem:[%s125 + $0x758] sm:$0xff]
                %366 = vst [vmem:[%s126 + $0x3b8] sm:$0xff] %v365
                %v367 = vld [vmem:[%s125 + $0x780] sm:$0xff]
                %368 = vst [vmem:[%s126 + $0x3c0] sm:$0xff] %v367
                %v369 = vld [vmem:[%s125 + $0x788] sm:$0xff]
                %370 = vst [vmem:[%s126 + $0x3c8] sm:$0xff] %v369
                %v371 = vld [vmem:[%s125 + $0x790] sm:$0xff]
                %372 = vst [vmem:[%s126 + $0x3d0] sm:$0xff] %v371
                %v373 = vld [vmem:[%s125 + $0x798] sm:$0xff]
                %374 = vst [vmem:[%s126 + $0x3d8] sm:$0xff] %v373
                %v375 = vld [vmem:[%s125 + $0x7c0] sm:$0xff]
                %376 = vst [vmem:[%s126 + $0x3e0] sm:$0xff] %v375
                %v377 = vld [vmem:[%s125 + $0x7c8] sm:$0xff]
                %378 = vst [vmem:[%s126 + $0x3e8] sm:$0xff] %v377
                %v379 = vld [vmem:[%s125 + $0x7d0] sm:$0xff]
                %380 = vst [vmem:[%s126 + $0x3f0] sm:$0xff] %v379
                %v381 = vld [vmem:[%s125 + $0x7d8] sm:$0xff]
                %382 = vst [vmem:[%s126 + $0x3f8] sm:$0xff] %v381
              $region33: #{depthwise_conv3x3.1} parent=27 // loop_footer
                %s124 = sadd.s32 1, %s120
              $region34: #{depthwise_conv3x3.1} parent=27 // loop_footer_branch
                %119 = sbr.rel target = $region30
              $region35: #{depthwise_conv3x3.1} parent=27 // loop_exit
                _
            $region28: #{depthwise_conv3x3.1} parent=23 // pred_fallthru
              _
            // Predicated region
            $region36: #{depthwise_conv3x3.1} parent=23 // pred_check
              _
            $region37: #{depthwise_conv3x3.1} parent=23 // pred_check_branch
              %384 = sbr.rel target = $region39
            $region38: #{depthwise_conv3x3.1} parent=23 // pred_region
              _
            $region39: #{depthwise_conv3x3.1} parent=23 // pred_fallthru
              _
          $region24: #{depthwise_conv3x3.1} parent=19 // pred_fallthru
            _
          %385 = vnop
        $region20: #{depthwise_conv3x3.1} parent=15 // pred_fallthru
          _
        // Predicated region
        $region40: #{depthwise_conv3x3.1} parent=15 // pred_check
          %p386 = pneg %p54
        $region41: #{depthwise_conv3x3.1} parent=15 // pred_check_branch
          %388 = sbr.rel (%p386) target = $region43
        $region42: #{depthwise_conv3x3.1} parent=15 // pred_region
          %s389 = sand.u32 %s44, 1
          %s390 = sand.u32 %s44, 1
          %s391 = smul.addr %s390, 48
          %s392 = scalar_lea.vmem [#allocation3], %s391
          %s393 = smul.u32 4, %s8
          %s394 = smul.addr %s393, 4
          %s395 = scalar_lea.vmem %s1, %s394
          // Predicated region
          $region44: #{depthwise_conv3x3.1} parent=42 // pred_check
            _
          $region45: #{depthwise_conv3x3.1} parent=42 // pred_check_branch
            %397 = sbr.rel (0) target = $region47
          $region46: #{depthwise_conv3x3.1} parent=42 // pred_region
            // Predicated region
            $region48: #{depthwise_conv3x3.1} parent=46 // pred_check
              _
            $region49: #{depthwise_conv3x3.1} parent=46 // pred_check_branch
              %399 = sbr.rel (0) target = $region51
            $region50: #{depthwise_conv3x3.1} parent=46 // pred_region
              loop: start=0, step=1, limit=1
              $region52: #{depthwise_conv3x3.1} parent=50 // loop_pre_header
                _
              $region53: #{depthwise_conv3x3.1} parent=50 // loop_header
                %s401 = sphi 0, %s405
                %p402 = scmp.ge.s32.totalorder %s401, 1
                %s406 = sphi %s395, %s395
                %s407 = sphi %s392, %s392
              $region54: #{depthwise_conv3x3.1} parent=50 // loop_header_branch
                %404 = sbr.rel (%p402) target = $region58
              $region55: #{depthwise_conv3x3.1} parent=50 // loop_body
                %v408 = vld [vmem:[%s406] sm:$0xff]
                %409 = vst [vmem:[%s407] sm:$0xff] %v408
                %v410 = vld [vmem:[%s406 + $0x8] sm:$0xff]
                %411 = vst [vmem:[%s407 + $0x8] sm:$0xff] %v410
                %v412 = vld [vmem:[%s406 + $0x20] sm:$0xff]
                %413 = vst [vmem:[%s407 + $0x10] sm:$0xff] %v412
                %v414 = vld [vmem:[%s406 + $0x28] sm:$0xff]
                %415 = vst [vmem:[%s407 + $0x18] sm:$0xff] %v414
                %v416 = vld [vmem:[%s406 + $0x40] sm:$0xff]
                %417 = vst [vmem:[%s407 + $0x20] sm:$0xff] %v416
                %v418 = vld [vmem:[%s406 + $0x48] sm:$0xff]
                %419 = vst [vmem:[%s407 + $0x28] sm:$0xff] %v418
              $region56: #{depthwise_conv3x3.1} parent=50 // loop_footer
                %s405 = sadd.s32 1, %s401
              $region57: #{depthwise_conv3x3.1} parent=50 // loop_footer_branch
                %400 = sbr.rel target = $region53
              $region58: #{depthwise_conv3x3.1} parent=50 // loop_exit
                _
            $region51: #{depthwise_conv3x3.1} parent=46 // pred_fallthru
              _
            // Predicated region
            $region59: #{depthwise_conv3x3.1} parent=46 // pred_check
              _
            $region60: #{depthwise_conv3x3.1} parent=46 // pred_check_branch
              %421 = sbr.rel target = $region62
            $region61: #{depthwise_conv3x3.1} parent=46 // pred_region
              _
            $region62: #{depthwise_conv3x3.1} parent=46 // pred_fallthru
              _
          $region47: #{depthwise_conv3x3.1} parent=42 // pred_fallthru
            _
          %422 = vnop
        $region43: #{depthwise_conv3x3.1} parent=15 // pred_fallthru
          _
      $region16: #{depthwise_conv3x3.1} parent=5 // pred_fallthru
        _
      %p423 = scmp.le.s32.totalorder 1, %s8
      %p424 = scmp.lt.s32.totalorder %s8, 3
      %p425 = pnand %p423, %p424
      %p426 = pneg %p425
      // Predicated region
      $region63: #{depthwise_conv3x3.1} parent=5 // pred_check
        _
      $region64: #{depthwise_conv3x3.1} parent=5 // pred_check_branch
        %428 = sbr.rel (%p425) target = $region66
      $region65: #{depthwise_conv3x3.1} parent=5 // pred_region
        %s429 = ssub.s32 %s8, 1
        %s430 = sand.u32 %s21, 1
        %s431 = sand.u32 %s21, 1
        %s432 = smul.addr %s431, 1024
        %s433 = scalar_lea.vmem [#allocation2], %s432
        // Predicated region
        $region67: #{depthwise_conv3x3.1} parent=65 // pred_check
          %p434 = pneg %p34
        $region68: #{depthwise_conv3x3.1} parent=65 // pred_check_branch
          %436 = sbr.rel (%p434) target = $region70
        $region69: #{depthwise_conv3x3.1} parent=65 // pred_region
          _
        $region70: #{depthwise_conv3x3.1} parent=65 // pred_fallthru
          _
        %s437 = sand.u32 %s47, 1
        %s438 = sand.u32 %s47, 1
        %s439 = smul.addr %s438, 48
        %s440 = scalar_lea.vmem [#allocation3], %s439
        // Predicated region
        $region71: #{depthwise_conv3x3.1} parent=65 // pred_check
          %p441 = pneg %p60
        $region72: #{depthwise_conv3x3.1} parent=65 // pred_check_branch
          %443 = sbr.rel (%p441) target = $region74
        $region73: #{depthwise_conv3x3.1} parent=65 // pred_region
          _
        $region74: #{depthwise_conv3x3.1} parent=65 // pred_fallthru
          _
        %s444 = sand.u32 %s21, 1
        %s445 = sand.u32 %s21, 1
        %s446 = smul.addr %s445, 1024
        %s447 = scalar_lea.vmem [#allocation2], %s446
        %p448 = pneg %p34
        %p449 = pneg %p31
        %s450 = sand.u32 %s47, 1
        %s451 = sand.u32 %s47, 1
        %s452 = smul.addr %s451, 48
        %s453 = scalar_lea.vmem [#allocation3], %s452
        %p454 = pneg %p60
        %p455 = pneg %p57
        %p456 = pneg %p86
        %p457 = pneg %p83
        %s458 = sand.u32 %s73, 1
        %s459 = sand.u32 %s73, 1
        %s460 = smul.addr %s459, 896
        %s461 = scalar_lea.vmem [#allocation4], %s460
        %s462 = smul.u32 4, %s13
        %s463 = smul.u32 4, %s13
        %s464 = smul.u32 4, %s13
        %v465 = vld [vmem:[%s433] sm:$0xff]
        %v466 = vld [vmem:[%s433 + $0x20] sm:$0x3f]
        %v467 = vld [vmem:[%s433 + $0x40] sm:$0xff]
        %v468 = vld [vmem:[%s433 + $0x60] sm:$0x3f]
        %v469 = vld [vmem:[%s433 + $0x80] sm:$0xff]
        %v470 = vld [vmem:[%s433 + $0xa0] sm:$0x3f]
        %v471 = vld [vmem:[%s433 + $0xc0] sm:$0xff]
        %v472 = vld [vmem:[%s433 + $0xe0] sm:$0x3f]
        %v473 = vld [vmem:[%s433 + $0x100] sm:$0xff]
        %v474 = vld [vmem:[%s433 + $0x120] sm:$0x3f]
        %v475 = vld [vmem:[%s433 + $0x140] sm:$0xff]
        %v476 = vld [vmem:[%s433 + $0x160] sm:$0x3f]
        %v477 = vld [vmem:[%s433 + $0x180] sm:$0xff]
        %v478 = vld [vmem:[%s433 + $0x1a0] sm:$0x3f]
        %v479 = vld [vmem:[%s433 + $0x1c0] sm:$0xff]
        %v480 = vld [vmem:[%s433 + $0x1e0] sm:$0x3f]
        %v481 = vld [vmem:[%s433 + $0x200] sm:$0xff]
        %v482 = vld [vmem:[%s433 + $0x220] sm:$0x3f]
        %v483 = vld [vmem:[%s433 + $0x240] sm:$0xff]
        %v484 = vld [vmem:[%s433 + $0x260] sm:$0x3f]
        %v485 = vld [vmem:[%s433 + $0x280] sm:$0xff]
        %v486 = vld [vmem:[%s433 + $0x2a0] sm:$0x3f]
        %v487 = vld [vmem:[%s433 + $0x2c0] sm:$0xff]
        %v488 = vld [vmem:[%s433 + $0x2e0] sm:$0x3f]
        %v489 = vld [vmem:[%s433 + $0x300] sm:$0xff]
        %v490 = vld [vmem:[%s433 + $0x320] sm:$0x3f]
        %v491 = vld [vmem:[%s433 + $0x340] sm:$0xff]
        %v492 = vld [vmem:[%s433 + $0x360] sm:$0x3f]
        %v493 = vld [vmem:[%s433 + $0x380] sm:$0xff]
        %v494 = vld [vmem:[%s433 + $0x3a0] sm:$0x3f]
        %v495 = vld [vmem:[%s433 + $0x3c0] sm:$0xff]
        %v496 = vld [vmem:[%s433 + $0x3e0] sm:$0x3f]
        %v497 = vld [vmem:[%s440] sm:$0x1]
        %v498 = vlaneseq
        %v499 = vshrl.u32 %v498, 7
        %v500 = vsub.s32 0, %v499
        %v501 = vrot.slane %v497, %v500
        %v502 = vmul.f32 %v465, %v501
        %v503 = vmul.f32 %v466, %v501
        %v504 = vmul.f32 %v467, %v501
        %v505 = vmul.f32 %v468, %v501
        %v506 = vmul.f32 %v469, %v501
        %v507 = vmul.f32 %v470, %v501
        %v508 = vmul.f32 %v471, %v501
        %v509 = vmul.f32 %v472, %v501
        %v510 = vmul.f32 %v473, %v501
        %v511 = vmul.f32 %v474, %v501
        %v512 = vmul.f32 %v475, %v501
        %v513 = vmul.f32 %v476, %v501
        %v514 = vmul.f32 %v477, %v501
        %v515 = vmul.f32 %v478, %v501
        %v516 = vmul.f32 %v479, %v501
        %v517 = vmul.f32 %v480, %v501
        %v518 = vmul.f32 %v481, %v501
        %v519 = vmul.f32 %v482, %v501
        %v520 = vmul.f32 %v483, %v501
        %v521 = vmul.f32 %v484, %v501
        %v522 = vmul.f32 %v485, %v501
        %v523 = vmul.f32 %v486, %v501
        %v524 = vmul.f32 %v487, %v501
        %v525 = vmul.f32 %v488, %v501
        %v526 = vmul.f32 %v489, %v501
        %v527 = vmul.f32 %v490, %v501
        %v528 = vmul.f32 %v491, %v501
        %v529 = vmul.f32 %v492, %v501
        %v530 = vadd.f32 %v502, 0.0
        %v531 = vadd.f32 %v503, 0.0
        %v532 = vadd.f32 %v504, 0.0
        %v533 = vadd.f32 %v505, 0.0
        %v534 = vadd.f32 %v506, 0.0
        %v535 = vadd.f32 %v507, 0.0
        %v536 = vadd.f32 %v508, 0.0
        %v537 = vadd.f32 %v509, 0.0
        %v538 = vadd.f32 %v510, 0.0
        %v539 = vadd.f32 %v511, 0.0
        %v540 = vadd.f32 %v512, 0.0
        %v541 = vadd.f32 %v513, 0.0
        %v542 = vadd.f32 %v514, 0.0
        %v543 = vadd.f32 %v515, 0.0
        %v544 = vadd.f32 %v516, 0.0
        %v545 = vadd.f32 %v517, 0.0
        %v546 = vadd.f32 %v518, 0.0
        %v547 = vadd.f32 %v519, 0.0
        %v548 = vadd.f32 %v520, 0.0
        %v549 = vadd.f32 %v521, 0.0
        %v550 = vadd.f32 %v522, 0.0
        %v551 = vadd.f32 %v523, 0.0
        %v552 = vadd.f32 %v524, 0.0
        %v553 = vadd.f32 %v525, 0.0
        %v554 = vadd.f32 %v526, 0.0
        %v555 = vadd.f32 %v527, 0.0
        %v556 = vadd.f32 %v528, 0.0
        %v557 = vadd.f32 %v529, 0.0
        %s558 = scalar_lea.vmem %s440, 16 [#allocation3]
        %v559 = vld [vmem:[%s558] sm:$0x1]
        %v560 = vlaneseq
        %v561 = vshrl.u32 %v560, 7
        %v562 = vsub.s32 0, %v561
        %v563 = vrot.slane %v559, %v562
        %v564 = vmul.f32 %v467, %v563
        %v565 = vmul.f32 %v468, %v563
        %v566 = vmul.f32 %v469, %v563
        %v567 = vmul.f32 %v470, %v563
        %v568 = vmul.f32 %v471, %v563
        %v569 = vmul.f32 %v472, %v563
        %v570 = vmul.f32 %v473, %v563
        %v571 = vmul.f32 %v474, %v563
        %v572 = vmul.f32 %v475, %v563
        %v573 = vmul.f32 %v476, %v563
        %v574 = vmul.f32 %v477, %v563
        %v575 = vmul.f32 %v478, %v563
        %v576 = vmul.f32 %v479, %v563
        %v577 = vmul.f32 %v480, %v563
        %v578 = vmul.f32 %v481, %v563
        %v579 = vmul.f32 %v482, %v563
        %v580 = vmul.f32 %v483, %v563
        %v581 = vmul.f32 %v484, %v563
        %v582 = vmul.f32 %v485, %v563
        %v583 = vmul.f32 %v486, %v563
        %v584 = vmul.f32 %v487, %v563
        %v585 = vmul.f32 %v488, %v563
        %v586 = vmul.f32 %v489, %v563
        %v587 = vmul.f32 %v490, %v563
        %v588 = vmul.f32 %v491, %v563
        %v589 = vmul.f32 %v492, %v563
        %v590 = vmul.f32 %v493, %v563
        %v591 = vmul.f32 %v494, %v563
        %v592 = vadd.f32 %v530, %v564
        %v593 = vadd.f32 %v531, %v565
        %v594 = vadd.f32 %v532, %v566
        %v595 = vadd.f32 %v533, %v567
        %v596 = vadd.f32 %v534, %v568
        %v597 = vadd.f32 %v535, %v569
        %v598 = vadd.f32 %v536, %v570
        %v599 = vadd.f32 %v537, %v571
        %v600 = vadd.f32 %v538, %v572
        %v601 = vadd.f32 %v539, %v573
        %v602 = vadd.f32 %v540, %v574
        %v603 = vadd.f32 %v541, %v575
        %v604 = vadd.f32 %v542, %v576
        %v605 = vadd.f32 %v543, %v577
        %v606 = vadd.f32 %v544, %v578
        %v607 = vadd.f32 %v545, %v579
        %v608 = vadd.f32 %v546, %v580
        %v609 = vadd.f32 %v547, %v581
        %v610 = vadd.f32 %v548, %v582
        %v611 = vadd.f32 %v549, %v583
        %v612 = vadd.f32 %v550, %v584
        %v613 = vadd.f32 %v551, %v585
        %v614 = vadd.f32 %v552, %v586
        %v615 = vadd.f32 %v553, %v587
        %v616 = vadd.f32 %v554, %v588
        %v617 = vadd.f32 %v555, %v589
        %v618 = vadd.f32 %v556, %v590
        %v619 = vadd.f32 %v557, %v591
        %s620 = scalar_lea.vmem %s440, 32 [#allocation3]
        %v621 = vld [vmem:[%s620] sm:$0x1]
        %v622 = vlaneseq
        %v623 = vshrl.u32 %v622, 7
        %v624 = vsub.s32 0, %v623
        %v625 = vrot.slane %v621, %v624
        %v626 = vmul.f32 %v469, %v625
        %v627 = vmul.f32 %v470, %v625
        %v628 = vmul.f32 %v471, %v625
        %v629 = vmul.f32 %v472, %v625
        %v630 = vmul.f32 %v473, %v625
        %v631 = vmul.f32 %v474, %v625
        %v632 = vmul.f32 %v475, %v625
        %v633 = vmul.f32 %v476, %v625
        %v634 = vmul.f32 %v477, %v625
        %v635 = vmul.f32 %v478, %v625
        %v636 = vmul.f32 %v479, %v625
        %v637 = vmul.f32 %v480, %v625
        %v638 = vmul.f32 %v481, %v625
        %v639 = vmul.f32 %v482, %v625
        %v640 = vmul.f32 %v483, %v625
        %v641 = vmul.f32 %v484, %v625
        %v642 = vmul.f32 %v485, %v625
        %v643 = vmul.f32 %v486, %v625
        %v644 = vmul.f32 %v487, %v625
        %v645 = vmul.f32 %v488, %v625
        %v646 = vmul.f32 %v489, %v625
        %v647 = vmul.f32 %v490, %v625
        %v648 = vmul.f32 %v491, %v625
        %v649 = vmul.f32 %v492, %v625
        %v650 = vmul.f32 %v493, %v625
        %v651 = vmul.f32 %v494, %v625
        %v652 = vmul.f32 %v495, %v625
        %v653 = vmul.f32 %v496, %v625
        %v654 = vadd.f32 %v592, %v626
        %v655 = vadd.f32 %v593, %v627
        %v656 = vadd.f32 %v594, %v628
        %v657 = vadd.f32 %v595, %v629
        %v658 = vadd.f32 %v596, %v630
        %v659 = vadd.f32 %v597, %v631
        %v660 = vadd.f32 %v598, %v632
        %v661 = vadd.f32 %v599, %v633
        %v662 = vadd.f32 %v600, %v634
        %v663 = vadd.f32 %v601, %v635
        %v664 = vadd.f32 %v602, %v636
        %v665 = vadd.f32 %v603, %v637
        %v666 = vadd.f32 %v604, %v638
        %v667 = vadd.f32 %v605, %v639
        %v668 = vadd.f32 %v606, %v640
        %v669 = vadd.f32 %v607, %v641
        %v670 = vadd.f32 %v608, %v642
        %v671 = vadd.f32 %v609, %v643
        %v672 = vadd.f32 %v610, %v644
        %v673 = vadd.f32 %v611, %v645
        %v674 = vadd.f32 %v612, %v646
        %v675 = vadd.f32 %v613, %v647
        %v676 = vadd.f32 %v614, %v648
        %v677 = vadd.f32 %v615, %v649
        %v678 = vadd.f32 %v616, %v650
        %v679 = vadd.f32 %v617, %v651
        %v680 = vadd.f32 %v618, %v652
        %v681 = vadd.f32 %v619, %v653
        %v682 = vld [vmem:[%s433] sm:$0xfe]
        %v683 = vld [vmem:[%s433 + $0x20] sm:$0x7f]
        %v684 = vld [vmem:[%s433 + $0x40] sm:$0xfe]
        %v685 = vld [vmem:[%s433 + $0x60] sm:$0x7f]
        %v686 = vld [vmem:[%s433 + $0x80] sm:$0xfe]
        %v687 = vld [vmem:[%s433 + $0xa0] sm:$0x7f]
        %v688 = vld [vmem:[%s433 + $0xc0] sm:$0xfe]
        %v689 = vld [vmem:[%s433 + $0xe0] sm:$0x7f]
        %v690 = vld [vmem:[%s433 + $0x100] sm:$0xfe]
        %v691 = vld [vmem:[%s433 + $0x120] sm:$0x7f]
        %v692 = vld [vmem:[%s433 + $0x140] sm:$0xfe]
        %v693 = vld [vmem:[%s433 + $0x160] sm:$0x7f]
        %v694 = vld [vmem:[%s433 + $0x180] sm:$0xfe]
        %v695 = vld [vmem:[%s433 + $0x1a0] sm:$0x7f]
        %v696 = vld [vmem:[%s433 + $0x1c0] sm:$0xfe]
        %v697 = vld [vmem:[%s433 + $0x1e0] sm:$0x7f]
        %v698 = vld [vmem:[%s433 + $0x200] sm:$0xfe]
        %v699 = vld [vmem:[%s433 + $0x220] sm:$0x7f]
        %v700 = vld [vmem:[%s433 + $0x240] sm:$0xfe]
        %v701 = vld [vmem:[%s433 + $0x260] sm:$0x7f]
        %v702 = vld [vmem:[%s433 + $0x280] sm:$0xfe]
        %v703 = vld [vmem:[%s433 + $0x2a0] sm:$0x7f]
        %v704 = vld [vmem:[%s433 + $0x2c0] sm:$0xfe]
        %v705 = vld [vmem:[%s433 + $0x2e0] sm:$0x7f]
        %v706 = vld [vmem:[%s433 + $0x300] sm:$0xfe]
        %v707 = vld [vmem:[%s433 + $0x320] sm:$0x7f]
        %v708 = vld [vmem:[%s433 + $0x340] sm:$0xfe]
        %v709 = vld [vmem:[%s433 + $0x360] sm:$0x7f]
        %v710 = vld [vmem:[%s433 + $0x380] sm:$0xfe]
        %v711 = vld [vmem:[%s433 + $0x3a0] sm:$0x7f]
        %v712 = vld [vmem:[%s433 + $0x3c0] sm:$0xfe]
        %v713 = vld [vmem:[%s433 + $0x3e0] sm:$0x7f]
        %v714 = vld [vmem:[%s440 + $0x1] sm:$0x1]
        %v715 = vlaneseq
        %v716 = vshrl.u32 %v715, 7
        %v717 = vsub.s32 0, %v716
        %v718 = vrot.slane %v714, %v717
        %v719 = vmul.f32 %v682, %v718
        %v720 = vmul.f32 %v683, %v718
        %v721 = vmul.f32 %v684, %v718
        %v722 = vmul.f32 %v685, %v718
        %v723 = vmul.f32 %v686, %v718
        %v724 = vmul.f32 %v687, %v718
        %v725 = vmul.f32 %v688, %v718
        %v726 = vmul.f32 %v689, %v718
        %v727 = vmul.f32 %v690, %v718
        %v728 = vmul.f32 %v691, %v718
        %v729 = vmul.f32 %v692, %v718
        %v730 = vmul.f32 %v693, %v718
        %v731 = vmul.f32 %v694, %v718
        %v732 = vmul.f32 %v695, %v718
        %v733 = vmul.f32 %v696, %v718
        %v734 = vmul.f32 %v697, %v718
        %v735 = vmul.f32 %v698, %v718
        %v736 = vmul.f32 %v699, %v718
        %v737 = vmul.f32 %v700, %v718
        %v738 = vmul.f32 %v701, %v718
        %v739 = vmul.f32 %v702, %v718
        %v740 = vmul.f32 %v703, %v718
        %v741 = vmul.f32 %v704, %v718
        %v742 = vmul.f32 %v705, %v718
        %v743 = vmul.f32 %v706, %v718
        %v744 = vmul.f32 %v707, %v718
        %v745 = vmul.f32 %v708, %v718
        %v746 = vmul.f32 %v709, %v718
        %vm775 = vcmask 1046528
        %v776 = vrot.slane %v719, 1
        %v777 = vrot.slane %v720, 1
        %v778 = vsel %vm775, %v776, %v777
        %v779 = vrot.slane %v721, 1
        %v780 = vrot.slane %v722, 1
        %v781 = vsel %vm775, %v779, %v780
        %v782 = vrot.slane %v723, 1
        %v783 = vrot.slane %v724, 1
        %v784 = vsel %vm775, %v782, %v783
        %v785 = vrot.slane %v725, 1
        %v786 = vrot.slane %v726, 1
        %v787 = vsel %vm775, %v785, %v786
        %v788 = vrot.slane %v727, 1
        %v789 = vrot.slane %v728, 1
        %v790 = vsel %vm775, %v788, %v789
        %v791 = vrot.slane %v729, 1
        %v792 = vrot.slane %v730, 1
        %v793 = vsel %vm775, %v791, %v792
        %v794 = vrot.slane %v731, 1
        %v795 = vrot.slane %v732, 1
        %v796 = vsel %vm775, %v794, %v795
        %v797 = vrot.slane %v733, 1
        %v798 = vrot.slane %v734, 1
        %v799 = vsel %vm775, %v797, %v798
        %v800 = vrot.slane %v735, 1
        %v801 = vrot.slane %v736, 1
        %v802 = vsel %vm775, %v800, %v801
        %v803 = vrot.slane %v737, 1
        %v804 = vrot.slane %v738, 1
        %v805 = vsel %vm775, %v803, %v804
        %v806 = vrot.slane %v739, 1
        %v807 = vrot.slane %v740, 1
        %v808 = vsel %vm775, %v806, %v807
        %v809 = vrot.slane %v741, 1
        %v810 = vrot.slane %v742, 1
        %v811 = vsel %vm775, %v809, %v810
        %v812 = vrot.slane %v743, 1
        %v813 = vrot.slane %v744, 1
        %v814 = vsel %vm775, %v812, %v813
        %v815 = vrot.slane %v745, 1
        %v816 = vrot.slane %v746, 1
        %v817 = vsel %vm775, %v815, %v816
        %v846 = vadd.f32 %v654, %v778
        %v847 = vadd.f32 %v655, %v777
        %v848 = vadd.f32 %v656, %v781
        %v849 = vadd.f32 %v657, %v780
        %v850 = vadd.f32 %v658, %v784
        %v851 = vadd.f32 %v659, %v783
        %v852 = vadd.f32 %v660, %v787
        %v853 = vadd.f32 %v661, %v786
        %v854 = vadd.f32 %v662, %v790
        %v855 = vadd.f32 %v663, %v789
        %v856 = vadd.f32 %v664, %v793
        %v857 = vadd.f32 %v665, %v792
        %v858 = vadd.f32 %v666, %v796
        %v859 = vadd.f32 %v667, %v795
        %v860 = vadd.f32 %v668, %v799
        %v861 = vadd.f32 %v669, %v798
        %v862 = vadd.f32 %v670, %v802
        %v863 = vadd.f32 %v671, %v801
        %v864 = vadd.f32 %v672, %v805
        %v865 = vadd.f32 %v673, %v804
        %v866 = vadd.f32 %v674, %v808
        %v867 = vadd.f32 %v675, %v807
        %v868 = vadd.f32 %v676, %v811
        %v869 = vadd.f32 %v677, %v810
        %v870 = vadd.f32 %v678, %v814
        %v871 = vadd.f32 %v679, %v813
        %v872 = vadd.f32 %v680, %v817
        %v873 = vadd.f32 %v681, %v816
        %v874 = vld [vmem:[%s558 + $0x1] sm:$0x1]
        %v875 = vlaneseq
        %v876 = vshrl.u32 %v875, 7
        %v877 = vsub.s32 0, %v876
        %v878 = vrot.slane %v874, %v877
        %v879 = vmul.f32 %v684, %v878
        %v880 = vmul.f32 %v685, %v878
        %v881 = vmul.f32 %v686, %v878
        %v882 = vmul.f32 %v687, %v878
        %v883 = vmul.f32 %v688, %v878
        %v884 = vmul.f32 %v689, %v878
        %v885 = vmul.f32 %v690, %v878
        %v886 = vmul.f32 %v691, %v878
        %v887 = vmul.f32 %v692, %v878
        %v888 = vmul.f32 %v693, %v878
        %v889 = vmul.f32 %v694, %v878
        %v890 = vmul.f32 %v695, %v878
        %v891 = vmul.f32 %v696, %v878
        %v892 = vmul.f32 %v697, %v878
        %v893 = vmul.f32 %v698, %v878
        %v894 = vmul.f32 %v699, %v878
        %v895 = vmul.f32 %v700, %v878
        %v896 = vmul.f32 %v701, %v878
        %v897 = vmul.f32 %v702, %v878
        %v898 = vmul.f32 %v703, %v878
        %v899 = vmul.f32 %v704, %v878
        %v900 = vmul.f32 %v705, %v878
        %v901 = vmul.f32 %v706, %v878
        %v902 = vmul.f32 %v707, %v878
        %v903 = vmul.f32 %v708, %v878
        %v904 = vmul.f32 %v709, %v878
        %v905 = vmul.f32 %v710, %v878
        %v906 = vmul.f32 %v711, %v878
        %v935 = vrot.slane %v879, 1
        %v936 = vrot.slane %v880, 1
        %v937 = vsel %vm775, %v935, %v936
        %v938 = vrot.slane %v881, 1
        %v939 = vrot.slane %v882, 1
        %v940 = vsel %vm775, %v938, %v939
        %v941 = vrot.slane %v883, 1
        %v942 = vrot.slane %v884, 1
        %v943 = vsel %vm775, %v941, %v942
        %v944 = vrot.slane %v885, 1
        %v945 = vrot.slane %v886, 1
        %v946 = vsel %vm775, %v944, %v945
        %v947 = vrot.slane %v887, 1
        %v948 = vrot.slane %v888, 1
        %v949 = vsel %vm775, %v947, %v948
        %v950 = vrot.slane %v889, 1
        %v951 = vrot.slane %v890, 1
        %v952 = vsel %vm775, %v950, %v951
        %v953 = vrot.slane %v891, 1
        %v954 = vrot.slane %v892, 1
        %v955 = vsel %vm775, %v953, %v954
        %v956 = vrot.slane %v893, 1
        %v957 = vrot.slane %v894, 1
        %v958 = vsel %vm775, %v956, %v957
        %v959 = vrot.slane %v895, 1
        %v960 = vrot.slane %v896, 1
        %v961 = vsel %vm775, %v959, %v960
        %v962 = vrot.slane %v897, 1
        %v963 = vrot.slane %v898, 1
        %v964 = vsel %vm775, %v962, %v963
        %v965 = vrot.slane %v899, 1
        %v966 = vrot.slane %v900, 1
        %v967 = vsel %vm775, %v965, %v966
        %v968 = vrot.slane %v901, 1
        %v969 = vrot.slane %v902, 1
        %v970 = vsel %vm775, %v968, %v969
        %v971 = vrot.slane %v903, 1
        %v972 = vrot.slane %v904, 1
        %v973 = vsel %vm775, %v971, %v972
        %v974 = vrot.slane %v905, 1
        %v975 = vrot.slane %v906, 1
        %v976 = vsel %vm775, %v974, %v975
        %v1005 = vadd.f32 %v846, %v937
        %v1006 = vadd.f32 %v847, %v936
        %v1007 = vadd.f32 %v848, %v940
        %v1008 = vadd.f32 %v849, %v939
        %v1009 = vadd.f32 %v850, %v943
        %v1010 = vadd.f32 %v851, %v942
        %v1011 = vadd.f32 %v852, %v946
        %v1012 = vadd.f32 %v853, %v945
        %v1013 = vadd.f32 %v854, %v949
        %v1014 = vadd.f32 %v855, %v948
        %v1015 = vadd.f32 %v856, %v952
        %v1016 = vadd.f32 %v857, %v951
        %v1017 = vadd.f32 %v858, %v955
        %v1018 = vadd.f32 %v859, %v954
        %v1019 = vadd.f32 %v860, %v958
        %v1020 = vadd.f32 %v861, %v957
        %v1021 = vadd.f32 %v862, %v961
        %v1022 = vadd.f32 %v863, %v960
        %v1023 = vadd.f32 %v864, %v964
        %v1024 = vadd.f32 %v865, %v963
        %v1025 = vadd.f32 %v866, %v967
        %v1026 = vadd.f32 %v867, %v966
        %v1027 = vadd.f32 %v868, %v970
        %v1028 = vadd.f32 %v869, %v969
        %v1029 = vadd.f32 %v870, %v973
        %v1030 = vadd.f32 %v871, %v972
        %v1031 = vadd.f32 %v872, %v976
        %v1032 = vadd.f32 %v873, %v975
        %v1033 = vld [vmem:[%s620 + $0x1] sm:$0x1]
        %v1034 = vlaneseq
        %v1035 = vshrl.u32 %v1034, 7
        %v1036 = vsub.s32 0, %v1035
        %v1037 = vrot.slane %v1033, %v1036
        %v1038 = vmul.f32 %v686, %v1037
        %v1039 = vmul.f32 %v687, %v1037
        %v1040 = vmul.f32 %v688, %v1037
        %v1041 = vmul.f32 %v689, %v1037
        %v1042 = vmul.f32 %v690, %v1037
        %v1043 = vmul.f32 %v691, %v1037
        %v1044 = vmul.f32 %v692, %v1037
        %v1045 = vmul.f32 %v693, %v1037
        %v1046 = vmul.f32 %v694, %v1037
        %v1047 = vmul.f32 %v695, %v1037
        %v1048 = vmul.f32 %v696, %v1037
        %v1049 = vmul.f32 %v697, %v1037
        %v1050 = vmul.f32 %v698, %v1037
        %v1051 = vmul.f32 %v699, %v1037
        %v1052 = vmul.f32 %v700, %v1037
        %v1053 = vmul.f32 %v701, %v1037
        %v1054 = vmul.f32 %v702, %v1037
        %v1055 = vmul.f32 %v703, %v1037
        %v1056 = vmul.f32 %v704, %v1037
        %v1057 = vmul.f32 %v705, %v1037
        %v1058 = vmul.f32 %v706, %v1037
        %v1059 = vmul.f32 %v707, %v1037
        %v1060 = vmul.f32 %v708, %v1037
        %v1061 = vmul.f32 %v709, %v1037
        %v1062 = vmul.f32 %v710, %v1037
        %v1063 = vmul.f32 %v711, %v1037
        %v1064 = vmul.f32 %v712, %v1037
        %v1065 = vmul.f32 %v713, %v1037
        %v1094 = vrot.slane %v1038, 1
        %v1095 = vrot.slane %v1039, 1
        %v1096 = vsel %vm775, %v1094, %v1095
        %v1097 = vrot.slane %v1040, 1
        %v1098 = vrot.slane %v1041, 1
        %v1099 = vsel %vm775, %v1097, %v1098
        %v1100 = vrot.slane %v1042, 1
        %v1101 = vrot.slane %v1043, 1
        %v1102 = vsel %vm775, %v1100, %v1101
        %v1103 = vrot.slane %v1044, 1
        %v1104 = vrot.slane %v1045, 1
        %v1105 = vsel %vm775, %v1103, %v1104
        %v1106 = vrot.slane %v1046, 1
        %v1107 = vrot.slane %v1047, 1
        %v1108 = vsel %vm775, %v1106, %v1107
        %v1109 = vrot.slane %v1048, 1
        %v1110 = vrot.slane %v1049, 1
        %v1111 = vsel %vm775, %v1109, %v1110
        %v1112 = vrot.slane %v1050, 1
        %v1113 = vrot.slane %v1051, 1
        %v1114 = vsel %vm775, %v1112, %v1113
        %v1115 = vrot.slane %v1052, 1
        %v1116 = vrot.slane %v1053, 1
        %v1117 = vsel %vm775, %v1115, %v1116
        %v1118 = vrot.slane %v1054, 1
        %v1119 = vrot.slane %v1055, 1
        %v1120 = vsel %vm775, %v1118, %v1119
        %v1121 = vrot.slane %v1056, 1
        %v1122 = vrot.slane %v1057, 1
        %v1123 = vsel %vm775, %v1121, %v1122
        %v1124 = vrot.slane %v1058, 1
        %v1125 = vrot.slane %v1059, 1
        %v1126 = vsel %vm775, %v1124, %v1125
        %v1127 = vrot.slane %v1060, 1
        %v1128 = vrot.slane %v1061, 1
        %v1129 = vsel %vm775, %v1127, %v1128
        %v1130 = vrot.slane %v1062, 1
        %v1131 = vrot.slane %v1063, 1
        %v1132 = vsel %vm775, %v1130, %v1131
        %v1133 = vrot.slane %v1064, 1
        %v1134 = vrot.slane %v1065, 1
        %v1135 = vsel %vm775, %v1133, %v1134
        %v1164 = vadd.f32 %v1005, %v1096
        %v1165 = vadd.f32 %v1006, %v1095
        %v1166 = vadd.f32 %v1007, %v1099
        %v1167 = vadd.f32 %v1008, %v1098
        %v1168 = vadd.f32 %v1009, %v1102
        %v1169 = vadd.f32 %v1010, %v1101
        %v1170 = vadd.f32 %v1011, %v1105
        %v1171 = vadd.f32 %v1012, %v1104
        %v1172 = vadd.f32 %v1013, %v1108
        %v1173 = vadd.f32 %v1014, %v1107
        %v1174 = vadd.f32 %v1015, %v1111
        %v1175 = vadd.f32 %v1016, %v1110
        %v1176 = vadd.f32 %v1017, %v1114
        %v1177 = vadd.f32 %v1018, %v1113
        %v1178 = vadd.f32 %v1019, %v1117
        %v1179 = vadd.f32 %v1020, %v1116
        %v1180 = vadd.f32 %v1021, %v1120
        %v1181 = vadd.f32 %v1022, %v1119
        %v1182 = vadd.f32 %v1023, %v1123
        %v1183 = vadd.f32 %v1024, %v1122
        %v1184 = vadd.f32 %v1025, %v1126
        %v1185 = vadd.f32 %v1026, %v1125
        %v1186 = vadd.f32 %v1027, %v1129
        %v1187 = vadd.f32 %v1028, %v1128
        %v1188 = vadd.f32 %v1029, %v1132
        %v1189 = vadd.f32 %v1030, %v1131
        %v1190 = vadd.f32 %v1031, %v1135
        %v1191 = vadd.f32 %v1032, %v1134
        %v1192 = vld [vmem:[%s433] sm:$0xfc]
        %v1193 = vld [vmem:[%s433 + $0x20] sm:$0xff]
        %v1194 = vld [vmem:[%s433 + $0x40] sm:$0xfc]
        %v1195 = vld [vmem:[%s433 + $0x60] sm:$0xff]
        %v1196 = vld [vmem:[%s433 + $0x80] sm:$0xfc]
        %v1197 = vld [vmem:[%s433 + $0xa0] sm:$0xff]
        %v1198 = vld [vmem:[%s433 + $0xc0] sm:$0xfc]
        %v1199 = vld [vmem:[%s433 + $0xe0] sm:$0xff]
        %v1200 = vld [vmem:[%s433 + $0x100] sm:$0xfc]
        %v1201 = vld [vmem:[%s433 + $0x120] sm:$0xff]
        %v1202 = vld [vmem:[%s433 + $0x140] sm:$0xfc]
        %v1203 = vld [vmem:[%s433 + $0x160] sm:$0xff]
        %v1204 = vld [vmem:[%s433 + $0x180] sm:$0xfc]
        %v1205 = vld [vmem:[%s433 + $0x1a0] sm:$0xff]
        %v1206 = vld [vmem:[%s433 + $0x1c0] sm:$0xfc]
        %v1207 = vld [vmem:[%s433 + $0x1e0] sm:$0xff]
        %v1208 = vld [vmem:[%s433 + $0x200] sm:$0xfc]
        %v1209 = vld [vmem:[%s433 + $0x220] sm:$0xff]
        %v1210 = vld [vmem:[%s433 + $0x240] sm:$0xfc]
        %v1211 = vld [vmem:[%s433 + $0x260] sm:$0xff]
        %v1212 = vld [vmem:[%s433 + $0x280] sm:$0xfc]
        %v1213 = vld [vmem:[%s433 + $0x2a0] sm:$0xff]
        %v1214 = vld [vmem:[%s433 + $0x2c0] sm:$0xfc]
        %v1215 = vld [vmem:[%s433 + $0x2e0] sm:$0xff]
        %v1216 = vld [vmem:[%s433 + $0x300] sm:$0xfc]
        %v1217 = vld [vmem:[%s433 + $0x320] sm:$0xff]
        %v1218 = vld [vmem:[%s433 + $0x340] sm:$0xfc]
        %v1219 = vld [vmem:[%s433 + $0x360] sm:$0xff]
        %v1220 = vld [vmem:[%s433 + $0x380] sm:$0xfc]
        %v1221 = vld [vmem:[%s433 + $0x3a0] sm:$0xff]
        %v1222 = vld [vmem:[%s433 + $0x3c0] sm:$0xfc]
        %v1223 = vld [vmem:[%s433 + $0x3e0] sm:$0xff]
        %v1224 = vld [vmem:[%s440 + $0x2] sm:$0x1]
        %v1225 = vlaneseq
        %v1226 = vshrl.u32 %v1225, 7
        %v1227 = vsub.s32 0, %v1226
        %v1228 = vrot.slane %v1224, %v1227
        %v1229 = vmul.f32 %v1192, %v1228
        %v1230 = vmul.f32 %v1193, %v1228
        %v1231 = vmul.f32 %v1194, %v1228
        %v1232 = vmul.f32 %v1195, %v1228
        %v1233 = vmul.f32 %v1196, %v1228
        %v1234 = vmul.f32 %v1197, %v1228
        %v1235 = vmul.f32 %v1198, %v1228
        %v1236 = vmul.f32 %v1199, %v1228
        %v1237 = vmul.f32 %v1200, %v1228
        %v1238 = vmul.f32 %v1201, %v1228
        %v1239 = vmul.f32 %v1202, %v1228
        %v1240 = vmul.f32 %v1203, %v1228
        %v1241 = vmul.f32 %v1204, %v1228
        %v1242 = vmul.f32 %v1205, %v1228
        %v1243 = vmul.f32 %v1206, %v1228
        %v1244 = vmul.f32 %v1207, %v1228
        %v1245 = vmul.f32 %v1208, %v1228
        %v1246 = vmul.f32 %v1209, %v1228
        %v1247 = vmul.f32 %v1210, %v1228
        %v1248 = vmul.f32 %v1211, %v1228
        %v1249 = vmul.f32 %v1212, %v1228
        %v1250 = vmul.f32 %v1213, %v1228
        %v1251 = vmul.f32 %v1214, %v1228
        %v1252 = vmul.f32 %v1215, %v1228
        %v1253 = vmul.f32 %v1216, %v1228
        %v1254 = vmul.f32 %v1217, %v1228
        %v1255 = vmul.f32 %v1218, %v1228
        %v1256 = vmul.f32 %v1219, %v1228
        %vm1285 = vcmask 1045504
        %v1286 = vrot.slane %v1229, 2
        %v1287 = vrot.slane %v1230, 2
        %v1288 = vsel %vm1285, %v1286, %v1287
        %v1289 = vrot.slane %v1231, 2
        %v1290 = vrot.slane %v1232, 2
        %v1291 = vsel %vm1285, %v1289, %v1290
        %v1292 = vrot.slane %v1233, 2
        %v1293 = vrot.slane %v1234, 2
        %v1294 = vsel %vm1285, %v1292, %v1293
        %v1295 = vrot.slane %v1235, 2
        %v1296 = vrot.slane %v1236, 2
        %v1297 = vsel %vm1285, %v1295, %v1296
        %v1298 = vrot.slane %v1237, 2
        %v1299 = vrot.slane %v1238, 2
        %v1300 = vsel %vm1285, %v1298, %v1299
        %v1301 = vrot.slane %v1239, 2
        %v1302 = vrot.slane %v1240, 2
        %v1303 = vsel %vm1285, %v1301, %v1302
        %v1304 = vrot.slane %v1241, 2
        %v1305 = vrot.slane %v1242, 2
        %v1306 = vsel %vm1285, %v1304, %v1305
        %v1307 = vrot.slane %v1243, 2
        %v1308 = vrot.slane %v1244, 2
        %v1309 = vsel %vm1285, %v1307, %v1308
        %v1310 = vrot.slane %v1245, 2
        %v1311 = vrot.slane %v1246, 2
        %v1312 = vsel %vm1285, %v1310, %v1311
        %v1313 = vrot.slane %v1247, 2
        %v1314 = vrot.slane %v1248, 2
        %v1315 = vsel %vm1285, %v1313, %v1314
        %v1316 = vrot.slane %v1249, 2
        %v1317 = vrot.slane %v1250, 2
        %v1318 = vsel %vm1285, %v1316, %v1317
        %v1319 = vrot.slane %v1251, 2
        %v1320 = vrot.slane %v1252, 2
        %v1321 = vsel %vm1285, %v1319, %v1320
        %v1322 = vrot.slane %v1253, 2
        %v1323 = vrot.slane %v1254, 2
        %v1324 = vsel %vm1285, %v1322, %v1323
        %v1325 = vrot.slane %v1255, 2
        %v1326 = vrot.slane %v1256, 2
        %v1327 = vsel %vm1285, %v1325, %v1326
        %v1356 = vadd.f32 %v1164, %v1288
        %v1357 = vadd.f32 %v1165, %v1287
        %v1358 = vadd.f32 %v1166, %v1291
        %v1359 = vadd.f32 %v1167, %v1290
        %v1360 = vadd.f32 %v1168, %v1294
        %v1361 = vadd.f32 %v1169, %v1293
        %v1362 = vadd.f32 %v1170, %v1297
        %v1363 = vadd.f32 %v1171, %v1296
        %v1364 = vadd.f32 %v1172, %v1300
        %v1365 = vadd.f32 %v1173, %v1299
        %v1366 = vadd.f32 %v1174, %v1303
        %v1367 = vadd.f32 %v1175, %v1302
        %v1368 = vadd.f32 %v1176, %v1306
        %v1369 = vadd.f32 %v1177, %v1305
        %v1370 = vadd.f32 %v1178, %v1309
        %v1371 = vadd.f32 %v1179, %v1308
        %v1372 = vadd.f32 %v1180, %v1312
        %v1373 = vadd.f32 %v1181, %v1311
        %v1374 = vadd.f32 %v1182, %v1315
        %v1375 = vadd.f32 %v1183, %v1314
        %v1376 = vadd.f32 %v1184, %v1318
        %v1377 = vadd.f32 %v1185, %v1317
        %v1378 = vadd.f32 %v1186, %v1321
        %v1379 = vadd.f32 %v1187, %v1320
        %v1380 = vadd.f32 %v1188, %v1324
        %v1381 = vadd.f32 %v1189, %v1323
        %v1382 = vadd.f32 %v1190, %v1327
        %v1383 = vadd.f32 %v1191, %v1326
        %v1384 = vld [vmem:[%s558 + $0x2] sm:$0x1]
        %v1385 = vlaneseq
        %v1386 = vshrl.u32 %v1385, 7
        %v1387 = vsub.s32 0, %v1386
        %v1388 = vrot.slane %v1384, %v1387
        %v1389 = vmul.f32 %v1194, %v1388
        %v1390 = vmul.f32 %v1195, %v1388
        %v1391 = vmul.f32 %v1196, %v1388
        %v1392 = vmul.f32 %v1197, %v1388
        %v1393 = vmul.f32 %v1198, %v1388
        %v1394 = vmul.f32 %v1199, %v1388
        %v1395 = vmul.f32 %v1200, %v1388
        %v1396 = vmul.f32 %v1201, %v1388
        %v1397 = vmul.f32 %v1202, %v1388
        %v1398 = vmul.f32 %v1203, %v1388
        %v1399 = vmul.f32 %v1204, %v1388
        %v1400 = vmul.f32 %v1205, %v1388
        %v1401 = vmul.f32 %v1206, %v1388
        %v1402 = vmul.f32 %v1207, %v1388
        %v1403 = vmul.f32 %v1208, %v1388
        %v1404 = vmul.f32 %v1209, %v1388
        %v1405 = vmul.f32 %v1210, %v1388
        %v1406 = vmul.f32 %v1211, %v1388
        %v1407 = vmul.f32 %v1212, %v1388
        %v1408 = vmul.f32 %v1213, %v1388
        %v1409 = vmul.f32 %v1214, %v1388
        %v1410 = vmul.f32 %v1215, %v1388
        %v1411 = vmul.f32 %v1216, %v1388
        %v1412 = vmul.f32 %v1217, %v1388
        %v1413 = vmul.f32 %v1218, %v1388
        %v1414 = vmul.f32 %v1219, %v1388
        %v1415 = vmul.f32 %v1220, %v1388
        %v1416 = vmul.f32 %v1221, %v1388
        %v1445 = vrot.slane %v1389, 2
        %v1446 = vrot.slane %v1390, 2
        %v1447 = vsel %vm1285, %v1445, %v1446
        %v1448 = vrot.slane %v1391, 2
        %v1449 = vrot.slane %v1392, 2
        %v1450 = vsel %vm1285, %v1448, %v1449
        %v1451 = vrot.slane %v1393, 2
        %v1452 = vrot.slane %v1394, 2
        %v1453 = vsel %vm1285, %v1451, %v1452
        %v1454 = vrot.slane %v1395, 2
        %v1455 = vrot.slane %v1396, 2
        %v1456 = vsel %vm1285, %v1454, %v1455
        %v1457 = vrot.slane %v1397, 2
        %v1458 = vrot.slane %v1398, 2
        %v1459 = vsel %vm1285, %v1457, %v1458
        %v1460 = vrot.slane %v1399, 2
        %v1461 = vrot.slane %v1400, 2
        %v1462 = vsel %vm1285, %v1460, %v1461
        %v1463 = vrot.slane %v1401, 2
        %v1464 = vrot.slane %v1402, 2
        %v1465 = vsel %vm1285, %v1463, %v1464
        %v1466 = vrot.slane %v1403, 2
        %v1467 = vrot.slane %v1404, 2
        %v1468 = vsel %vm1285, %v1466, %v1467
        %v1469 = vrot.slane %v1405, 2
        %v1470 = vrot.slane %v1406, 2
        %v1471 = vsel %vm1285, %v1469, %v1470
        %v1472 = vrot.slane %v1407, 2
        %v1473 = vrot.slane %v1408, 2
        %v1474 = vsel %vm1285, %v1472, %v1473
        %v1475 = vrot.slane %v1409, 2
        %v1476 = vrot.slane %v1410, 2
        %v1477 = vsel %vm1285, %v1475, %v1476
        %v1478 = vrot.slane %v1411, 2
        %v1479 = vrot.slane %v1412, 2
        %v1480 = vsel %vm1285, %v1478, %v1479
        %v1481 = vrot.slane %v1413, 2
        %v1482 = vrot.slane %v1414, 2
        %v1483 = vsel %vm1285, %v1481, %v1482
        %v1484 = vrot.slane %v1415, 2
        %v1485 = vrot.slane %v1416, 2
        %v1486 = vsel %vm1285, %v1484, %v1485
        %v1515 = vadd.f32 %v1356, %v1447
        %v1516 = vadd.f32 %v1357, %v1446
        %v1517 = vadd.f32 %v1358, %v1450
        %v1518 = vadd.f32 %v1359, %v1449
        %v1519 = vadd.f32 %v1360, %v1453
        %v1520 = vadd.f32 %v1361, %v1452
        %v1521 = vadd.f32 %v1362, %v1456
        %v1522 = vadd.f32 %v1363, %v1455
        %v1523 = vadd.f32 %v1364, %v1459
        %v1524 = vadd.f32 %v1365, %v1458
        %v1525 = vadd.f32 %v1366, %v1462
        %v1526 = vadd.f32 %v1367, %v1461
        %v1527 = vadd.f32 %v1368, %v1465
        %v1528 = vadd.f32 %v1369, %v1464
        %v1529 = vadd.f32 %v1370, %v1468
        %v1530 = vadd.f32 %v1371, %v1467
        %v1531 = vadd.f32 %v1372, %v1471
        %v1532 = vadd.f32 %v1373, %v1470
        %v1533 = vadd.f32 %v1374, %v1474
        %v1534 = vadd.f32 %v1375, %v1473
        %v1535 = vadd.f32 %v1376, %v1477
        %v1536 = vadd.f32 %v1377, %v1476
        %v1537 = vadd.f32 %v1378, %v1480
        %v1538 = vadd.f32 %v1379, %v1479
        %v1539 = vadd.f32 %v1380, %v1483
        %v1540 = vadd.f32 %v1381, %v1482
        %v1541 = vadd.f32 %v1382, %v1486
        %v1542 = vadd.f32 %v1383, %v1485
        %v1543 = vld [vmem:[%s620 + $0x2] sm:$0x1]
        %v1544 = vlaneseq
        %v1545 = vshrl.u32 %v1544, 7
        %v1546 = vsub.s32 0, %v1545
        %v1547 = vrot.slane %v1543, %v1546
        %v1548 = vmul.f32 %v1196, %v1547
        %v1549 = vmul.f32 %v1197, %v1547
        %v1550 = vmul.f32 %v1198, %v1547
        %v1551 = vmul.f32 %v1199, %v1547
        %v1552 = vmul.f32 %v1200, %v1547
        %v1553 = vmul.f32 %v1201, %v1547
        %v1554 = vmul.f32 %v1202, %v1547
        %v1555 = vmul.f32 %v1203, %v1547
        %v1556 = vmul.f32 %v1204, %v1547
        %v1557 = vmul.f32 %v1205, %v1547
        %v1558 = vmul.f32 %v1206, %v1547
        %v1559 = vmul.f32 %v1207, %v1547
        %v1560 = vmul.f32 %v1208, %v1547
        %v1561 = vmul.f32 %v1209, %v1547
        %v1562 = vmul.f32 %v1210, %v1547
        %v1563 = vmul.f32 %v1211, %v1547
        %v1564 = vmul.f32 %v1212, %v1547
        %v1565 = vmul.f32 %v1213, %v1547
        %v1566 = vmul.f32 %v1214, %v1547
        %v1567 = vmul.f32 %v1215, %v1547
        %v1568 = vmul.f32 %v1216, %v1547
        %v1569 = vmul.f32 %v1217, %v1547
        %v1570 = vmul.f32 %v1218, %v1547
        %v1571 = vmul.f32 %v1219, %v1547
        %v1572 = vmul.f32 %v1220, %v1547
        %v1573 = vmul.f32 %v1221, %v1547
        %v1574 = vmul.f32 %v1222, %v1547
        %v1575 = vmul.f32 %v1223, %v1547
        %v1604 = vrot.slane %v1548, 2
        %v1605 = vrot.slane %v1549, 2
        %v1606 = vsel %vm1285, %v1604, %v1605
        %v1607 = vrot.slane %v1550, 2
        %v1608 = vrot.slane %v1551, 2
        %v1609 = vsel %vm1285, %v1607, %v1608
        %v1610 = vrot.slane %v1552, 2
        %v1611 = vrot.slane %v1553, 2
        %v1612 = vsel %vm1285, %v1610, %v1611
        %v1613 = vrot.slane %v1554, 2
        %v1614 = vrot.slane %v1555, 2
        %v1615 = vsel %vm1285, %v1613, %v1614
        %v1616 = vrot.slane %v1556, 2
        %v1617 = vrot.slane %v1557, 2
        %v1618 = vsel %vm1285, %v1616, %v1617
        %v1619 = vrot.slane %v1558, 2
        %v1620 = vrot.slane %v1559, 2
        %v1621 = vsel %vm1285, %v1619, %v1620
        %v1622 = vrot.slane %v1560, 2
        %v1623 = vrot.slane %v1561, 2
        %v1624 = vsel %vm1285, %v1622, %v1623
        %v1625 = vrot.slane %v1562, 2
        %v1626 = vrot.slane %v1563, 2
        %v1627 = vsel %vm1285, %v1625, %v1626
        %v1628 = vrot.slane %v1564, 2
        %v1629 = vrot.slane %v1565, 2
        %v1630 = vsel %vm1285, %v1628, %v1629
        %v1631 = vrot.slane %v1566, 2
        %v1632 = vrot.slane %v1567, 2
        %v1633 = vsel %vm1285, %v1631, %v1632
        %v1634 = vrot.slane %v1568, 2
        %v1635 = vrot.slane %v1569, 2
        %v1636 = vsel %vm1285, %v1634, %v1635
        %v1637 = vrot.slane %v1570, 2
        %v1638 = vrot.slane %v1571, 2
        %v1639 = vsel %vm1285, %v1637, %v1638
        %v1640 = vrot.slane %v1572, 2
        %v1641 = vrot.slane %v1573, 2
        %v1642 = vsel %vm1285, %v1640, %v1641
        %v1643 = vrot.slane %v1574, 2
        %v1644 = vrot.slane %v1575, 2
        %v1645 = vsel %vm1285, %v1643, %v1644
        %v1674 = vadd.f32 %v1515, %v1606
        %v1675 = vadd.f32 %v1516, %v1605
        %v1676 = vadd.f32 %v1517, %v1609
        %v1677 = vadd.f32 %v1518, %v1608
        %v1678 = vadd.f32 %v1519, %v1612
        %v1679 = vadd.f32 %v1520, %v1611
        %v1680 = vadd.f32 %v1521, %v1615
        %v1681 = vadd.f32 %v1522, %v1614
        %v1682 = vadd.f32 %v1523, %v1618
        %v1683 = vadd.f32 %v1524, %v1617
        %v1684 = vadd.f32 %v1525, %v1621
        %v1685 = vadd.f32 %v1526, %v1620
        %v1686 = vadd.f32 %v1527, %v1624
        %v1687 = vadd.f32 %v1528, %v1623
        %v1688 = vadd.f32 %v1529, %v1627
        %v1689 = vadd.f32 %v1530, %v1626
        %v1690 = vadd.f32 %v1531, %v1630
        %v1691 = vadd.f32 %v1532, %v1629
        %v1692 = vadd.f32 %v1533, %v1633
        %v1693 = vadd.f32 %v1534, %v1632
        %v1694 = vadd.f32 %v1535, %v1636
        %v1695 = vadd.f32 %v1536, %v1635
        %v1696 = vadd.f32 %v1537, %v1639
        %v1697 = vadd.f32 %v1538, %v1638
        %v1698 = vadd.f32 %v1539, %v1642
        %v1699 = vadd.f32 %v1540, %v1641
        %v1700 = vadd.f32 %v1541, %v1645
        %v1701 = vadd.f32 %v1542, %v1644
        %1702 = vst [vmem:[%s461] sm:$0xff] %v1674
        %1703 = vst [vmem:[%s461 + $0x20] sm:$0x3f] %v1675
        %1704 = vst [vmem:[%s461 + $0x40] sm:$0xff] %v1676
        %1705 = vst [vmem:[%s461 + $0x60] sm:$0x3f] %v1677
        %1706 = vst [vmem:[%s461 + $0x80] sm:$0xff] %v1678
        %1707 = vst [vmem:[%s461 + $0xa0] sm:$0x3f] %v1679
        %1708 = vst [vmem:[%s461 + $0xc0] sm:$0xff] %v1680
        %1709 = vst [vmem:[%s461 + $0xe0] sm:$0x3f] %v1681
        %1710 = vst [vmem:[%s461 + $0x100] sm:$0xff] %v1682
        %1711 = vst [vmem:[%s461 + $0x120] sm:$0x3f] %v1683
        %1712 = vst [vmem:[%s461 + $0x140] sm:$0xff] %v1684
        %1713 = vst [vmem:[%s461 + $0x160] sm:$0x3f] %v1685
        %1714 = vst [vmem:[%s461 + $0x180] sm:$0xff] %v1686
        %1715 = vst [vmem:[%s461 + $0x1a0] sm:$0x3f] %v1687
        %1716 = vst [vmem:[%s461 + $0x1c0] sm:$0xff] %v1688
        %1717 = vst [vmem:[%s461 + $0x1e0] sm:$0x3f] %v1689
        %1718 = vst [vmem:[%s461 + $0x200] sm:$0xff] %v1690
        %1719 = vst [vmem:[%s461 + $0x220] sm:$0x3f] %v1691
        %1720 = vst [vmem:[%s461 + $0x240] sm:$0xff] %v1692
        %1721 = vst [vmem:[%s461 + $0x260] sm:$0x3f] %v1693
        %1722 = vst [vmem:[%s461 + $0x280] sm:$0xff] %v1694
        %1723 = vst [vmem:[%s461 + $0x2a0] sm:$0x3f] %v1695
        %1724 = vst [vmem:[%s461 + $0x2c0] sm:$0xff] %v1696
        %1725 = vst [vmem:[%s461 + $0x2e0] sm:$0x3f] %v1697
        %1726 = vst [vmem:[%s461 + $0x300] sm:$0xff] %v1698
        %1727 = vst [vmem:[%s461 + $0x320] sm:$0x3f] %v1699
        %1728 = vst [vmem:[%s461 + $0x340] sm:$0xff] %v1700
        %1729 = vst [vmem:[%s461 + $0x360] sm:$0x3f] %v1701
        %v1730 = vld [vmem:[%s433 + $0x8] sm:$0xff]
        %v1731 = vld [vmem:[%s433 + $0x28] sm:$0x3f]
        %v1732 = vld [vmem:[%s433 + $0x48] sm:$0xff]
        %v1733 = vld [vmem:[%s433 + $0x68] sm:$0x3f]
        %v1734 = vld [vmem:[%s433 + $0x88] sm:$0xff]
        %v1735 = vld [vmem:[%s433 + $0xa8] sm:$0x3f]
        %v1736 = vld [vmem:[%s433 + $0xc8] sm:$0xff]
        %v1737 = vld [vmem:[%s433 + $0xe8] sm:$0x3f]
        %v1738 = vld [vmem:[%s433 + $0x108] sm:$0xff]
        %v1739 = vld [vmem:[%s433 + $0x128] sm:$0x3f]
        %v1740 = vld [vmem:[%s433 + $0x148] sm:$0xff]
        %v1741 = vld [vmem:[%s433 + $0x168] sm:$0x3f]
        %v1742 = vld [vmem:[%s433 + $0x188] sm:$0xff]
        %v1743 = vld [vmem:[%s433 + $0x1a8] sm:$0x3f]
        %v1744 = vld [vmem:[%s433 + $0x1c8] sm:$0xff]
        %v1745 = vld [vmem:[%s433 + $0x1e8] sm:$0x3f]
        %v1746 = vld [vmem:[%s433 + $0x208] sm:$0xff]
        %v1747 = vld [vmem:[%s433 + $0x228] sm:$0x3f]
        %v1748 = vld [vmem:[%s433 + $0x248] sm:$0xff]
        %v1749 = vld [vmem:[%s433 + $0x268] sm:$0x3f]
        %v1750 = vld [vmem:[%s433 + $0x288] sm:$0xff]
        %v1751 = vld [vmem:[%s433 + $0x2a8] sm:$0x3f]
        %v1752 = vld [vmem:[%s433 + $0x2c8] sm:$0xff]
        %v1753 = vld [vmem:[%s433 + $0x2e8] sm:$0x3f]
        %v1754 = vld [vmem:[%s433 + $0x308] sm:$0xff]
        %v1755 = vld [vmem:[%s433 + $0x328] sm:$0x3f]
        %v1756 = vld [vmem:[%s433 + $0x348] sm:$0xff]
        %v1757 = vld [vmem:[%s433 + $0x368] sm:$0x3f]
        %v1758 = vld [vmem:[%s433 + $0x388] sm:$0xff]
        %v1759 = vld [vmem:[%s433 + $0x3a8] sm:$0x3f]
        %v1760 = vld [vmem:[%s433 + $0x3c8] sm:$0xff]
        %v1761 = vld [vmem:[%s433 + $0x3e8] sm:$0x3f]
        %v1762 = vld [vmem:[%s440 + $0x4] sm:$0x1]
        %v1763 = vlaneseq
        %v1764 = vshrl.u32 %v1763, 7
        %v1765 = vsub.s32 0, %v1764
        %v1766 = vrot.slane %v1762, %v1765
        %v1767 = vmul.f32 %v1730, %v1766
        %v1768 = vmul.f32 %v1731, %v1766
        %v1769 = vmul.f32 %v1732, %v1766
        %v1770 = vmul.f32 %v1733, %v1766
        %v1771 = vmul.f32 %v1734, %v1766
        %v1772 = vmul.f32 %v1735, %v1766
        %v1773 = vmul.f32 %v1736, %v1766
        %v1774 = vmul.f32 %v1737, %v1766
        %v1775 = vmul.f32 %v1738, %v1766
        %v1776 = vmul.f32 %v1739, %v1766
        %v1777 = vmul.f32 %v1740, %v1766
        %v1778 = vmul.f32 %v1741, %v1766
        %v1779 = vmul.f32 %v1742, %v1766
        %v1780 = vmul.f32 %v1743, %v1766
        %v1781 = vmul.f32 %v1744, %v1766
        %v1782 = vmul.f32 %v1745, %v1766
        %v1783 = vmul.f32 %v1746, %v1766
        %v1784 = vmul.f32 %v1747, %v1766
        %v1785 = vmul.f32 %v1748, %v1766
        %v1786 = vmul.f32 %v1749, %v1766
        %v1787 = vmul.f32 %v1750, %v1766
        %v1788 = vmul.f32 %v1751, %v1766
        %v1789 = vmul.f32 %v1752, %v1766
        %v1790 = vmul.f32 %v1753, %v1766
        %v1791 = vmul.f32 %v1754, %v1766
        %v1792 = vmul.f32 %v1755, %v1766
        %v1793 = vmul.f32 %v1756, %v1766
        %v1794 = vmul.f32 %v1757, %v1766
        %v1795 = vadd.f32 %v1767, 0.0
        %v1796 = vadd.f32 %v1768, 0.0
        %v1797 = vadd.f32 %v1769, 0.0
        %v1798 = vadd.f32 %v1770, 0.0
        %v1799 = vadd.f32 %v1771, 0.0
        %v1800 = vadd.f32 %v1772, 0.0
        %v1801 = vadd.f32 %v1773, 0.0
        %v1802 = vadd.f32 %v1774, 0.0
        %v1803 = vadd.f32 %v1775, 0.0
        %v1804 = vadd.f32 %v1776, 0.0
        %v1805 = vadd.f32 %v1777, 0.0
        %v1806 = vadd.f32 %v1778, 0.0
        %v1807 = vadd.f32 %v1779, 0.0
        %v1808 = vadd.f32 %v1780, 0.0
        %v1809 = vadd.f32 %v1781, 0.0
        %v1810 = vadd.f32 %v1782, 0.0
        %v1811 = vadd.f32 %v1783, 0.0
        %v1812 = vadd.f32 %v1784, 0.0
        %v1813 = vadd.f32 %v1785, 0.0
        %v1814 = vadd.f32 %v1786, 0.0
        %v1815 = vadd.f32 %v1787, 0.0
        %v1816 = vadd.f32 %v1788, 0.0
        %v1817 = vadd.f32 %v1789, 0.0
        %v1818 = vadd.f32 %v1790, 0.0
        %v1819 = vadd.f32 %v1791, 0.0
        %v1820 = vadd.f32 %v1792, 0.0
        %v1821 = vadd.f32 %v1793, 0.0
        %v1822 = vadd.f32 %v1794, 0.0
        %v1823 = vld [vmem:[%s558 + $0x4] sm:$0x1]
        %v1824 = vlaneseq
        %v1825 = vshrl.u32 %v1824, 7
        %v1826 = vsub.s32 0, %v1825
        %v1827 = vrot.slane %v1823, %v1826
        %v1828 = vmul.f32 %v1732, %v1827
        %v1829 = vmul.f32 %v1733, %v1827
        %v1830 = vmul.f32 %v1734, %v1827
        %v1831 = vmul.f32 %v1735, %v1827
        %v1832 = vmul.f32 %v1736, %v1827
        %v1833 = vmul.f32 %v1737, %v1827
        %v1834 = vmul.f32 %v1738, %v1827
        %v1835 = vmul.f32 %v1739, %v1827
        %v1836 = vmul.f32 %v1740, %v1827
        %v1837 = vmul.f32 %v1741, %v1827
        %v1838 = vmul.f32 %v1742, %v1827
        %v1839 = vmul.f32 %v1743, %v1827
        %v1840 = vmul.f32 %v1744, %v1827
        %v1841 = vmul.f32 %v1745, %v1827
        %v1842 = vmul.f32 %v1746, %v1827
        %v1843 = vmul.f32 %v1747, %v1827
        %v1844 = vmul.f32 %v1748, %v1827
        %v1845 = vmul.f32 %v1749, %v1827
        %v1846 = vmul.f32 %v1750, %v1827
        %v1847 = vmul.f32 %v1751, %v1827
        %v1848 = vmul.f32 %v1752, %v1827
        %v1849 = vmul.f32 %v1753, %v1827
        %v1850 = vmul.f32 %v1754, %v1827
        %v1851 = vmul.f32 %v1755, %v1827
        %v1852 = vmul.f32 %v1756, %v1827
        %v1853 = vmul.f32 %v1757, %v1827
        %v1854 = vmul.f32 %v1758, %v1827
        %v1855 = vmul.f32 %v1759, %v1827
        %v1856 = vadd.f32 %v1795, %v1828
        %v1857 = vadd.f32 %v1796, %v1829
        %v1858 = vadd.f32 %v1797, %v1830
        %v1859 = vadd.f32 %v1798, %v1831
        %v1860 = vadd.f32 %v1799, %v1832
        %v1861 = vadd.f32 %v1800, %v1833
        %v1862 = vadd.f32 %v1801, %v1834
        %v1863 = vadd.f32 %v1802, %v1835
        %v1864 = vadd.f32 %v1803, %v1836
        %v1865 = vadd.f32 %v1804, %v1837
        %v1866 = vadd.f32 %v1805, %v1838
        %v1867 = vadd.f32 %v1806, %v1839
        %v1868 = vadd.f32 %v1807, %v1840
        %v1869 = vadd.f32 %v1808, %v1841
        %v1870 = vadd.f32 %v1809, %v1842
        %v1871 = vadd.f32 %v1810, %v1843
        %v1872 = vadd.f32 %v1811, %v1844
        %v1873 = vadd.f32 %v1812, %v1845
        %v1874 = vadd.f32 %v1813, %v1846
        %v1875 = vadd.f32 %v1814, %v1847
        %v1876 = vadd.f32 %v1815, %v1848
        %v1877 = vadd.f32 %v1816, %v1849
        %v1878 = vadd.f32 %v1817, %v1850
        %v1879 = vadd.f32 %v1818, %v1851
        %v1880 = vadd.f32 %v1819, %v1852
        %v1881 = vadd.f32 %v1820, %v1853
        %v1882 = vadd.f32 %v1821, %v1854
        %v1883 = vadd.f32 %v1822, %v1855
        %v1884 = vld [vmem:[%s620 + $0x4] sm:$0x1]
        %v1885 = vlaneseq
        %v1886 = vshrl.u32 %v1885, 7
        %v1887 = vsub.s32 0, %v1886
        %v1888 = vrot.slane %v1884, %v1887
        %v1889 = vmul.f32 %v1734, %v1888
        %v1890 = vmul.f32 %v1735, %v1888
        %v1891 = vmul.f32 %v1736, %v1888
        %v1892 = vmul.f32 %v1737, %v1888
        %v1893 = vmul.f32 %v1738, %v1888
        %v1894 = vmul.f32 %v1739, %v1888
        %v1895 = vmul.f32 %v1740, %v1888
        %v1896 = vmul.f32 %v1741, %v1888
        %v1897 = vmul.f32 %v1742, %v1888
        %v1898 = vmul.f32 %v1743, %v1888
        %v1899 = vmul.f32 %v1744, %v1888
        %v1900 = vmul.f32 %v1745, %v1888
        %v1901 = vmul.f32 %v1746, %v1888
        %v1902 = vmul.f32 %v1747, %v1888
        %v1903 = vmul.f32 %v1748, %v1888
        %v1904 = vmul.f32 %v1749, %v1888
        %v1905 = vmul.f32 %v1750, %v1888
        %v1906 = vmul.f32 %v1751, %v1888
        %v1907 = vmul.f32 %v1752, %v1888
        %v1908 = vmul.f32 %v1753, %v1888
        %v1909 = vmul.f32 %v1754, %v1888
        %v1910 = vmul.f32 %v1755, %v1888
        %v1911 = vmul.f32 %v1756, %v1888
        %v1912 = vmul.f32 %v1757, %v1888
        %v1913 = vmul.f32 %v1758, %v1888
        %v1914 = vmul.f32 %v1759, %v1888
        %v1915 = vmul.f32 %v1760, %v1888
        %v1916 = vmul.f32 %v1761, %v1888
        %v1917 = vadd.f32 %v1856, %v1889
        %v1918 = vadd.f32 %v1857, %v1890
        %v1919 = vadd.f32 %v1858, %v1891
        %v1920 = vadd.f32 %v1859, %v1892
        %v1921 = vadd.f32 %v1860, %v1893
        %v1922 = vadd.f32 %v1861, %v1894
        %v1923 = vadd.f32 %v1862, %v1895
        %v1924 = vadd.f32 %v1863, %v1896
        %v1925 = vadd.f32 %v1864, %v1897
        %v1926 = vadd.f32 %v1865, %v1898
        %v1927 = vadd.f32 %v1866, %v1899
        %v1928 = vadd.f32 %v1867, %v1900
        %v1929 = vadd.f32 %v1868, %v1901
        %v1930 = vadd.f32 %v1869, %v1902
        %v1931 = vadd.f32 %v1870, %v1903
        %v1932 = vadd.f32 %v1871, %v1904
        %v1933 = vadd.f32 %v1872, %v1905
        %v1934 = vadd.f32 %v1873, %v1906
        %v1935 = vadd.f32 %v1874, %v1907
        %v1936 = vadd.f32 %v1875, %v1908
        %v1937 = vadd.f32 %v1876, %v1909
        %v1938 = vadd.f32 %v1877, %v1910
        %v1939 = vadd.f32 %v1878, %v1911
        %v1940 = vadd.f32 %v1879, %v1912
        %v1941 = vadd.f32 %v1880, %v1913
        %v1942 = vadd.f32 %v1881, %v1914
        %v1943 = vadd.f32 %v1882, %v1915
        %v1944 = vadd.f32 %v1883, %v1916
        %v1945 = vld [vmem:[%s433 + $0x8] sm:$0xfe]
        %v1946 = vld [vmem:[%s433 + $0x28] sm:$0x7f]
        %v1947 = vld [vmem:[%s433 + $0x48] sm:$0xfe]
        %v1948 = vld [vmem:[%s433 + $0x68] sm:$0x7f]
        %v1949 = vld [vmem:[%s433 + $0x88] sm:$0xfe]
        %v1950 = vld [vmem:[%s433 + $0xa8] sm:$0x7f]
        %v1951 = vld [vmem:[%s433 + $0xc8] sm:$0xfe]
        %v1952 = vld [vmem:[%s433 + $0xe8] sm:$0x7f]
        %v1953 = vld [vmem:[%s433 + $0x108] sm:$0xfe]
        %v1954 = vld [vmem:[%s433 + $0x128] sm:$0x7f]
        %v1955 = vld [vmem:[%s433 + $0x148] sm:$0xfe]
        %v1956 = vld [vmem:[%s433 + $0x168] sm:$0x7f]
        %v1957 = vld [vmem:[%s433 + $0x188] sm:$0xfe]
        %v1958 = vld [vmem:[%s433 + $0x1a8] sm:$0x7f]
        %v1959 = vld [vmem:[%s433 + $0x1c8] sm:$0xfe]
        %v1960 = vld [vmem:[%s433 + $0x1e8] sm:$0x7f]
        %v1961 = vld [vmem:[%s433 + $0x208] sm:$0xfe]
        %v1962 = vld [vmem:[%s433 + $0x228] sm:$0x7f]
        %v1963 = vld [vmem:[%s433 + $0x248] sm:$0xfe]
        %v1964 = vld [vmem:[%s433 + $0x268] sm:$0x7f]
        %v1965 = vld [vmem:[%s433 + $0x288] sm:$0xfe]
        %v1966 = vld [vmem:[%s433 + $0x2a8] sm:$0x7f]
        %v1967 = vld [vmem:[%s433 + $0x2c8] sm:$0xfe]
        %v1968 = vld [vmem:[%s433 + $0x2e8] sm:$0x7f]
        %v1969 = vld [vmem:[%s433 + $0x308] sm:$0xfe]
        %v1970 = vld [vmem:[%s433 + $0x328] sm:$0x7f]
        %v1971 = vld [vmem:[%s433 + $0x348] sm:$0xfe]
        %v1972 = vld [vmem:[%s433 + $0x368] sm:$0x7f]
        %v1973 = vld [vmem:[%s433 + $0x388] sm:$0xfe]
        %v1974 = vld [vmem:[%s433 + $0x3a8] sm:$0x7f]
        %v1975 = vld [vmem:[%s433 + $0x3c8] sm:$0xfe]
        %v1976 = vld [vmem:[%s433 + $0x3e8] sm:$0x7f]
        %v1977 = vld [vmem:[%s440 + $0x5] sm:$0x1]
        %v1978 = vlaneseq
        %v1979 = vshrl.u32 %v1978, 7
        %v1980 = vsub.s32 0, %v1979
        %v1981 = vrot.slane %v1977, %v1980
        %v1982 = vmul.f32 %v1945, %v1981
        %v1983 = vmul.f32 %v1946, %v1981
        %v1984 = vmul.f32 %v1947, %v1981
        %v1985 = vmul.f32 %v1948, %v1981
        %v1986 = vmul.f32 %v1949, %v1981
        %v1987 = vmul.f32 %v1950, %v1981
        %v1988 = vmul.f32 %v1951, %v1981
        %v1989 = vmul.f32 %v1952, %v1981
        %v1990 = vmul.f32 %v1953, %v1981
        %v1991 = vmul.f32 %v1954, %v1981
        %v1992 = vmul.f32 %v1955, %v1981
        %v1993 = vmul.f32 %v1956, %v1981
        %v1994 = vmul.f32 %v1957, %v1981
        %v1995 = vmul.f32 %v1958, %v1981
        %v1996 = vmul.f32 %v1959, %v1981
        %v1997 = vmul.f32 %v1960, %v1981
        %v1998 = vmul.f32 %v1961, %v1981
        %v1999 = vmul.f32 %v1962, %v1981
        %v2000 = vmul.f32 %v1963, %v1981
        %v2001 = vmul.f32 %v1964, %v1981
        %v2002 = vmul.f32 %v1965, %v1981
        %v2003 = vmul.f32 %v1966, %v1981
        %v2004 = vmul.f32 %v1967, %v1981
        %v2005 = vmul.f32 %v1968, %v1981
        %v2006 = vmul.f32 %v1969, %v1981
        %v2007 = vmul.f32 %v1970, %v1981
        %v2008 = vmul.f32 %v1971, %v1981
        %v2009 = vmul.f32 %v1972, %v1981
        %v2038 = vrot.slane %v1982, 1
        %v2039 = vrot.slane %v1983, 1
        %v2040 = vsel %vm775, %v2038, %v2039
        %v2041 = vrot.slane %v1984, 1
        %v2042 = vrot.slane %v1985, 1
        %v2043 = vsel %vm775, %v2041, %v2042
        %v2044 = vrot.slane %v1986, 1
        %v2045 = vrot.slane %v1987, 1
        %v2046 = vsel %vm775, %v2044, %v2045
        %v2047 = vrot.slane %v1988, 1
        %v2048 = vrot.slane %v1989, 1
        %v2049 = vsel %vm775, %v2047, %v2048
        %v2050 = vrot.slane %v1990, 1
        %v2051 = vrot.slane %v1991, 1
        %v2052 = vsel %vm775, %v2050, %v2051
        %v2053 = vrot.slane %v1992, 1
        %v2054 = vrot.slane %v1993, 1
        %v2055 = vsel %vm775, %v2053, %v2054
        %v2056 = vrot.slane %v1994, 1
        %v2057 = vrot.slane %v1995, 1
        %v2058 = vsel %vm775, %v2056, %v2057
        %v2059 = vrot.slane %v1996, 1
        %v2060 = vrot.slane %v1997, 1
        %v2061 = vsel %vm775, %v2059, %v2060
        %v2062 = vrot.slane %v1998, 1
        %v2063 = vrot.slane %v1999, 1
        %v2064 = vsel %vm775, %v2062, %v2063
        %v2065 = vrot.slane %v2000, 1
        %v2066 = vrot.slane %v2001, 1
        %v2067 = vsel %vm775, %v2065, %v2066
        %v2068 = vrot.slane %v2002, 1
        %v2069 = vrot.slane %v2003, 1
        %v2070 = vsel %vm775, %v2068, %v2069
        %v2071 = vrot.slane %v2004, 1
        %v2072 = vrot.slane %v2005, 1
        %v2073 = vsel %vm775, %v2071, %v2072
        %v2074 = vrot.slane %v2006, 1
        %v2075 = vrot.slane %v2007, 1
        %v2076 = vsel %vm775, %v2074, %v2075
        %v2077 = vrot.slane %v2008, 1
        %v2078 = vrot.slane %v2009, 1
        %v2079 = vsel %vm775, %v2077, %v2078
        %v2108 = vadd.f32 %v1917, %v2040
        %v2109 = vadd.f32 %v1918, %v2039
        %v2110 = vadd.f32 %v1919, %v2043
        %v2111 = vadd.f32 %v1920, %v2042
        %v2112 = vadd.f32 %v1921, %v2046
        %v2113 = vadd.f32 %v1922, %v2045
        %v2114 = vadd.f32 %v1923, %v2049
        %v2115 = vadd.f32 %v1924, %v2048
        %v2116 = vadd.f32 %v1925, %v2052
        %v2117 = vadd.f32 %v1926, %v2051
        %v2118 = vadd.f32 %v1927, %v2055
        %v2119 = vadd.f32 %v1928, %v2054
        %v2120 = vadd.f32 %v1929, %v2058
        %v2121 = vadd.f32 %v1930, %v2057
        %v2122 = vadd.f32 %v1931, %v2061
        %v2123 = vadd.f32 %v1932, %v2060
        %v2124 = vadd.f32 %v1933, %v2064
        %v2125 = vadd.f32 %v1934, %v2063
        %v2126 = vadd.f32 %v1935, %v2067
        %v2127 = vadd.f32 %v1936, %v2066
        %v2128 = vadd.f32 %v1937, %v2070
        %v2129 = vadd.f32 %v1938, %v2069
        %v2130 = vadd.f32 %v1939, %v2073
        %v2131 = vadd.f32 %v1940, %v2072
        %v2132 = vadd.f32 %v1941, %v2076
        %v2133 = vadd.f32 %v1942, %v2075
        %v2134 = vadd.f32 %v1943, %v2079
        %v2135 = vadd.f32 %v1944, %v2078
        %v2136 = vld [vmem:[%s558 + $0x5] sm:$0x1]
        %v2137 = vlaneseq
        %v2138 = vshrl.u32 %v2137, 7
        %v2139 = vsub.s32 0, %v2138
        %v2140 = vrot.slane %v2136, %v2139
        %v2141 = vmul.f32 %v1947, %v2140
        %v2142 = vmul.f32 %v1948, %v2140
        %v2143 = vmul.f32 %v1949, %v2140
        %v2144 = vmul.f32 %v1950, %v2140
        %v2145 = vmul.f32 %v1951, %v2140
        %v2146 = vmul.f32 %v1952, %v2140
        %v2147 = vmul.f32 %v1953, %v2140
        %v2148 = vmul.f32 %v1954, %v2140
        %v2149 = vmul.f32 %v1955, %v2140
        %v2150 = vmul.f32 %v1956, %v2140
        %v2151 = vmul.f32 %v1957, %v2140
        %v2152 = vmul.f32 %v1958, %v2140
        %v2153 = vmul.f32 %v1959, %v2140
        %v2154 = vmul.f32 %v1960, %v2140
        %v2155 = vmul.f32 %v1961, %v2140
        %v2156 = vmul.f32 %v1962, %v2140
        %v2157 = vmul.f32 %v1963, %v2140
        %v2158 = vmul.f32 %v1964, %v2140
        %v2159 = vmul.f32 %v1965, %v2140
        %v2160 = vmul.f32 %v1966, %v2140
        %v2161 = vmul.f32 %v1967, %v2140
        %v2162 = vmul.f32 %v1968, %v2140
        %v2163 = vmul.f32 %v1969, %v2140
        %v2164 = vmul.f32 %v1970, %v2140
        %v2165 = vmul.f32 %v1971, %v2140
        %v2166 = vmul.f32 %v1972, %v2140
        %v2167 = vmul.f32 %v1973, %v2140
        %v2168 = vmul.f32 %v1974, %v2140
        %v2197 = vrot.slane %v2141, 1
        %v2198 = vrot.slane %v2142, 1
        %v2199 = vsel %vm775, %v2197, %v2198
        %v2200 = vrot.slane %v2143, 1
        %v2201 = vrot.slane %v2144, 1
        %v2202 = vsel %vm775, %v2200, %v2201
        %v2203 = vrot.slane %v2145, 1
        %v2204 = vrot.slane %v2146, 1
        %v2205 = vsel %vm775, %v2203, %v2204
        %v2206 = vrot.slane %v2147, 1
        %v2207 = vrot.slane %v2148, 1
        %v2208 = vsel %vm775, %v2206, %v2207
        %v2209 = vrot.slane %v2149, 1
        %v2210 = vrot.slane %v2150, 1
        %v2211 = vsel %vm775, %v2209, %v2210
        %v2212 = vrot.slane %v2151, 1
        %v2213 = vrot.slane %v2152, 1
        %v2214 = vsel %vm775, %v2212, %v2213
        %v2215 = vrot.slane %v2153, 1
        %v2216 = vrot.slane %v2154, 1
        %v2217 = vsel %vm775, %v2215, %v2216
        %v2218 = vrot.slane %v2155, 1
        %v2219 = vrot.slane %v2156, 1
        %v2220 = vsel %vm775, %v2218, %v2219
        %v2221 = vrot.slane %v2157, 1
        %v2222 = vrot.slane %v2158, 1
        %v2223 = vsel %vm775, %v2221, %v2222
        %v2224 = vrot.slane %v2159, 1
        %v2225 = vrot.slane %v2160, 1
        %v2226 = vsel %vm775, %v2224, %v2225
        %v2227 = vrot.slane %v2161, 1
        %v2228 = vrot.slane %v2162, 1
        %v2229 = vsel %vm775, %v2227, %v2228
        %v2230 = vrot.slane %v2163, 1
        %v2231 = vrot.slane %v2164, 1
        %v2232 = vsel %vm775, %v2230, %v2231
        %v2233 = vrot.slane %v2165, 1
        %v2234 = vrot.slane %v2166, 1
        %v2235 = vsel %vm775, %v2233, %v2234
        %v2236 = vrot.slane %v2167, 1
        %v2237 = vrot.slane %v2168, 1
        %v2238 = vsel %vm775, %v2236, %v2237
        %v2267 = vadd.f32 %v2108, %v2199
        %v2268 = vadd.f32 %v2109, %v2198
        %v2269 = vadd.f32 %v2110, %v2202
        %v2270 = vadd.f32 %v2111, %v2201
        %v2271 = vadd.f32 %v2112, %v2205
        %v2272 = vadd.f32 %v2113, %v2204
        %v2273 = vadd.f32 %v2114, %v2208
        %v2274 = vadd.f32 %v2115, %v2207
        %v2275 = vadd.f32 %v2116, %v2211
        %v2276 = vadd.f32 %v2117, %v2210
        %v2277 = vadd.f32 %v2118, %v2214
        %v2278 = vadd.f32 %v2119, %v2213
        %v2279 = vadd.f32 %v2120, %v2217
        %v2280 = vadd.f32 %v2121, %v2216
        %v2281 = vadd.f32 %v2122, %v2220
        %v2282 = vadd.f32 %v2123, %v2219
        %v2283 = vadd.f32 %v2124, %v2223
        %v2284 = vadd.f32 %v2125, %v2222
        %v2285 = vadd.f32 %v2126, %v2226
        %v2286 = vadd.f32 %v2127, %v2225
        %v2287 = vadd.f32 %v2128, %v2229
        %v2288 = vadd.f32 %v2129, %v2228
        %v2289 = vadd.f32 %v2130, %v2232
        %v2290 = vadd.f32 %v2131, %v2231
        %v2291 = vadd.f32 %v2132, %v2235
        %v2292 = vadd.f32 %v2133, %v2234
        %v2293 = vadd.f32 %v2134, %v2238
        %v2294 = vadd.f32 %v2135, %v2237
        %v2295 = vld [vmem:[%s620 + $0x5] sm:$0x1]
        %v2296 = vlaneseq
        %v2297 = vshrl.u32 %v2296, 7
        %v2298 = vsub.s32 0, %v2297
        %v2299 = vrot.slane %v2295, %v2298
        %v2300 = vmul.f32 %v1949, %v2299
        %v2301 = vmul.f32 %v1950, %v2299
        %v2302 = vmul.f32 %v1951, %v2299
        %v2303 = vmul.f32 %v1952, %v2299
        %v2304 = vmul.f32 %v1953, %v2299
        %v2305 = vmul.f32 %v1954, %v2299
        %v2306 = vmul.f32 %v1955, %v2299
        %v2307 = vmul.f32 %v1956, %v2299
        %v2308 = vmul.f32 %v1957, %v2299
        %v2309 = vmul.f32 %v1958, %v2299
        %v2310 = vmul.f32 %v1959, %v2299
        %v2311 = vmul.f32 %v1960, %v2299
        %v2312 = vmul.f32 %v1961, %v2299
        %v2313 = vmul.f32 %v1962, %v2299
        %v2314 = vmul.f32 %v1963, %v2299
        %v2315 = vmul.f32 %v1964, %v2299
        %v2316 = vmul.f32 %v1965, %v2299
        %v2317 = vmul.f32 %v1966, %v2299
        %v2318 = vmul.f32 %v1967, %v2299
        %v2319 = vmul.f32 %v1968, %v2299
        %v2320 = vmul.f32 %v1969, %v2299
        %v2321 = vmul.f32 %v1970, %v2299
        %v2322 = vmul.f32 %v1971, %v2299
        %v2323 = vmul.f32 %v1972, %v2299
        %v2324 = vmul.f32 %v1973, %v2299
        %v2325 = vmul.f32 %v1974, %v2299
        %v2326 = vmul.f32 %v1975, %v2299
        %v2327 = vmul.f32 %v1976, %v2299
        %v2356 = vrot.slane %v2300, 1
        %v2357 = vrot.slane %v2301, 1
        %v2358 = vsel %vm775, %v2356, %v2357
        %v2359 = vrot.slane %v2302, 1
        %v2360 = vrot.slane %v2303, 1
        %v2361 = vsel %vm775, %v2359, %v2360
        %v2362 = vrot.slane %v2304, 1
        %v2363 = vrot.slane %v2305, 1
        %v2364 = vsel %vm775, %v2362, %v2363
        %v2365 = vrot.slane %v2306, 1
        %v2366 = vrot.slane %v2307, 1
        %v2367 = vsel %vm775, %v2365, %v2366
        %v2368 = vrot.slane %v2308, 1
        %v2369 = vrot.slane %v2309, 1
        %v2370 = vsel %vm775, %v2368, %v2369
        %v2371 = vrot.slane %v2310, 1
        %v2372 = vrot.slane %v2311, 1
        %v2373 = vsel %vm775, %v2371, %v2372
        %v2374 = vrot.slane %v2312, 1
        %v2375 = vrot.slane %v2313, 1
        %v2376 = vsel %vm775, %v2374, %v2375
        %v2377 = vrot.slane %v2314, 1
        %v2378 = vrot.slane %v2315, 1
        %v2379 = vsel %vm775, %v2377, %v2378
        %v2380 = vrot.slane %v2316, 1
        %v2381 = vrot.slane %v2317, 1
        %v2382 = vsel %vm775, %v2380, %v2381
        %v2383 = vrot.slane %v2318, 1
        %v2384 = vrot.slane %v2319, 1
        %v2385 = vsel %vm775, %v2383, %v2384
        %v2386 = vrot.slane %v2320, 1
        %v2387 = vrot.slane %v2321, 1
        %v2388 = vsel %vm775, %v2386, %v2387
        %v2389 = vrot.slane %v2322, 1
        %v2390 = vrot.slane %v2323, 1
        %v2391 = vsel %vm775, %v2389, %v2390
        %v2392 = vrot.slane %v2324, 1
        %v2393 = vrot.slane %v2325, 1
        %v2394 = vsel %vm775, %v2392, %v2393
        %v2395 = vrot.slane %v2326, 1
        %v2396 = vrot.slane %v2327, 1
        %v2397 = vsel %vm775, %v2395, %v2396
        %v2426 = vadd.f32 %v2267, %v2358
        %v2427 = vadd.f32 %v2268, %v2357
        %v2428 = vadd.f32 %v2269, %v2361
        %v2429 = vadd.f32 %v2270, %v2360
        %v2430 = vadd.f32 %v2271, %v2364
        %v2431 = vadd.f32 %v2272, %v2363
        %v2432 = vadd.f32 %v2273, %v2367
        %v2433 = vadd.f32 %v2274, %v2366
        %v2434 = vadd.f32 %v2275, %v2370
        %v2435 = vadd.f32 %v2276, %v2369
        %v2436 = vadd.f32 %v2277, %v2373
        %v2437 = vadd.f32 %v2278, %v2372
        %v2438 = vadd.f32 %v2279, %v2376
        %v2439 = vadd.f32 %v2280, %v2375
        %v2440 = vadd.f32 %v2281, %v2379
        %v2441 = vadd.f32 %v2282, %v2378
        %v2442 = vadd.f32 %v2283, %v2382
        %v2443 = vadd.f32 %v2284, %v2381
        %v2444 = vadd.f32 %v2285, %v2385
        %v2445 = vadd.f32 %v2286, %v2384
        %v2446 = vadd.f32 %v2287, %v2388
        %v2447 = vadd.f32 %v2288, %v2387
        %v2448 = vadd.f32 %v2289, %v2391
        %v2449 = vadd.f32 %v2290, %v2390
        %v2450 = vadd.f32 %v2291, %v2394
        %v2451 = vadd.f32 %v2292, %v2393
        %v2452 = vadd.f32 %v2293, %v2397
        %v2453 = vadd.f32 %v2294, %v2396
        %v2454 = vld [vmem:[%s433 + $0x8] sm:$0xfc]
        %v2455 = vld [vmem:[%s433 + $0x28] sm:$0xff]
        %v2456 = vld [vmem:[%s433 + $0x48] sm:$0xfc]
        %v2457 = vld [vmem:[%s433 + $0x68] sm:$0xff]
        %v2458 = vld [vmem:[%s433 + $0x88] sm:$0xfc]
        %v2459 = vld [vmem:[%s433 + $0xa8] sm:$0xff]
        %v2460 = vld [vmem:[%s433 + $0xc8] sm:$0xfc]
        %v2461 = vld [vmem:[%s433 + $0xe8] sm:$0xff]
        %v2462 = vld [vmem:[%s433 + $0x108] sm:$0xfc]
        %v2463 = vld [vmem:[%s433 + $0x128] sm:$0xff]
        %v2464 = vld [vmem:[%s433 + $0x148] sm:$0xfc]
        %v2465 = vld [vmem:[%s433 + $0x168] sm:$0xff]
        %v2466 = vld [vmem:[%s433 + $0x188] sm:$0xfc]
        %v2467 = vld [vmem:[%s433 + $0x1a8] sm:$0xff]
        %v2468 = vld [vmem:[%s433 + $0x1c8] sm:$0xfc]
        %v2469 = vld [vmem:[%s433 + $0x1e8] sm:$0xff]
        %v2470 = vld [vmem:[%s433 + $0x208] sm:$0xfc]
        %v2471 = vld [vmem:[%s433 + $0x228] sm:$0xff]
        %v2472 = vld [vmem:[%s433 + $0x248] sm:$0xfc]
        %v2473 = vld [vmem:[%s433 + $0x268] sm:$0xff]
        %v2474 = vld [vmem:[%s433 + $0x288] sm:$0xfc]
        %v2475 = vld [vmem:[%s433 + $0x2a8] sm:$0xff]
        %v2476 = vld [vmem:[%s433 + $0x2c8] sm:$0xfc]
        %v2477 = vld [vmem:[%s433 + $0x2e8] sm:$0xff]
        %v2478 = vld [vmem:[%s433 + $0x308] sm:$0xfc]
        %v2479 = vld [vmem:[%s433 + $0x328] sm:$0xff]
        %v2480 = vld [vmem:[%s433 + $0x348] sm:$0xfc]
        %v2481 = vld [vmem:[%s433 + $0x368] sm:$0xff]
        %v2482 = vld [vmem:[%s433 + $0x388] sm:$0xfc]
        %v2483 = vld [vmem:[%s433 + $0x3a8] sm:$0xff]
        %v2484 = vld [vmem:[%s433 + $0x3c8] sm:$0xfc]
        %v2485 = vld [vmem:[%s433 + $0x3e8] sm:$0xff]
        %v2486 = vld [vmem:[%s440 + $0x6] sm:$0x1]
        %v2487 = vlaneseq
        %v2488 = vshrl.u32 %v2487, 7
        %v2489 = vsub.s32 0, %v2488
        %v2490 = vrot.slane %v2486, %v2489
        %v2491 = vmul.f32 %v2454, %v2490
        %v2492 = vmul.f32 %v2455, %v2490
        %v2493 = vmul.f32 %v2456, %v2490
        %v2494 = vmul.f32 %v2457, %v2490
        %v2495 = vmul.f32 %v2458, %v2490
        %v2496 = vmul.f32 %v2459, %v2490
        %v2497 = vmul.f32 %v2460, %v2490
        %v2498 = vmul.f32 %v2461, %v2490
        %v2499 = vmul.f32 %v2462, %v2490
        %v2500 = vmul.f32 %v2463, %v2490
        %v2501 = vmul.f32 %v2464, %v2490
        %v2502 = vmul.f32 %v2465, %v2490
        %v2503 = vmul.f32 %v2466, %v2490
        %v2504 = vmul.f32 %v2467, %v2490
        %v2505 = vmul.f32 %v2468, %v2490
        %v2506 = vmul.f32 %v2469, %v2490
        %v2507 = vmul.f32 %v2470, %v2490
        %v2508 = vmul.f32 %v2471, %v2490
        %v2509 = vmul.f32 %v2472, %v2490
        %v2510 = vmul.f32 %v2473, %v2490
        %v2511 = vmul.f32 %v2474, %v2490
        %v2512 = vmul.f32 %v2475, %v2490
        %v2513 = vmul.f32 %v2476, %v2490
        %v2514 = vmul.f32 %v2477, %v2490
        %v2515 = vmul.f32 %v2478, %v2490
        %v2516 = vmul.f32 %v2479, %v2490
        %v2517 = vmul.f32 %v2480, %v2490
        %v2518 = vmul.f32 %v2481, %v2490
        %v2547 = vrot.slane %v2491, 2
        %v2548 = vrot.slane %v2492, 2
        %v2549 = vsel %vm1285, %v2547, %v2548
        %v2550 = vrot.slane %v2493, 2
        %v2551 = vrot.slane %v2494, 2
        %v2552 = vsel %vm1285, %v2550, %v2551
        %v2553 = vrot.slane %v2495, 2
        %v2554 = vrot.slane %v2496, 2
        %v2555 = vsel %vm1285, %v2553, %v2554
        %v2556 = vrot.slane %v2497, 2
        %v2557 = vrot.slane %v2498, 2
        %v2558 = vsel %vm1285, %v2556, %v2557
        %v2559 = vrot.slane %v2499, 2
        %v2560 = vrot.slane %v2500, 2
        %v2561 = vsel %vm1285, %v2559, %v2560
        %v2562 = vrot.slane %v2501, 2
        %v2563 = vrot.slane %v2502, 2
        %v2564 = vsel %vm1285, %v2562, %v2563
        %v2565 = vrot.slane %v2503, 2
        %v2566 = vrot.slane %v2504, 2
        %v2567 = vsel %vm1285, %v2565, %v2566
        %v2568 = vrot.slane %v2505, 2
        %v2569 = vrot.slane %v2506, 2
        %v2570 = vsel %vm1285, %v2568, %v2569
        %v2571 = vrot.slane %v2507, 2
        %v2572 = vrot.slane %v2508, 2
        %v2573 = vsel %vm1285, %v2571, %v2572
        %v2574 = vrot.slane %v2509, 2
        %v2575 = vrot.slane %v2510, 2
        %v2576 = vsel %vm1285, %v2574, %v2575
        %v2577 = vrot.slane %v2511, 2
        %v2578 = vrot.slane %v2512, 2
        %v2579 = vsel %vm1285, %v2577, %v2578
        %v2580 = vrot.slane %v2513, 2
        %v2581 = vrot.slane %v2514, 2
        %v2582 = vsel %vm1285, %v2580, %v2581
        %v2583 = vrot.slane %v2515, 2
        %v2584 = vrot.slane %v2516, 2
        %v2585 = vsel %vm1285, %v2583, %v2584
        %v2586 = vrot.slane %v2517, 2
        %v2587 = vrot.slane %v2518, 2
        %v2588 = vsel %vm1285, %v2586, %v2587
        %v2617 = vadd.f32 %v2426, %v2549
        %v2618 = vadd.f32 %v2427, %v2548
        %v2619 = vadd.f32 %v2428, %v2552
        %v2620 = vadd.f32 %v2429, %v2551
        %v2621 = vadd.f32 %v2430, %v2555
        %v2622 = vadd.f32 %v2431, %v2554
        %v2623 = vadd.f32 %v2432, %v2558
        %v2624 = vadd.f32 %v2433, %v2557
        %v2625 = vadd.f32 %v2434, %v2561
        %v2626 = vadd.f32 %v2435, %v2560
        %v2627 = vadd.f32 %v2436, %v2564
        %v2628 = vadd.f32 %v2437, %v2563
        %v2629 = vadd.f32 %v2438, %v2567
        %v2630 = vadd.f32 %v2439, %v2566
        %v2631 = vadd.f32 %v2440, %v2570
        %v2632 = vadd.f32 %v2441, %v2569
        %v2633 = vadd.f32 %v2442, %v2573
        %v2634 = vadd.f32 %v2443, %v2572
        %v2635 = vadd.f32 %v2444, %v2576
        %v2636 = vadd.f32 %v2445, %v2575
        %v2637 = vadd.f32 %v2446, %v2579
        %v2638 = vadd.f32 %v2447, %v2578
        %v2639 = vadd.f32 %v2448, %v2582
        %v2640 = vadd.f32 %v2449, %v2581
        %v2641 = vadd.f32 %v2450, %v2585
        %v2642 = vadd.f32 %v2451, %v2584
        %v2643 = vadd.f32 %v2452, %v2588
        %v2644 = vadd.f32 %v2453, %v2587
        %v2645 = vld [vmem:[%s558 + $0x6] sm:$0x1]
        %v2646 = vlaneseq
        %v2647 = vshrl.u32 %v2646, 7
        %v2648 = vsub.s32 0, %v2647
        %v2649 = vrot.slane %v2645, %v2648
        %v2650 = vmul.f32 %v2456, %v2649
        %v2651 = vmul.f32 %v2457, %v2649
        %v2652 = vmul.f32 %v2458, %v2649
        %v2653 = vmul.f32 %v2459, %v2649
        %v2654 = vmul.f32 %v2460, %v2649
        %v2655 = vmul.f32 %v2461, %v2649
        %v2656 = vmul.f32 %v2462, %v2649
        %v2657 = vmul.f32 %v2463, %v2649
        %v2658 = vmul.f32 %v2464, %v2649
        %v2659 = vmul.f32 %v2465, %v2649
        %v2660 = vmul.f32 %v2466, %v2649
        %v2661 = vmul.f32 %v2467, %v2649
        %v2662 = vmul.f32 %v2468, %v2649
        %v2663 = vmul.f32 %v2469, %v2649
        %v2664 = vmul.f32 %v2470, %v2649
        %v2665 = vmul.f32 %v2471, %v2649
        %v2666 = vmul.f32 %v2472, %v2649
        %v2667 = vmul.f32 %v2473, %v2649
        %v2668 = vmul.f32 %v2474, %v2649
        %v2669 = vmul.f32 %v2475, %v2649
        %v2670 = vmul.f32 %v2476, %v2649
        %v2671 = vmul.f32 %v2477, %v2649
        %v2672 = vmul.f32 %v2478, %v2649
        %v2673 = vmul.f32 %v2479, %v2649
        %v2674 = vmul.f32 %v2480, %v2649
        %v2675 = vmul.f32 %v2481, %v2649
        %v2676 = vmul.f32 %v2482, %v2649
        %v2677 = vmul.f32 %v2483, %v2649
        %v2706 = vrot.slane %v2650, 2
        %v2707 = vrot.slane %v2651, 2
        %v2708 = vsel %vm1285, %v2706, %v2707
        %v2709 = vrot.slane %v2652, 2
        %v2710 = vrot.slane %v2653, 2
        %v2711 = vsel %vm1285, %v2709, %v2710
        %v2712 = vrot.slane %v2654, 2
        %v2713 = vrot.slane %v2655, 2
        %v2714 = vsel %vm1285, %v2712, %v2713
        %v2715 = vrot.slane %v2656, 2
        %v2716 = vrot.slane %v2657, 2
        %v2717 = vsel %vm1285, %v2715, %v2716
        %v2718 = vrot.slane %v2658, 2
        %v2719 = vrot.slane %v2659, 2
        %v2720 = vsel %vm1285, %v2718, %v2719
        %v2721 = vrot.slane %v2660, 2
        %v2722 = vrot.slane %v2661, 2
        %v2723 = vsel %vm1285, %v2721, %v2722
        %v2724 = vrot.slane %v2662, 2
        %v2725 = vrot.slane %v2663, 2
        %v2726 = vsel %vm1285, %v2724, %v2725
        %v2727 = vrot.slane %v2664, 2
        %v2728 = vrot.slane %v2665, 2
        %v2729 = vsel %vm1285, %v2727, %v2728
        %v2730 = vrot.slane %v2666, 2
        %v2731 = vrot.slane %v2667, 2
        %v2732 = vsel %vm1285, %v2730, %v2731
        %v2733 = vrot.slane %v2668, 2
        %v2734 = vrot.slane %v2669, 2
        %v2735 = vsel %vm1285, %v2733, %v2734
        %v2736 = vrot.slane %v2670, 2
        %v2737 = vrot.slane %v2671, 2
        %v2738 = vsel %vm1285, %v2736, %v2737
        %v2739 = vrot.slane %v2672, 2
        %v2740 = vrot.slane %v2673, 2
        %v2741 = vsel %vm1285, %v2739, %v2740
        %v2742 = vrot.slane %v2674, 2
        %v2743 = vrot.slane %v2675, 2
        %v2744 = vsel %vm1285, %v2742, %v2743
        %v2745 = vrot.slane %v2676, 2
        %v2746 = vrot.slane %v2677, 2
        %v2747 = vsel %vm1285, %v2745, %v2746
        %v2776 = vadd.f32 %v2617, %v2708
        %v2777 = vadd.f32 %v2618, %v2707
        %v2778 = vadd.f32 %v2619, %v2711
        %v2779 = vadd.f32 %v2620, %v2710
        %v2780 = vadd.f32 %v2621, %v2714
        %v2781 = vadd.f32 %v2622, %v2713
        %v2782 = vadd.f32 %v2623, %v2717
        %v2783 = vadd.f32 %v2624, %v2716
        %v2784 = vadd.f32 %v2625, %v2720
        %v2785 = vadd.f32 %v2626, %v2719
        %v2786 = vadd.f32 %v2627, %v2723
        %v2787 = vadd.f32 %v2628, %v2722
        %v2788 = vadd.f32 %v2629, %v2726
        %v2789 = vadd.f32 %v2630, %v2725
        %v2790 = vadd.f32 %v2631, %v2729
        %v2791 = vadd.f32 %v2632, %v2728
        %v2792 = vadd.f32 %v2633, %v2732
        %v2793 = vadd.f32 %v2634, %v2731
        %v2794 = vadd.f32 %v2635, %v2735
        %v2795 = vadd.f32 %v2636, %v2734
        %v2796 = vadd.f32 %v2637, %v2738
        %v2797 = vadd.f32 %v2638, %v2737
        %v2798 = vadd.f32 %v2639, %v2741
        %v2799 = vadd.f32 %v2640, %v2740
        %v2800 = vadd.f32 %v2641, %v2744
        %v2801 = vadd.f32 %v2642, %v2743
        %v2802 = vadd.f32 %v2643, %v2747
        %v2803 = vadd.f32 %v2644, %v2746
        %v2804 = vld [vmem:[%s620 + $0x6] sm:$0x1]
        %v2805 = vlaneseq
        %v2806 = vshrl.u32 %v2805, 7
        %v2807 = vsub.s32 0, %v2806
        %v2808 = vrot.slane %v2804, %v2807
        %v2809 = vmul.f32 %v2458, %v2808
        %v2810 = vmul.f32 %v2459, %v2808
        %v2811 = vmul.f32 %v2460, %v2808
        %v2812 = vmul.f32 %v2461, %v2808
        %v2813 = vmul.f32 %v2462, %v2808
        %v2814 = vmul.f32 %v2463, %v2808
        %v2815 = vmul.f32 %v2464, %v2808
        %v2816 = vmul.f32 %v2465, %v2808
        %v2817 = vmul.f32 %v2466, %v2808
        %v2818 = vmul.f32 %v2467, %v2808
        %v2819 = vmul.f32 %v2468, %v2808
        %v2820 = vmul.f32 %v2469, %v2808
        %v2821 = vmul.f32 %v2470, %v2808
        %v2822 = vmul.f32 %v2471, %v2808
        %v2823 = vmul.f32 %v2472, %v2808
        %v2824 = vmul.f32 %v2473, %v2808
        %v2825 = vmul.f32 %v2474, %v2808
        %v2826 = vmul.f32 %v2475, %v2808
        %v2827 = vmul.f32 %v2476, %v2808
        %v2828 = vmul.f32 %v2477, %v2808
        %v2829 = vmul.f32 %v2478, %v2808
        %v2830 = vmul.f32 %v2479, %v2808
        %v2831 = vmul.f32 %v2480, %v2808
        %v2832 = vmul.f32 %v2481, %v2808
        %v2833 = vmul.f32 %v2482, %v2808
        %v2834 = vmul.f32 %v2483, %v2808
        %v2835 = vmul.f32 %v2484, %v2808
        %v2836 = vmul.f32 %v2485, %v2808
        %v2865 = vrot.slane %v2809, 2
        %v2866 = vrot.slane %v2810, 2
        %v2867 = vsel %vm1285, %v2865, %v2866
        %v2868 = vrot.slane %v2811, 2
        %v2869 = vrot.slane %v2812, 2
        %v2870 = vsel %vm1285, %v2868, %v2869
        %v2871 = vrot.slane %v2813, 2
        %v2872 = vrot.slane %v2814, 2
        %v2873 = vsel %vm1285, %v2871, %v2872
        %v2874 = vrot.slane %v2815, 2
        %v2875 = vrot.slane %v2816, 2
        %v2876 = vsel %vm1285, %v2874, %v2875
        %v2877 = vrot.slane %v2817, 2
        %v2878 = vrot.slane %v2818, 2
        %v2879 = vsel %vm1285, %v2877, %v2878
        %v2880 = vrot.slane %v2819, 2
        %v2881 = vrot.slane %v2820, 2
        %v2882 = vsel %vm1285, %v2880, %v2881
        %v2883 = vrot.slane %v2821, 2
        %v2884 = vrot.slane %v2822, 2
        %v2885 = vsel %vm1285, %v2883, %v2884
        %v2886 = vrot.slane %v2823, 2
        %v2887 = vrot.slane %v2824, 2
        %v2888 = vsel %vm1285, %v2886, %v2887
        %v2889 = vrot.slane %v2825, 2
        %v2890 = vrot.slane %v2826, 2
        %v2891 = vsel %vm1285, %v2889, %v2890
        %v2892 = vrot.slane %v2827, 2
        %v2893 = vrot.slane %v2828, 2
        %v2894 = vsel %vm1285, %v2892, %v2893
        %v2895 = vrot.slane %v2829, 2
        %v2896 = vrot.slane %v2830, 2
        %v2897 = vsel %vm1285, %v2895, %v2896
        %v2898 = vrot.slane %v2831, 2
        %v2899 = vrot.slane %v2832, 2
        %v2900 = vsel %vm1285, %v2898, %v2899
        %v2901 = vrot.slane %v2833, 2
        %v2902 = vrot.slane %v2834, 2
        %v2903 = vsel %vm1285, %v2901, %v2902
        %v2904 = vrot.slane %v2835, 2
        %v2905 = vrot.slane %v2836, 2
        %v2906 = vsel %vm1285, %v2904, %v2905
        %v2935 = vadd.f32 %v2776, %v2867
        %v2936 = vadd.f32 %v2777, %v2866
        %v2937 = vadd.f32 %v2778, %v2870
        %v2938 = vadd.f32 %v2779, %v2869
        %v2939 = vadd.f32 %v2780, %v2873
        %v2940 = vadd.f32 %v2781, %v2872
        %v2941 = vadd.f32 %v2782, %v2876
        %v2942 = vadd.f32 %v2783, %v2875
        %v2943 = vadd.f32 %v2784, %v2879
        %v2944 = vadd.f32 %v2785, %v2878
        %v2945 = vadd.f32 %v2786, %v2882
        %v2946 = vadd.f32 %v2787, %v2881
        %v2947 = vadd.f32 %v2788, %v2885
        %v2948 = vadd.f32 %v2789, %v2884
        %v2949 = vadd.f32 %v2790, %v2888
        %v2950 = vadd.f32 %v2791, %v2887
        %v2951 = vadd.f32 %v2792, %v2891
        %v2952 = vadd.f32 %v2793, %v2890
        %v2953 = vadd.f32 %v2794, %v2894
        %v2954 = vadd.f32 %v2795, %v2893
        %v2955 = vadd.f32 %v2796, %v2897
        %v2956 = vadd.f32 %v2797, %v2896
        %v2957 = vadd.f32 %v2798, %v2900
        %v2958 = vadd.f32 %v2799, %v2899
        %v2959 = vadd.f32 %v2800, %v2903
        %v2960 = vadd.f32 %v2801, %v2902
        %v2961 = vadd.f32 %v2802, %v2906
        %v2962 = vadd.f32 %v2803, %v2905
        %2963 = vst [vmem:[%s461 + $0x8] sm:$0xff] %v2935
        %2964 = vst [vmem:[%s461 + $0x28] sm:$0x3f] %v2936
        %2965 = vst [vmem:[%s461 + $0x48] sm:$0xff] %v2937
        %2966 = vst [vmem:[%s461 + $0x68] sm:$0x3f] %v2938
        %2967 = vst [vmem:[%s461 + $0x88] sm:$0xff] %v2939
        %2968 = vst [vmem:[%s461 + $0xa8] sm:$0x3f] %v2940
        %2969 = vst [vmem:[%s461 + $0xc8] sm:$0xff] %v2941
        %2970 = vst [vmem:[%s461 + $0xe8] sm:$0x3f] %v2942
        %2971 = vst [vmem:[%s461 + $0x108] sm:$0xff] %v2943
        %2972 = vst [vmem:[%s461 + $0x128] sm:$0x3f] %v2944
        %2973 = vst [vmem:[%s461 + $0x148] sm:$0xff] %v2945
        %2974 = vst [vmem:[%s461 + $0x168] sm:$0x3f] %v2946
        %2975 = vst [vmem:[%s461 + $0x188] sm:$0xff] %v2947
        %2976 = vst [vmem:[%s461 + $0x1a8] sm:$0x3f] %v2948
        %2977 = vst [vmem:[%s461 + $0x1c8] sm:$0xff] %v2949
        %2978 = vst [vmem:[%s461 + $0x1e8] sm:$0x3f] %v2950
        %2979 = vst [vmem:[%s461 + $0x208] sm:$0xff] %v2951
        %2980 = vst [vmem:[%s461 + $0x228] sm:$0x3f] %v2952
        %2981 = vst [vmem:[%s461 + $0x248] sm:$0xff] %v2953
        %2982 = vst [vmem:[%s461 + $0x268] sm:$0x3f] %v2954
        %2983 = vst [vmem:[%s461 + $0x288] sm:$0xff] %v2955
        %2984 = vst [vmem:[%s461 + $0x2a8] sm:$0x3f] %v2956
        %2985 = vst [vmem:[%s461 + $0x2c8] sm:$0xff] %v2957
        %2986 = vst [vmem:[%s461 + $0x2e8] sm:$0x3f] %v2958
        %2987 = vst [vmem:[%s461 + $0x308] sm:$0xff] %v2959
        %2988 = vst [vmem:[%s461 + $0x328] sm:$0x3f] %v2960
        %2989 = vst [vmem:[%s461 + $0x348] sm:$0xff] %v2961
        %2990 = vst [vmem:[%s461 + $0x368] sm:$0x3f] %v2962
        %v2991 = vld [vmem:[%s433 + $0x10] sm:$0xff]
        %v2992 = vld [vmem:[%s433 + $0x30] sm:$0x3f]
        %v2993 = vld [vmem:[%s433 + $0x50] sm:$0xff]
        %v2994 = vld [vmem:[%s433 + $0x70] sm:$0x3f]
        %v2995 = vld [vmem:[%s433 + $0x90] sm:$0xff]
        %v2996 = vld [vmem:[%s433 + $0xb0] sm:$0x3f]
        %v2997 = vld [vmem:[%s433 + $0xd0] sm:$0xff]
        %v2998 = vld [vmem:[%s433 + $0xf0] sm:$0x3f]
        %v2999 = vld [vmem:[%s433 + $0x110] sm:$0xff]
        %v3000 = vld [vmem:[%s433 + $0x130] sm:$0x3f]
        %v3001 = vld [vmem:[%s433 + $0x150] sm:$0xff]
        %v3002 = vld [vmem:[%s433 + $0x170] sm:$0x3f]
        %v3003 = vld [vmem:[%s433 + $0x190] sm:$0xff]
        %v3004 = vld [vmem:[%s433 + $0x1b0] sm:$0x3f]
        %v3005 = vld [vmem:[%s433 + $0x1d0] sm:$0xff]
        %v3006 = vld [vmem:[%s433 + $0x1f0] sm:$0x3f]
        %v3007 = vld [vmem:[%s433 + $0x210] sm:$0xff]
        %v3008 = vld [vmem:[%s433 + $0x230] sm:$0x3f]
        %v3009 = vld [vmem:[%s433 + $0x250] sm:$0xff]
        %v3010 = vld [vmem:[%s433 + $0x270] sm:$0x3f]
        %v3011 = vld [vmem:[%s433 + $0x290] sm:$0xff]
        %v3012 = vld [vmem:[%s433 + $0x2b0] sm:$0x3f]
        %v3013 = vld [vmem:[%s433 + $0x2d0] sm:$0xff]
        %v3014 = vld [vmem:[%s433 + $0x2f0] sm:$0x3f]
        %v3015 = vld [vmem:[%s433 + $0x310] sm:$0xff]
        %v3016 = vld [vmem:[%s433 + $0x330] sm:$0x3f]
        %v3017 = vld [vmem:[%s433 + $0x350] sm:$0xff]
        %v3018 = vld [vmem:[%s433 + $0x370] sm:$0x3f]
        %v3019 = vld [vmem:[%s433 + $0x390] sm:$0xff]
        %v3020 = vld [vmem:[%s433 + $0x3b0] sm:$0x3f]
        %v3021 = vld [vmem:[%s433 + $0x3d0] sm:$0xff]
        %v3022 = vld [vmem:[%s433 + $0x3f0] sm:$0x3f]
        %v3023 = vld [vmem:[%s440 + $0x8] sm:$0x1]
        %v3024 = vlaneseq
        %v3025 = vshrl.u32 %v3024, 7
        %v3026 = vsub.s32 0, %v3025
        %v3027 = vrot.slane %v3023, %v3026
        %v3028 = vmul.f32 %v2991, %v3027
        %v3029 = vmul.f32 %v2992, %v3027
        %v3030 = vmul.f32 %v2993, %v3027
        %v3031 = vmul.f32 %v2994, %v3027
        %v3032 = vmul.f32 %v2995, %v3027
        %v3033 = vmul.f32 %v2996, %v3027
        %v3034 = vmul.f32 %v2997, %v3027
        %v3035 = vmul.f32 %v2998, %v3027
        %v3036 = vmul.f32 %v2999, %v3027
        %v3037 = vmul.f32 %v3000, %v3027
        %v3038 = vmul.f32 %v3001, %v3027
        %v3039 = vmul.f32 %v3002, %v3027
        %v3040 = vmul.f32 %v3003, %v3027
        %v3041 = vmul.f32 %v3004, %v3027
        %v3042 = vmul.f32 %v3005, %v3027
        %v3043 = vmul.f32 %v3006, %v3027
        %v3044 = vmul.f32 %v3007, %v3027
        %v3045 = vmul.f32 %v3008, %v3027
        %v3046 = vmul.f32 %v3009, %v3027
        %v3047 = vmul.f32 %v3010, %v3027
        %v3048 = vmul.f32 %v3011, %v3027
        %v3049 = vmul.f32 %v3012, %v3027
        %v3050 = vmul.f32 %v3013, %v3027
        %v3051 = vmul.f32 %v3014, %v3027
        %v3052 = vmul.f32 %v3015, %v3027
        %v3053 = vmul.f32 %v3016, %v3027
        %v3054 = vmul.f32 %v3017, %v3027
        %v3055 = vmul.f32 %v3018, %v3027
        %v3056 = vadd.f32 %v3028, 0.0
        %v3057 = vadd.f32 %v3029, 0.0
        %v3058 = vadd.f32 %v3030, 0.0
        %v3059 = vadd.f32 %v3031, 0.0
        %v3060 = vadd.f32 %v3032, 0.0
        %v3061 = vadd.f32 %v3033, 0.0
        %v3062 = vadd.f32 %v3034, 0.0
        %v3063 = vadd.f32 %v3035, 0.0
        %v3064 = vadd.f32 %v3036, 0.0
        %v3065 = vadd.f32 %v3037, 0.0
        %v3066 = vadd.f32 %v3038, 0.0
        %v3067 = vadd.f32 %v3039, 0.0
        %v3068 = vadd.f32 %v3040, 0.0
        %v3069 = vadd.f32 %v3041, 0.0
        %v3070 = vadd.f32 %v3042, 0.0
        %v3071 = vadd.f32 %v3043, 0.0
        %v3072 = vadd.f32 %v3044, 0.0
        %v3073 = vadd.f32 %v3045, 0.0
        %v3074 = vadd.f32 %v3046, 0.0
        %v3075 = vadd.f32 %v3047, 0.0
        %v3076 = vadd.f32 %v3048, 0.0
        %v3077 = vadd.f32 %v3049, 0.0
        %v3078 = vadd.f32 %v3050, 0.0
        %v3079 = vadd.f32 %v3051, 0.0
        %v3080 = vadd.f32 %v3052, 0.0
        %v3081 = vadd.f32 %v3053, 0.0
        %v3082 = vadd.f32 %v3054, 0.0
        %v3083 = vadd.f32 %v3055, 0.0
        %v3084 = vld [vmem:[%s558 + $0x8] sm:$0x1]
        %v3085 = vlaneseq
        %v3086 = vshrl.u32 %v3085, 7
        %v3087 = vsub.s32 0, %v3086
        %v3088 = vrot.slane %v3084, %v3087
        %v3089 = vmul.f32 %v2993, %v3088
        %v3090 = vmul.f32 %v2994, %v3088
        %v3091 = vmul.f32 %v2995, %v3088
        %v3092 = vmul.f32 %v2996, %v3088
        %v3093 = vmul.f32 %v2997, %v3088
        %v3094 = vmul.f32 %v2998, %v3088
        %v3095 = vmul.f32 %v2999, %v3088
        %v3096 = vmul.f32 %v3000, %v3088
        %v3097 = vmul.f32 %v3001, %v3088
        %v3098 = vmul.f32 %v3002, %v3088
        %v3099 = vmul.f32 %v3003, %v3088
        %v3100 = vmul.f32 %v3004, %v3088
        %v3101 = vmul.f32 %v3005, %v3088
        %v3102 = vmul.f32 %v3006, %v3088
        %v3103 = vmul.f32 %v3007, %v3088
        %v3104 = vmul.f32 %v3008, %v3088
        %v3105 = vmul.f32 %v3009, %v3088
        %v3106 = vmul.f32 %v3010, %v3088
        %v3107 = vmul.f32 %v3011, %v3088
        %v3108 = vmul.f32 %v3012, %v3088
        %v3109 = vmul.f32 %v3013, %v3088
        %v3110 = vmul.f32 %v3014, %v3088
        %v3111 = vmul.f32 %v3015, %v3088
        %v3112 = vmul.f32 %v3016, %v3088
        %v3113 = vmul.f32 %v3017, %v3088
        %v3114 = vmul.f32 %v3018, %v3088
        %v3115 = vmul.f32 %v3019, %v3088
        %v3116 = vmul.f32 %v3020, %v3088
        %v3117 = vadd.f32 %v3056, %v3089
        %v3118 = vadd.f32 %v3057, %v3090
        %v3119 = vadd.f32 %v3058, %v3091
        %v3120 = vadd.f32 %v3059, %v3092
        %v3121 = vadd.f32 %v3060, %v3093
        %v3122 = vadd.f32 %v3061, %v3094
        %v3123 = vadd.f32 %v3062, %v3095
        %v3124 = vadd.f32 %v3063, %v3096
        %v3125 = vadd.f32 %v3064, %v3097
        %v3126 = vadd.f32 %v3065, %v3098
        %v3127 = vadd.f32 %v3066, %v3099
        %v3128 = vadd.f32 %v3067, %v3100
        %v3129 = vadd.f32 %v3068, %v3101
        %v3130 = vadd.f32 %v3069, %v3102
        %v3131 = vadd.f32 %v3070, %v3103
        %v3132 = vadd.f32 %v3071, %v3104
        %v3133 = vadd.f32 %v3072, %v3105
        %v3134 = vadd.f32 %v3073, %v3106
        %v3135 = vadd.f32 %v3074, %v3107
        %v3136 = vadd.f32 %v3075, %v3108
        %v3137 = vadd.f32 %v3076, %v3109
        %v3138 = vadd.f32 %v3077, %v3110
        %v3139 = vadd.f32 %v3078, %v3111
        %v3140 = vadd.f32 %v3079, %v3112
        %v3141 = vadd.f32 %v3080, %v3113
        %v3142 = vadd.f32 %v3081, %v3114
        %v3143 = vadd.f32 %v3082, %v3115
        %v3144 = vadd.f32 %v3083, %v3116
        %v3145 = vld [vmem:[%s620 + $0x8] sm:$0x1]
        %v3146 = vlaneseq
        %v3147 = vshrl.u32 %v3146, 7
        %v3148 = vsub.s32 0, %v3147
        %v3149 = vrot.slane %v3145, %v3148
        %v3150 = vmul.f32 %v2995, %v3149
        %v3151 = vmul.f32 %v2996, %v3149
        %v3152 = vmul.f32 %v2997, %v3149
        %v3153 = vmul.f32 %v2998, %v3149
        %v3154 = vmul.f32 %v2999, %v3149
        %v3155 = vmul.f32 %v3000, %v3149
        %v3156 = vmul.f32 %v3001, %v3149
        %v3157 = vmul.f32 %v3002, %v3149
        %v3158 = vmul.f32 %v3003, %v3149
        %v3159 = vmul.f32 %v3004, %v3149
        %v3160 = vmul.f32 %v3005, %v3149
        %v3161 = vmul.f32 %v3006, %v3149
        %v3162 = vmul.f32 %v3007, %v3149
        %v3163 = vmul.f32 %v3008, %v3149
        %v3164 = vmul.f32 %v3009, %v3149
        %v3165 = vmul.f32 %v3010, %v3149
        %v3166 = vmul.f32 %v3011, %v3149
        %v3167 = vmul.f32 %v3012, %v3149
        %v3168 = vmul.f32 %v3013, %v3149
        %v3169 = vmul.f32 %v3014, %v3149
        %v3170 = vmul.f32 %v3015, %v3149
        %v3171 = vmul.f32 %v3016, %v3149
        %v3172 = vmul.f32 %v3017, %v3149
        %v3173 = vmul.f32 %v3018, %v3149
        %v3174 = vmul.f32 %v3019, %v3149
        %v3175 = vmul.f32 %v3020, %v3149
        %v3176 = vmul.f32 %v3021, %v3149
        %v3177 = vmul.f32 %v3022, %v3149
        %v3178 = vadd.f32 %v3117, %v3150
        %v3179 = vadd.f32 %v3118, %v3151
        %v3180 = vadd.f32 %v3119, %v3152
        %v3181 = vadd.f32 %v3120, %v3153
        %v3182 = vadd.f32 %v3121, %v3154
        %v3183 = vadd.f32 %v3122, %v3155
        %v3184 = vadd.f32 %v3123, %v3156
        %v3185 = vadd.f32 %v3124, %v3157
        %v3186 = vadd.f32 %v3125, %v3158
        %v3187 = vadd.f32 %v3126, %v3159
        %v3188 = vadd.f32 %v3127, %v3160
        %v3189 = vadd.f32 %v3128, %v3161
        %v3190 = vadd.f32 %v3129, %v3162
        %v3191 = vadd.f32 %v3130, %v3163
        %v3192 = vadd.f32 %v3131, %v3164
        %v3193 = vadd.f32 %v3132, %v3165
        %v3194 = vadd.f32 %v3133, %v3166
        %v3195 = vadd.f32 %v3134, %v3167
        %v3196 = vadd.f32 %v3135, %v3168
        %v3197 = vadd.f32 %v3136, %v3169
        %v3198 = vadd.f32 %v3137, %v3170
        %v3199 = vadd.f32 %v3138, %v3171
        %v3200 = vadd.f32 %v3139, %v3172
        %v3201 = vadd.f32 %v3140, %v3173
        %v3202 = vadd.f32 %v3141, %v3174
        %v3203 = vadd.f32 %v3142, %v3175
        %v3204 = vadd.f32 %v3143, %v3176
        %v3205 = vadd.f32 %v3144, %v3177
        %v3206 = vld [vmem:[%s433 + $0x10] sm:$0xfe]
        %v3207 = vld [vmem:[%s433 + $0x30] sm:$0x7f]
        %v3208 = vld [vmem:[%s433 + $0x50] sm:$0xfe]
        %v3209 = vld [vmem:[%s433 + $0x70] sm:$0x7f]
        %v3210 = vld [vmem:[%s433 + $0x90] sm:$0xfe]
        %v3211 = vld [vmem:[%s433 + $0xb0] sm:$0x7f]
        %v3212 = vld [vmem:[%s433 + $0xd0] sm:$0xfe]
        %v3213 = vld [vmem:[%s433 + $0xf0] sm:$0x7f]
        %v3214 = vld [vmem:[%s433 + $0x110] sm:$0xfe]
        %v3215 = vld [vmem:[%s433 + $0x130] sm:$0x7f]
        %v3216 = vld [vmem:[%s433 + $0x150] sm:$0xfe]
        %v3217 = vld [vmem:[%s433 + $0x170] sm:$0x7f]
        %v3218 = vld [vmem:[%s433 + $0x190] sm:$0xfe]
        %v3219 = vld [vmem:[%s433 + $0x1b0] sm:$0x7f]
        %v3220 = vld [vmem:[%s433 + $0x1d0] sm:$0xfe]
        %v3221 = vld [vmem:[%s433 + $0x1f0] sm:$0x7f]
        %v3222 = vld [vmem:[%s433 + $0x210] sm:$0xfe]
        %v3223 = vld [vmem:[%s433 + $0x230] sm:$0x7f]
        %v3224 = vld [vmem:[%s433 + $0x250] sm:$0xfe]
        %v3225 = vld [vmem:[%s433 + $0x270] sm:$0x7f]
        %v3226 = vld [vmem:[%s433 + $0x290] sm:$0xfe]
        %v3227 = vld [vmem:[%s433 + $0x2b0] sm:$0x7f]
        %v3228 = vld [vmem:[%s433 + $0x2d0] sm:$0xfe]
        %v3229 = vld [vmem:[%s433 + $0x2f0] sm:$0x7f]
        %v3230 = vld [vmem:[%s433 + $0x310] sm:$0xfe]
        %v3231 = vld [vmem:[%s433 + $0x330] sm:$0x7f]
        %v3232 = vld [vmem:[%s433 + $0x350] sm:$0xfe]
        %v3233 = vld [vmem:[%s433 + $0x370] sm:$0x7f]
        %v3234 = vld [vmem:[%s433 + $0x390] sm:$0xfe]
        %v3235 = vld [vmem:[%s433 + $0x3b0] sm:$0x7f]
        %v3236 = vld [vmem:[%s433 + $0x3d0] sm:$0xfe]
        %v3237 = vld [vmem:[%s433 + $0x3f0] sm:$0x7f]
        %v3238 = vld [vmem:[%s440 + $0x9] sm:$0x1]
        %v3239 = vlaneseq
        %v3240 = vshrl.u32 %v3239, 7
        %v3241 = vsub.s32 0, %v3240
        %v3242 = vrot.slane %v3238, %v3241
        %v3243 = vmul.f32 %v3206, %v3242
        %v3244 = vmul.f32 %v3207, %v3242
        %v3245 = vmul.f32 %v3208, %v3242
        %v3246 = vmul.f32 %v3209, %v3242
        %v3247 = vmul.f32 %v3210, %v3242
        %v3248 = vmul.f32 %v3211, %v3242
        %v3249 = vmul.f32 %v3212, %v3242
        %v3250 = vmul.f32 %v3213, %v3242
        %v3251 = vmul.f32 %v3214, %v3242
        %v3252 = vmul.f32 %v3215, %v3242
        %v3253 = vmul.f32 %v3216, %v3242
        %v3254 = vmul.f32 %v3217, %v3242
        %v3255 = vmul.f32 %v3218, %v3242
        %v3256 = vmul.f32 %v3219, %v3242
        %v3257 = vmul.f32 %v3220, %v3242
        %v3258 = vmul.f32 %v3221, %v3242
        %v3259 = vmul.f32 %v3222, %v3242
        %v3260 = vmul.f32 %v3223, %v3242
        %v3261 = vmul.f32 %v3224, %v3242
        %v3262 = vmul.f32 %v3225, %v3242
        %v3263 = vmul.f32 %v3226, %v3242
        %v3264 = vmul.f32 %v3227, %v3242
        %v3265 = vmul.f32 %v3228, %v3242
        %v3266 = vmul.f32 %v3229, %v3242
        %v3267 = vmul.f32 %v3230, %v3242
        %v3268 = vmul.f32 %v3231, %v3242
        %v3269 = vmul.f32 %v3232, %v3242
        %v3270 = vmul.f32 %v3233, %v3242
        %v3299 = vrot.slane %v3243, 1
        %v3300 = vrot.slane %v3244, 1
        %v3301 = vsel %vm775, %v3299, %v3300
        %v3302 = vrot.slane %v3245, 1
        %v3303 = vrot.slane %v3246, 1
        %v3304 = vsel %vm775, %v3302, %v3303
        %v3305 = vrot.slane %v3247, 1
        %v3306 = vrot.slane %v3248, 1
        %v3307 = vsel %vm775, %v3305, %v3306
        %v3308 = vrot.slane %v3249, 1
        %v3309 = vrot.slane %v3250, 1
        %v3310 = vsel %vm775, %v3308, %v3309
        %v3311 = vrot.slane %v3251, 1
        %v3312 = vrot.slane %v3252, 1
        %v3313 = vsel %vm775, %v3311, %v3312
        %v3314 = vrot.slane %v3253, 1
        %v3315 = vrot.slane %v3254, 1
        %v3316 = vsel %vm775, %v3314, %v3315
        %v3317 = vrot.slane %v3255, 1
        %v3318 = vrot.slane %v3256, 1
        %v3319 = vsel %vm775, %v3317, %v3318
        %v3320 = vrot.slane %v3257, 1
        %v3321 = vrot.slane %v3258, 1
        %v3322 = vsel %vm775, %v3320, %v3321
        %v3323 = vrot.slane %v3259, 1
        %v3324 = vrot.slane %v3260, 1
        %v3325 = vsel %vm775, %v3323, %v3324
        %v3326 = vrot.slane %v3261, 1
        %v3327 = vrot.slane %v3262, 1
        %v3328 = vsel %vm775, %v3326, %v3327
        %v3329 = vrot.slane %v3263, 1
        %v3330 = vrot.slane %v3264, 1
        %v3331 = vsel %vm775, %v3329, %v3330
        %v3332 = vrot.slane %v3265, 1
        %v3333 = vrot.slane %v3266, 1
        %v3334 = vsel %vm775, %v3332, %v3333
        %v3335 = vrot.slane %v3267, 1
        %v3336 = vrot.slane %v3268, 1
        %v3337 = vsel %vm775, %v3335, %v3336
        %v3338 = vrot.slane %v3269, 1
        %v3339 = vrot.slane %v3270, 1
        %v3340 = vsel %vm775, %v3338, %v3339
        %v3369 = vadd.f32 %v3178, %v3301
        %v3370 = vadd.f32 %v3179, %v3300
        %v3371 = vadd.f32 %v3180, %v3304
        %v3372 = vadd.f32 %v3181, %v3303
        %v3373 = vadd.f32 %v3182, %v3307
        %v3374 = vadd.f32 %v3183, %v3306
        %v3375 = vadd.f32 %v3184, %v3310
        %v3376 = vadd.f32 %v3185, %v3309
        %v3377 = vadd.f32 %v3186, %v3313
        %v3378 = vadd.f32 %v3187, %v3312
        %v3379 = vadd.f32 %v3188, %v3316
        %v3380 = vadd.f32 %v3189, %v3315
        %v3381 = vadd.f32 %v3190, %v3319
        %v3382 = vadd.f32 %v3191, %v3318
        %v3383 = vadd.f32 %v3192, %v3322
        %v3384 = vadd.f32 %v3193, %v3321
        %v3385 = vadd.f32 %v3194, %v3325
        %v3386 = vadd.f32 %v3195, %v3324
        %v3387 = vadd.f32 %v3196, %v3328
        %v3388 = vadd.f32 %v3197, %v3327
        %v3389 = vadd.f32 %v3198, %v3331
        %v3390 = vadd.f32 %v3199, %v3330
        %v3391 = vadd.f32 %v3200, %v3334
        %v3392 = vadd.f32 %v3201, %v3333
        %v3393 = vadd.f32 %v3202, %v3337
        %v3394 = vadd.f32 %v3203, %v3336
        %v3395 = vadd.f32 %v3204, %v3340
        %v3396 = vadd.f32 %v3205, %v3339
        %v3397 = vld [vmem:[%s558 + $0x9] sm:$0x1]
        %v3398 = vlaneseq
        %v3399 = vshrl.u32 %v3398, 7
        %v3400 = vsub.s32 0, %v3399
        %v3401 = vrot.slane %v3397, %v3400
        %v3402 = vmul.f32 %v3208, %v3401
        %v3403 = vmul.f32 %v3209, %v3401
        %v3404 = vmul.f32 %v3210, %v3401
        %v3405 = vmul.f32 %v3211, %v3401
        %v3406 = vmul.f32 %v3212, %v3401
        %v3407 = vmul.f32 %v3213, %v3401
        %v3408 = vmul.f32 %v3214, %v3401
        %v3409 = vmul.f32 %v3215, %v3401
        %v3410 = vmul.f32 %v3216, %v3401
        %v3411 = vmul.f32 %v3217, %v3401
        %v3412 = vmul.f32 %v3218, %v3401
        %v3413 = vmul.f32 %v3219, %v3401
        %v3414 = vmul.f32 %v3220, %v3401
        %v3415 = vmul.f32 %v3221, %v3401
        %v3416 = vmul.f32 %v3222, %v3401
        %v3417 = vmul.f32 %v3223, %v3401
        %v3418 = vmul.f32 %v3224, %v3401
        %v3419 = vmul.f32 %v3225, %v3401
        %v3420 = vmul.f32 %v3226, %v3401
        %v3421 = vmul.f32 %v3227, %v3401
        %v3422 = vmul.f32 %v3228, %v3401
        %v3423 = vmul.f32 %v3229, %v3401
        %v3424 = vmul.f32 %v3230, %v3401
        %v3425 = vmul.f32 %v3231, %v3401
        %v3426 = vmul.f32 %v3232, %v3401
        %v3427 = vmul.f32 %v3233, %v3401
        %v3428 = vmul.f32 %v3234, %v3401
        %v3429 = vmul.f32 %v3235, %v3401
        %v3458 = vrot.slane %v3402, 1
        %v3459 = vrot.slane %v3403, 1
        %v3460 = vsel %vm775, %v3458, %v3459
        %v3461 = vrot.slane %v3404, 1
        %v3462 = vrot.slane %v3405, 1
        %v3463 = vsel %vm775, %v3461, %v3462
        %v3464 = vrot.slane %v3406, 1
        %v3465 = vrot.slane %v3407, 1
        %v3466 = vsel %vm775, %v3464, %v3465
        %v3467 = vrot.slane %v3408, 1
        %v3468 = vrot.slane %v3409, 1
        %v3469 = vsel %vm775, %v3467, %v3468
        %v3470 = vrot.slane %v3410, 1
        %v3471 = vrot.slane %v3411, 1
        %v3472 = vsel %vm775, %v3470, %v3471
        %v3473 = vrot.slane %v3412, 1
        %v3474 = vrot.slane %v3413, 1
        %v3475 = vsel %vm775, %v3473, %v3474
        %v3476 = vrot.slane %v3414, 1
        %v3477 = vrot.slane %v3415, 1
        %v3478 = vsel %vm775, %v3476, %v3477
        %v3479 = vrot.slane %v3416, 1
        %v3480 = vrot.slane %v3417, 1
        %v3481 = vsel %vm775, %v3479, %v3480
        %v3482 = vrot.slane %v3418, 1
        %v3483 = vrot.slane %v3419, 1
        %v3484 = vsel %vm775, %v3482, %v3483
        %v3485 = vrot.slane %v3420, 1
        %v3486 = vrot.slane %v3421, 1
        %v3487 = vsel %vm775, %v3485, %v3486
        %v3488 = vrot.slane %v3422, 1
        %v3489 = vrot.slane %v3423, 1
        %v3490 = vsel %vm775, %v3488, %v3489
        %v3491 = vrot.slane %v3424, 1
        %v3492 = vrot.slane %v3425, 1
        %v3493 = vsel %vm775, %v3491, %v3492
        %v3494 = vrot.slane %v3426, 1
        %v3495 = vrot.slane %v3427, 1
        %v3496 = vsel %vm775, %v3494, %v3495
        %v3497 = vrot.slane %v3428, 1
        %v3498 = vrot.slane %v3429, 1
        %v3499 = vsel %vm775, %v3497, %v3498
        %v3528 = vadd.f32 %v3369, %v3460
        %v3529 = vadd.f32 %v3370, %v3459
        %v3530 = vadd.f32 %v3371, %v3463
        %v3531 = vadd.f32 %v3372, %v3462
        %v3532 = vadd.f32 %v3373, %v3466
        %v3533 = vadd.f32 %v3374, %v3465
        %v3534 = vadd.f32 %v3375, %v3469
        %v3535 = vadd.f32 %v3376, %v3468
        %v3536 = vadd.f32 %v3377, %v3472
        %v3537 = vadd.f32 %v3378, %v3471
        %v3538 = vadd.f32 %v3379, %v3475
        %v3539 = vadd.f32 %v3380, %v3474
        %v3540 = vadd.f32 %v3381, %v3478
        %v3541 = vadd.f32 %v3382, %v3477
        %v3542 = vadd.f32 %v3383, %v3481
        %v3543 = vadd.f32 %v3384, %v3480
        %v3544 = vadd.f32 %v3385, %v3484
        %v3545 = vadd.f32 %v3386, %v3483
        %v3546 = vadd.f32 %v3387, %v3487
        %v3547 = vadd.f32 %v3388, %v3486
        %v3548 = vadd.f32 %v3389, %v3490
        %v3549 = vadd.f32 %v3390, %v3489
        %v3550 = vadd.f32 %v3391, %v3493
        %v3551 = vadd.f32 %v3392, %v3492
        %v3552 = vadd.f32 %v3393, %v3496
        %v3553 = vadd.f32 %v3394, %v3495
        %v3554 = vadd.f32 %v3395, %v3499
        %v3555 = vadd.f32 %v3396, %v3498
        %v3556 = vld [vmem:[%s620 + $0x9] sm:$0x1]
        %v3557 = vlaneseq
        %v3558 = vshrl.u32 %v3557, 7
        %v3559 = vsub.s32 0, %v3558
        %v3560 = vrot.slane %v3556, %v3559
        %v3561 = vmul.f32 %v3210, %v3560
        %v3562 = vmul.f32 %v3211, %v3560
        %v3563 = vmul.f32 %v3212, %v3560
        %v3564 = vmul.f32 %v3213, %v3560
        %v3565 = vmul.f32 %v3214, %v3560
        %v3566 = vmul.f32 %v3215, %v3560
        %v3567 = vmul.f32 %v3216, %v3560
        %v3568 = vmul.f32 %v3217, %v3560
        %v3569 = vmul.f32 %v3218, %v3560
        %v3570 = vmul.f32 %v3219, %v3560
        %v3571 = vmul.f32 %v3220, %v3560
        %v3572 = vmul.f32 %v3221, %v3560
        %v3573 = vmul.f32 %v3222, %v3560
        %v3574 = vmul.f32 %v3223, %v3560
        %v3575 = vmul.f32 %v3224, %v3560
        %v3576 = vmul.f32 %v3225, %v3560
        %v3577 = vmul.f32 %v3226, %v3560
        %v3578 = vmul.f32 %v3227, %v3560
        %v3579 = vmul.f32 %v3228, %v3560
        %v3580 = vmul.f32 %v3229, %v3560
        %v3581 = vmul.f32 %v3230, %v3560
        %v3582 = vmul.f32 %v3231, %v3560
        %v3583 = vmul.f32 %v3232, %v3560
        %v3584 = vmul.f32 %v3233, %v3560
        %v3585 = vmul.f32 %v3234, %v3560
        %v3586 = vmul.f32 %v3235, %v3560
        %v3587 = vmul.f32 %v3236, %v3560
        %v3588 = vmul.f32 %v3237, %v3560
        %v3617 = vrot.slane %v3561, 1
        %v3618 = vrot.slane %v3562, 1
        %v3619 = vsel %vm775, %v3617, %v3618
        %v3620 = vrot.slane %v3563, 1
        %v3621 = vrot.slane %v3564, 1
        %v3622 = vsel %vm775, %v3620, %v3621
        %v3623 = vrot.slane %v3565, 1
        %v3624 = vrot.slane %v3566, 1
        %v3625 = vsel %vm775, %v3623, %v3624
        %v3626 = vrot.slane %v3567, 1
        %v3627 = vrot.slane %v3568, 1
        %v3628 = vsel %vm775, %v3626, %v3627
        %v3629 = vrot.slane %v3569, 1
        %v3630 = vrot.slane %v3570, 1
        %v3631 = vsel %vm775, %v3629, %v3630
        %v3632 = vrot.slane %v3571, 1
        %v3633 = vrot.slane %v3572, 1
        %v3634 = vsel %vm775, %v3632, %v3633
        %v3635 = vrot.slane %v3573, 1
        %v3636 = vrot.slane %v3574, 1
        %v3637 = vsel %vm775, %v3635, %v3636
        %v3638 = vrot.slane %v3575, 1
        %v3639 = vrot.slane %v3576, 1
        %v3640 = vsel %vm775, %v3638, %v3639
        %v3641 = vrot.slane %v3577, 1
        %v3642 = vrot.slane %v3578, 1
        %v3643 = vsel %vm775, %v3641, %v3642
        %v3644 = vrot.slane %v3579, 1
        %v3645 = vrot.slane %v3580, 1
        %v3646 = vsel %vm775, %v3644, %v3645
        %v3647 = vrot.slane %v3581, 1
        %v3648 = vrot.slane %v3582, 1
        %v3649 = vsel %vm775, %v3647, %v3648
        %v3650 = vrot.slane %v3583, 1
        %v3651 = vrot.slane %v3584, 1
        %v3652 = vsel %vm775, %v3650, %v3651
        %v3653 = vrot.slane %v3585, 1
        %v3654 = vrot.slane %v3586, 1
        %v3655 = vsel %vm775, %v3653, %v3654
        %v3656 = vrot.slane %v3587, 1
        %v3657 = vrot.slane %v3588, 1
        %v3658 = vsel %vm775, %v3656, %v3657
        %v3687 = vadd.f32 %v3528, %v3619
        %v3688 = vadd.f32 %v3529, %v3618
        %v3689 = vadd.f32 %v3530, %v3622
        %v3690 = vadd.f32 %v3531, %v3621
        %v3691 = vadd.f32 %v3532, %v3625
        %v3692 = vadd.f32 %v3533, %v3624
        %v3693 = vadd.f32 %v3534, %v3628
        %v3694 = vadd.f32 %v3535, %v3627
        %v3695 = vadd.f32 %v3536, %v3631
        %v3696 = vadd.f32 %v3537, %v3630
        %v3697 = vadd.f32 %v3538, %v3634
        %v3698 = vadd.f32 %v3539, %v3633
        %v3699 = vadd.f32 %v3540, %v3637
        %v3700 = vadd.f32 %v3541, %v3636
        %v3701 = vadd.f32 %v3542, %v3640
        %v3702 = vadd.f32 %v3543, %v3639
        %v3703 = vadd.f32 %v3544, %v3643
        %v3704 = vadd.f32 %v3545, %v3642
        %v3705 = vadd.f32 %v3546, %v3646
        %v3706 = vadd.f32 %v3547, %v3645
        %v3707 = vadd.f32 %v3548, %v3649
        %v3708 = vadd.f32 %v3549, %v3648
        %v3709 = vadd.f32 %v3550, %v3652
        %v3710 = vadd.f32 %v3551, %v3651
        %v3711 = vadd.f32 %v3552, %v3655
        %v3712 = vadd.f32 %v3553, %v3654
        %v3713 = vadd.f32 %v3554, %v3658
        %v3714 = vadd.f32 %v3555, %v3657
        %v3715 = vld [vmem:[%s433 + $0x10] sm:$0xfc]
        %v3716 = vld [vmem:[%s433 + $0x30] sm:$0xff]
        %v3717 = vld [vmem:[%s433 + $0x50] sm:$0xfc]
        %v3718 = vld [vmem:[%s433 + $0x70] sm:$0xff]
        %v3719 = vld [vmem:[%s433 + $0x90] sm:$0xfc]
        %v3720 = vld [vmem:[%s433 + $0xb0] sm:$0xff]
        %v3721 = vld [vmem:[%s433 + $0xd0] sm:$0xfc]
        %v3722 = vld [vmem:[%s433 + $0xf0] sm:$0xff]
        %v3723 = vld [vmem:[%s433 + $0x110] sm:$0xfc]
        %v3724 = vld [vmem:[%s433 + $0x130] sm:$0xff]
        %v3725 = vld [vmem:[%s433 + $0x150] sm:$0xfc]
        %v3726 = vld [vmem:[%s433 + $0x170] sm:$0xff]
        %v3727 = vld [vmem:[%s433 + $0x190] sm:$0xfc]
        %v3728 = vld [vmem:[%s433 + $0x1b0] sm:$0xff]
        %v3729 = vld [vmem:[%s433 + $0x1d0] sm:$0xfc]
        %v3730 = vld [vmem:[%s433 + $0x1f0] sm:$0xff]
        %v3731 = vld [vmem:[%s433 + $0x210] sm:$0xfc]
        %v3732 = vld [vmem:[%s433 + $0x230] sm:$0xff]
        %v3733 = vld [vmem:[%s433 + $0x250] sm:$0xfc]
        %v3734 = vld [vmem:[%s433 + $0x270] sm:$0xff]
        %v3735 = vld [vmem:[%s433 + $0x290] sm:$0xfc]
        %v3736 = vld [vmem:[%s433 + $0x2b0] sm:$0xff]
        %v3737 = vld [vmem:[%s433 + $0x2d0] sm:$0xfc]
        %v3738 = vld [vmem:[%s433 + $0x2f0] sm:$0xff]
        %v3739 = vld [vmem:[%s433 + $0x310] sm:$0xfc]
        %v3740 = vld [vmem:[%s433 + $0x330] sm:$0xff]
        %v3741 = vld [vmem:[%s433 + $0x350] sm:$0xfc]
        %v3742 = vld [vmem:[%s433 + $0x370] sm:$0xff]
        %v3743 = vld [vmem:[%s433 + $0x390] sm:$0xfc]
        %v3744 = vld [vmem:[%s433 + $0x3b0] sm:$0xff]
        %v3745 = vld [vmem:[%s433 + $0x3d0] sm:$0xfc]
        %v3746 = vld [vmem:[%s433 + $0x3f0] sm:$0xff]
        %v3747 = vld [vmem:[%s440 + $0xa] sm:$0x1]
        %v3748 = vlaneseq
        %v3749 = vshrl.u32 %v3748, 7
        %v3750 = vsub.s32 0, %v3749
        %v3751 = vrot.slane %v3747, %v3750
        %v3752 = vmul.f32 %v3715, %v3751
        %v3753 = vmul.f32 %v3716, %v3751
        %v3754 = vmul.f32 %v3717, %v3751
        %v3755 = vmul.f32 %v3718, %v3751
        %v3756 = vmul.f32 %v3719, %v3751
        %v3757 = vmul.f32 %v3720, %v3751
        %v3758 = vmul.f32 %v3721, %v3751
        %v3759 = vmul.f32 %v3722, %v3751
        %v3760 = vmul.f32 %v3723, %v3751
        %v3761 = vmul.f32 %v3724, %v3751
        %v3762 = vmul.f32 %v3725, %v3751
        %v3763 = vmul.f32 %v3726, %v3751
        %v3764 = vmul.f32 %v3727, %v3751
        %v3765 = vmul.f32 %v3728, %v3751
        %v3766 = vmul.f32 %v3729, %v3751
        %v3767 = vmul.f32 %v3730, %v3751
        %v3768 = vmul.f32 %v3731, %v3751
        %v3769 = vmul.f32 %v3732, %v3751
        %v3770 = vmul.f32 %v3733, %v3751
        %v3771 = vmul.f32 %v3734, %v3751
        %v3772 = vmul.f32 %v3735, %v3751
        %v3773 = vmul.f32 %v3736, %v3751
        %v3774 = vmul.f32 %v3737, %v3751
        %v3775 = vmul.f32 %v3738, %v3751
        %v3776 = vmul.f32 %v3739, %v3751
        %v3777 = vmul.f32 %v3740, %v3751
        %v3778 = vmul.f32 %v3741, %v3751
        %v3779 = vmul.f32 %v3742, %v3751
        %v3808 = vrot.slane %v3752, 2
        %v3809 = vrot.slane %v3753, 2
        %v3810 = vsel %vm1285, %v3808, %v3809
        %v3811 = vrot.slane %v3754, 2
        %v3812 = vrot.slane %v3755, 2
        %v3813 = vsel %vm1285, %v3811, %v3812
        %v3814 = vrot.slane %v3756, 2
        %v3815 = vrot.slane %v3757, 2
        %v3816 = vsel %vm1285, %v3814, %v3815
        %v3817 = vrot.slane %v3758, 2
        %v3818 = vrot.slane %v3759, 2
        %v3819 = vsel %vm1285, %v3817, %v3818
        %v3820 = vrot.slane %v3760, 2
        %v3821 = vrot.slane %v3761, 2
        %v3822 = vsel %vm1285, %v3820, %v3821
        %v3823 = vrot.slane %v3762, 2
        %v3824 = vrot.slane %v3763, 2
        %v3825 = vsel %vm1285, %v3823, %v3824
        %v3826 = vrot.slane %v3764, 2
        %v3827 = vrot.slane %v3765, 2
        %v3828 = vsel %vm1285, %v3826, %v3827
        %v3829 = vrot.slane %v3766, 2
        %v3830 = vrot.slane %v3767, 2
        %v3831 = vsel %vm1285, %v3829, %v3830
        %v3832 = vrot.slane %v3768, 2
        %v3833 = vrot.slane %v3769, 2
        %v3834 = vsel %vm1285, %v3832, %v3833
        %v3835 = vrot.slane %v3770, 2
        %v3836 = vrot.slane %v3771, 2
        %v3837 = vsel %vm1285, %v3835, %v3836
        %v3838 = vrot.slane %v3772, 2
        %v3839 = vrot.slane %v3773, 2
        %v3840 = vsel %vm1285, %v3838, %v3839
        %v3841 = vrot.slane %v3774, 2
        %v3842 = vrot.slane %v3775, 2
        %v3843 = vsel %vm1285, %v3841, %v3842
        %v3844 = vrot.slane %v3776, 2
        %v3845 = vrot.slane %v3777, 2
        %v3846 = vsel %vm1285, %v3844, %v3845
        %v3847 = vrot.slane %v3778, 2
        %v3848 = vrot.slane %v3779, 2
        %v3849 = vsel %vm1285, %v3847, %v3848
        %v3878 = vadd.f32 %v3687, %v3810
        %v3879 = vadd.f32 %v3688, %v3809
        %v3880 = vadd.f32 %v3689, %v3813
        %v3881 = vadd.f32 %v3690, %v3812
        %v3882 = vadd.f32 %v3691, %v3816
        %v3883 = vadd.f32 %v3692, %v3815
        %v3884 = vadd.f32 %v3693, %v3819
        %v3885 = vadd.f32 %v3694, %v3818
        %v3886 = vadd.f32 %v3695, %v3822
        %v3887 = vadd.f32 %v3696, %v3821
        %v3888 = vadd.f32 %v3697, %v3825
        %v3889 = vadd.f32 %v3698, %v3824
        %v3890 = vadd.f32 %v3699, %v3828
        %v3891 = vadd.f32 %v3700, %v3827
        %v3892 = vadd.f32 %v3701, %v3831
        %v3893 = vadd.f32 %v3702, %v3830
        %v3894 = vadd.f32 %v3703, %v3834
        %v3895 = vadd.f32 %v3704, %v3833
        %v3896 = vadd.f32 %v3705, %v3837
        %v3897 = vadd.f32 %v3706, %v3836
        %v3898 = vadd.f32 %v3707, %v3840
        %v3899 = vadd.f32 %v3708, %v3839
        %v3900 = vadd.f32 %v3709, %v3843
        %v3901 = vadd.f32 %v3710, %v3842
        %v3902 = vadd.f32 %v3711, %v3846
        %v3903 = vadd.f32 %v3712, %v3845
        %v3904 = vadd.f32 %v3713, %v3849
        %v3905 = vadd.f32 %v3714, %v3848
        %v3906 = vld [vmem:[%s558 + $0xa] sm:$0x1]
        %v3907 = vlaneseq
        %v3908 = vshrl.u32 %v3907, 7
        %v3909 = vsub.s32 0, %v3908
        %v3910 = vrot.slane %v3906, %v3909
        %v3911 = vmul.f32 %v3717, %v3910
        %v3912 = vmul.f32 %v3718, %v3910
        %v3913 = vmul.f32 %v3719, %v3910
        %v3914 = vmul.f32 %v3720, %v3910
        %v3915 = vmul.f32 %v3721, %v3910
        %v3916 = vmul.f32 %v3722, %v3910
        %v3917 = vmul.f32 %v3723, %v3910
        %v3918 = vmul.f32 %v3724, %v3910
        %v3919 = vmul.f32 %v3725, %v3910
        %v3920 = vmul.f32 %v3726, %v3910
        %v3921 = vmul.f32 %v3727, %v3910
        %v3922 = vmul.f32 %v3728, %v3910
        %v3923 = vmul.f32 %v3729, %v3910
        %v3924 = vmul.f32 %v3730, %v3910
        %v3925 = vmul.f32 %v3731, %v3910
        %v3926 = vmul.f32 %v3732, %v3910
        %v3927 = vmul.f32 %v3733, %v3910
        %v3928 = vmul.f32 %v3734, %v3910
        %v3929 = vmul.f32 %v3735, %v3910
        %v3930 = vmul.f32 %v3736, %v3910
        %v3931 = vmul.f32 %v3737, %v3910
        %v3932 = vmul.f32 %v3738, %v3910
        %v3933 = vmul.f32 %v3739, %v3910
        %v3934 = vmul.f32 %v3740, %v3910
        %v3935 = vmul.f32 %v3741, %v3910
        %v3936 = vmul.f32 %v3742, %v3910
        %v3937 = vmul.f32 %v3743, %v3910
        %v3938 = vmul.f32 %v3744, %v3910
        %v3967 = vrot.slane %v3911, 2
        %v3968 = vrot.slane %v3912, 2
        %v3969 = vsel %vm1285, %v3967, %v3968
        %v3970 = vrot.slane %v3913, 2
        %v3971 = vrot.slane %v3914, 2
        %v3972 = vsel %vm1285, %v3970, %v3971
        %v3973 = vrot.slane %v3915, 2
        %v3974 = vrot.slane %v3916, 2
        %v3975 = vsel %vm1285, %v3973, %v3974
        %v3976 = vrot.slane %v3917, 2
        %v3977 = vrot.slane %v3918, 2
        %v3978 = vsel %vm1285, %v3976, %v3977
        %v3979 = vrot.slane %v3919, 2
        %v3980 = vrot.slane %v3920, 2
        %v3981 = vsel %vm1285, %v3979, %v3980
        %v3982 = vrot.slane %v3921, 2
        %v3983 = vrot.slane %v3922, 2
        %v3984 = vsel %vm1285, %v3982, %v3983
        %v3985 = vrot.slane %v3923, 2
        %v3986 = vrot.slane %v3924, 2
        %v3987 = vsel %vm1285, %v3985, %v3986
        %v3988 = vrot.slane %v3925, 2
        %v3989 = vrot.slane %v3926, 2
        %v3990 = vsel %vm1285, %v3988, %v3989
        %v3991 = vrot.slane %v3927, 2
        %v3992 = vrot.slane %v3928, 2
        %v3993 = vsel %vm1285, %v3991, %v3992
        %v3994 = vrot.slane %v3929, 2
        %v3995 = vrot.slane %v3930, 2
        %v3996 = vsel %vm1285, %v3994, %v3995
        %v3997 = vrot.slane %v3931, 2
        %v3998 = vrot.slane %v3932, 2
        %v3999 = vsel %vm1285, %v3997, %v3998
        %v4000 = vrot.slane %v3933, 2
        %v4001 = vrot.slane %v3934, 2
        %v4002 = vsel %vm1285, %v4000, %v4001
        %v4003 = vrot.slane %v3935, 2
        %v4004 = vrot.slane %v3936, 2
        %v4005 = vsel %vm1285, %v4003, %v4004
        %v4006 = vrot.slane %v3937, 2
        %v4007 = vrot.slane %v3938, 2
        %v4008 = vsel %vm1285, %v4006, %v4007
        %v4037 = vadd.f32 %v3878, %v3969
        %v4038 = vadd.f32 %v3879, %v3968
        %v4039 = vadd.f32 %v3880, %v3972
        %v4040 = vadd.f32 %v3881, %v3971
        %v4041 = vadd.f32 %v3882, %v3975
        %v4042 = vadd.f32 %v3883, %v3974
        %v4043 = vadd.f32 %v3884, %v3978
        %v4044 = vadd.f32 %v3885, %v3977
        %v4045 = vadd.f32 %v3886, %v3981
        %v4046 = vadd.f32 %v3887, %v3980
        %v4047 = vadd.f32 %v3888, %v3984
        %v4048 = vadd.f32 %v3889, %v3983
        %v4049 = vadd.f32 %v3890, %v3987
        %v4050 = vadd.f32 %v3891, %v3986
        %v4051 = vadd.f32 %v3892, %v3990
        %v4052 = vadd.f32 %v3893, %v3989
        %v4053 = vadd.f32 %v3894, %v3993
        %v4054 = vadd.f32 %v3895, %v3992
        %v4055 = vadd.f32 %v3896, %v3996
        %v4056 = vadd.f32 %v3897, %v3995
        %v4057 = vadd.f32 %v3898, %v3999
        %v4058 = vadd.f32 %v3899, %v3998
        %v4059 = vadd.f32 %v3900, %v4002
        %v4060 = vadd.f32 %v3901, %v4001
        %v4061 = vadd.f32 %v3902, %v4005
        %v4062 = vadd.f32 %v3903, %v4004
        %v4063 = vadd.f32 %v3904, %v4008
        %v4064 = vadd.f32 %v3905, %v4007
        %v4065 = vld [vmem:[%s620 + $0xa] sm:$0x1]
        %v4066 = vlaneseq
        %v4067 = vshrl.u32 %v4066, 7
        %v4068 = vsub.s32 0, %v4067
        %v4069 = vrot.slane %v4065, %v4068
        %v4070 = vmul.f32 %v3719, %v4069
        %v4071 = vmul.f32 %v3720, %v4069
        %v4072 = vmul.f32 %v3721, %v4069
        %v4073 = vmul.f32 %v3722, %v4069
        %v4074 = vmul.f32 %v3723, %v4069
        %v4075 = vmul.f32 %v3724, %v4069
        %v4076 = vmul.f32 %v3725, %v4069
        %v4077 = vmul.f32 %v3726, %v4069
        %v4078 = vmul.f32 %v3727, %v4069
        %v4079 = vmul.f32 %v3728, %v4069
        %v4080 = vmul.f32 %v3729, %v4069
        %v4081 = vmul.f32 %v3730, %v4069
        %v4082 = vmul.f32 %v3731, %v4069
        %v4083 = vmul.f32 %v3732, %v4069
        %v4084 = vmul.f32 %v3733, %v4069
        %v4085 = vmul.f32 %v3734, %v4069
        %v4086 = vmul.f32 %v3735, %v4069
        %v4087 = vmul.f32 %v3736, %v4069
        %v4088 = vmul.f32 %v3737, %v4069
        %v4089 = vmul.f32 %v3738, %v4069
        %v4090 = vmul.f32 %v3739, %v4069
        %v4091 = vmul.f32 %v3740, %v4069
        %v4092 = vmul.f32 %v3741, %v4069
        %v4093 = vmul.f32 %v3742, %v4069
        %v4094 = vmul.f32 %v3743, %v4069
        %v4095 = vmul.f32 %v3744, %v4069
        %v4096 = vmul.f32 %v3745, %v4069
        %v4097 = vmul.f32 %v3746, %v4069
        %v4126 = vrot.slane %v4070, 2
        %v4127 = vrot.slane %v4071, 2
        %v4128 = vsel %vm1285, %v4126, %v4127
        %v4129 = vrot.slane %v4072, 2
        %v4130 = vrot.slane %v4073, 2
        %v4131 = vsel %vm1285, %v4129, %v4130
        %v4132 = vrot.slane %v4074, 2
        %v4133 = vrot.slane %v4075, 2
        %v4134 = vsel %vm1285, %v4132, %v4133
        %v4135 = vrot.slane %v4076, 2
        %v4136 = vrot.slane %v4077, 2
        %v4137 = vsel %vm1285, %v4135, %v4136
        %v4138 = vrot.slane %v4078, 2
        %v4139 = vrot.slane %v4079, 2
        %v4140 = vsel %vm1285, %v4138, %v4139
        %v4141 = vrot.slane %v4080, 2
        %v4142 = vrot.slane %v4081, 2
        %v4143 = vsel %vm1285, %v4141, %v4142
        %v4144 = vrot.slane %v4082, 2
        %v4145 = vrot.slane %v4083, 2
        %v4146 = vsel %vm1285, %v4144, %v4145
        %v4147 = vrot.slane %v4084, 2
        %v4148 = vrot.slane %v4085, 2
        %v4149 = vsel %vm1285, %v4147, %v4148
        %v4150 = vrot.slane %v4086, 2
        %v4151 = vrot.slane %v4087, 2
        %v4152 = vsel %vm1285, %v4150, %v4151
        %v4153 = vrot.slane %v4088, 2
        %v4154 = vrot.slane %v4089, 2
        %v4155 = vsel %vm1285, %v4153, %v4154
        %v4156 = vrot.slane %v4090, 2
        %v4157 = vrot.slane %v4091, 2
        %v4158 = vsel %vm1285, %v4156, %v4157
        %v4159 = vrot.slane %v4092, 2
        %v4160 = vrot.slane %v4093, 2
        %v4161 = vsel %vm1285, %v4159, %v4160
        %v4162 = vrot.slane %v4094, 2
        %v4163 = vrot.slane %v4095, 2
        %v4164 = vsel %vm1285, %v4162, %v4163
        %v4165 = vrot.slane %v4096, 2
        %v4166 = vrot.slane %v4097, 2
        %v4167 = vsel %vm1285, %v4165, %v4166
        %v4196 = vadd.f32 %v4037, %v4128
        %v4197 = vadd.f32 %v4038, %v4127
        %v4198 = vadd.f32 %v4039, %v4131
        %v4199 = vadd.f32 %v4040, %v4130
        %v4200 = vadd.f32 %v4041, %v4134
        %v4201 = vadd.f32 %v4042, %v4133
        %v4202 = vadd.f32 %v4043, %v4137
        %v4203 = vadd.f32 %v4044, %v4136
        %v4204 = vadd.f32 %v4045, %v4140
        %v4205 = vadd.f32 %v4046, %v4139
        %v4206 = vadd.f32 %v4047, %v4143
        %v4207 = vadd.f32 %v4048, %v4142
        %v4208 = vadd.f32 %v4049, %v4146
        %v4209 = vadd.f32 %v4050, %v4145
        %v4210 = vadd.f32 %v4051, %v4149
        %v4211 = vadd.f32 %v4052, %v4148
        %v4212 = vadd.f32 %v4053, %v4152
        %v4213 = vadd.f32 %v4054, %v4151
        %v4214 = vadd.f32 %v4055, %v4155
        %v4215 = vadd.f32 %v4056, %v4154
        %v4216 = vadd.f32 %v4057, %v4158
        %v4217 = vadd.f32 %v4058, %v4157
        %v4218 = vadd.f32 %v4059, %v4161
        %v4219 = vadd.f32 %v4060, %v4160
        %v4220 = vadd.f32 %v4061, %v4164
        %v4221 = vadd.f32 %v4062, %v4163
        %v4222 = vadd.f32 %v4063, %v4167
        %v4223 = vadd.f32 %v4064, %v4166
        %4224 = vst [vmem:[%s461 + $0x10] sm:$0xff] %v4196
        %4225 = vst [vmem:[%s461 + $0x30] sm:$0x3f] %v4197
        %4226 = vst [vmem:[%s461 + $0x50] sm:$0xff] %v4198
        %4227 = vst [vmem:[%s461 + $0x70] sm:$0x3f] %v4199
        %4228 = vst [vmem:[%s461 + $0x90] sm:$0xff] %v4200
        %4229 = vst [vmem:[%s461 + $0xb0] sm:$0x3f] %v4201
        %4230 = vst [vmem:[%s461 + $0xd0] sm:$0xff] %v4202
        %4231 = vst [vmem:[%s461 + $0xf0] sm:$0x3f] %v4203
        %4232 = vst [vmem:[%s461 + $0x110] sm:$0xff] %v4204
        %4233 = vst [vmem:[%s461 + $0x130] sm:$0x3f] %v4205
        %4234 = vst [vmem:[%s461 + $0x150] sm:$0xff] %v4206
        %4235 = vst [vmem:[%s461 + $0x170] sm:$0x3f] %v4207
        %4236 = vst [vmem:[%s461 + $0x190] sm:$0xff] %v4208
        %4237 = vst [vmem:[%s461 + $0x1b0] sm:$0x3f] %v4209
        %4238 = vst [vmem:[%s461 + $0x1d0] sm:$0xff] %v4210
        %4239 = vst [vmem:[%s461 + $0x1f0] sm:$0x3f] %v4211
        %4240 = vst [vmem:[%s461 + $0x210] sm:$0xff] %v4212
        %4241 = vst [vmem:[%s461 + $0x230] sm:$0x3f] %v4213
        %4242 = vst [vmem:[%s461 + $0x250] sm:$0xff] %v4214
        %4243 = vst [vmem:[%s461 + $0x270] sm:$0x3f] %v4215
        %4244 = vst [vmem:[%s461 + $0x290] sm:$0xff] %v4216
        %4245 = vst [vmem:[%s461 + $0x2b0] sm:$0x3f] %v4217
        %4246 = vst [vmem:[%s461 + $0x2d0] sm:$0xff] %v4218
        %4247 = vst [vmem:[%s461 + $0x2f0] sm:$0x3f] %v4219
        %4248 = vst [vmem:[%s461 + $0x310] sm:$0xff] %v4220
        %4249 = vst [vmem:[%s461 + $0x330] sm:$0x3f] %v4221
        %4250 = vst [vmem:[%s461 + $0x350] sm:$0xff] %v4222
        %4251 = vst [vmem:[%s461 + $0x370] sm:$0x3f] %v4223
        %v4252 = vld [vmem:[%s433 + $0x18] sm:$0xff]
        %v4253 = vld [vmem:[%s433 + $0x38] sm:$0x3f]
        %v4254 = vld [vmem:[%s433 + $0x58] sm:$0xff]
        %v4255 = vld [vmem:[%s433 + $0x78] sm:$0x3f]
        %v4256 = vld [vmem:[%s433 + $0x98] sm:$0xff]
        %v4257 = vld [vmem:[%s433 + $0xb8] sm:$0x3f]
        %v4258 = vld [vmem:[%s433 + $0xd8] sm:$0xff]
        %v4259 = vld [vmem:[%s433 + $0xf8] sm:$0x3f]
        %v4260 = vld [vmem:[%s433 + $0x118] sm:$0xff]
        %v4261 = vld [vmem:[%s433 + $0x138] sm:$0x3f]
        %v4262 = vld [vmem:[%s433 + $0x158] sm:$0xff]
        %v4263 = vld [vmem:[%s433 + $0x178] sm:$0x3f]
        %v4264 = vld [vmem:[%s433 + $0x198] sm:$0xff]
        %v4265 = vld [vmem:[%s433 + $0x1b8] sm:$0x3f]
        %v4266 = vld [vmem:[%s433 + $0x1d8] sm:$0xff]
        %v4267 = vld [vmem:[%s433 + $0x1f8] sm:$0x3f]
        %v4268 = vld [vmem:[%s433 + $0x218] sm:$0xff]
        %v4269 = vld [vmem:[%s433 + $0x238] sm:$0x3f]
        %v4270 = vld [vmem:[%s433 + $0x258] sm:$0xff]
        %v4271 = vld [vmem:[%s433 + $0x278] sm:$0x3f]
        %v4272 = vld [vmem:[%s433 + $0x298] sm:$0xff]
        %v4273 = vld [vmem:[%s433 + $0x2b8] sm:$0x3f]
        %v4274 = vld [vmem:[%s433 + $0x2d8] sm:$0xff]
        %v4275 = vld [vmem:[%s433 + $0x2f8] sm:$0x3f]
        %v4276 = vld [vmem:[%s433 + $0x318] sm:$0xff]
        %v4277 = vld [vmem:[%s433 + $0x338] sm:$0x3f]
        %v4278 = vld [vmem:[%s433 + $0x358] sm:$0xff]
        %v4279 = vld [vmem:[%s433 + $0x378] sm:$0x3f]
        %v4280 = vld [vmem:[%s433 + $0x398] sm:$0xff]
        %v4281 = vld [vmem:[%s433 + $0x3b8] sm:$0x3f]
        %v4282 = vld [vmem:[%s433 + $0x3d8] sm:$0xff]
        %v4283 = vld [vmem:[%s433 + $0x3f8] sm:$0x3f]
        %v4284 = vld [vmem:[%s440 + $0xc] sm:$0x1]
        %v4285 = vlaneseq
        %v4286 = vshrl.u32 %v4285, 7
        %v4287 = vsub.s32 0, %v4286
        %v4288 = vrot.slane %v4284, %v4287
        %v4289 = vmul.f32 %v4252, %v4288
        %v4290 = vmul.f32 %v4253, %v4288
        %v4291 = vmul.f32 %v4254, %v4288
        %v4292 = vmul.f32 %v4255, %v4288
        %v4293 = vmul.f32 %v4256, %v4288
        %v4294 = vmul.f32 %v4257, %v4288
        %v4295 = vmul.f32 %v4258, %v4288
        %v4296 = vmul.f32 %v4259, %v4288
        %v4297 = vmul.f32 %v4260, %v4288
        %v4298 = vmul.f32 %v4261, %v4288
        %v4299 = vmul.f32 %v4262, %v4288
        %v4300 = vmul.f32 %v4263, %v4288
        %v4301 = vmul.f32 %v4264, %v4288
        %v4302 = vmul.f32 %v4265, %v4288
        %v4303 = vmul.f32 %v4266, %v4288
        %v4304 = vmul.f32 %v4267, %v4288
        %v4305 = vmul.f32 %v4268, %v4288
        %v4306 = vmul.f32 %v4269, %v4288
        %v4307 = vmul.f32 %v4270, %v4288
        %v4308 = vmul.f32 %v4271, %v4288
        %v4309 = vmul.f32 %v4272, %v4288
        %v4310 = vmul.f32 %v4273, %v4288
        %v4311 = vmul.f32 %v4274, %v4288
        %v4312 = vmul.f32 %v4275, %v4288
        %v4313 = vmul.f32 %v4276, %v4288
        %v4314 = vmul.f32 %v4277, %v4288
        %v4315 = vmul.f32 %v4278, %v4288
        %v4316 = vmul.f32 %v4279, %v4288
        %v4317 = vadd.f32 %v4289, 0.0
        %v4318 = vadd.f32 %v4290, 0.0
        %v4319 = vadd.f32 %v4291, 0.0
        %v4320 = vadd.f32 %v4292, 0.0
        %v4321 = vadd.f32 %v4293, 0.0
        %v4322 = vadd.f32 %v4294, 0.0
        %v4323 = vadd.f32 %v4295, 0.0
        %v4324 = vadd.f32 %v4296, 0.0
        %v4325 = vadd.f32 %v4297, 0.0
        %v4326 = vadd.f32 %v4298, 0.0
        %v4327 = vadd.f32 %v4299, 0.0
        %v4328 = vadd.f32 %v4300, 0.0
        %v4329 = vadd.f32 %v4301, 0.0
        %v4330 = vadd.f32 %v4302, 0.0
        %v4331 = vadd.f32 %v4303, 0.0
        %v4332 = vadd.f32 %v4304, 0.0
        %v4333 = vadd.f32 %v4305, 0.0
        %v4334 = vadd.f32 %v4306, 0.0
        %v4335 = vadd.f32 %v4307, 0.0
        %v4336 = vadd.f32 %v4308, 0.0
        %v4337 = vadd.f32 %v4309, 0.0
        %v4338 = vadd.f32 %v4310, 0.0
        %v4339 = vadd.f32 %v4311, 0.0
        %v4340 = vadd.f32 %v4312, 0.0
        %v4341 = vadd.f32 %v4313, 0.0
        %v4342 = vadd.f32 %v4314, 0.0
        %v4343 = vadd.f32 %v4315, 0.0
        %v4344 = vadd.f32 %v4316, 0.0
        %v4345 = vld [vmem:[%s558 + $0xc] sm:$0x1]
        %v4346 = vlaneseq
        %v4347 = vshrl.u32 %v4346, 7
        %v4348 = vsub.s32 0, %v4347
        %v4349 = vrot.slane %v4345, %v4348
        %v4350 = vmul.f32 %v4254, %v4349
        %v4351 = vmul.f32 %v4255, %v4349
        %v4352 = vmul.f32 %v4256, %v4349
        %v4353 = vmul.f32 %v4257, %v4349
        %v4354 = vmul.f32 %v4258, %v4349
        %v4355 = vmul.f32 %v4259, %v4349
        %v4356 = vmul.f32 %v4260, %v4349
        %v4357 = vmul.f32 %v4261, %v4349
        %v4358 = vmul.f32 %v4262, %v4349
        %v4359 = vmul.f32 %v4263, %v4349
        %v4360 = vmul.f32 %v4264, %v4349
        %v4361 = vmul.f32 %v4265, %v4349
        %v4362 = vmul.f32 %v4266, %v4349
        %v4363 = vmul.f32 %v4267, %v4349
        %v4364 = vmul.f32 %v4268, %v4349
        %v4365 = vmul.f32 %v4269, %v4349
        %v4366 = vmul.f32 %v4270, %v4349
        %v4367 = vmul.f32 %v4271, %v4349
        %v4368 = vmul.f32 %v4272, %v4349
        %v4369 = vmul.f32 %v4273, %v4349
        %v4370 = vmul.f32 %v4274, %v4349
        %v4371 = vmul.f32 %v4275, %v4349
        %v4372 = vmul.f32 %v4276, %v4349
        %v4373 = vmul.f32 %v4277, %v4349
        %v4374 = vmul.f32 %v4278, %v4349
        %v4375 = vmul.f32 %v4279, %v4349
        %v4376 = vmul.f32 %v4280, %v4349
        %v4377 = vmul.f32 %v4281, %v4349
        %v4378 = vadd.f32 %v4317, %v4350
        %v4379 = vadd.f32 %v4318, %v4351
        %v4380 = vadd.f32 %v4319, %v4352
        %v4381 = vadd.f32 %v4320, %v4353
        %v4382 = vadd.f32 %v4321, %v4354
        %v4383 = vadd.f32 %v4322, %v4355
        %v4384 = vadd.f32 %v4323, %v4356
        %v4385 = vadd.f32 %v4324, %v4357
        %v4386 = vadd.f32 %v4325, %v4358
        %v4387 = vadd.f32 %v4326, %v4359
        %v4388 = vadd.f32 %v4327, %v4360
        %v4389 = vadd.f32 %v4328, %v4361
        %v4390 = vadd.f32 %v4329, %v4362
        %v4391 = vadd.f32 %v4330, %v4363
        %v4392 = vadd.f32 %v4331, %v4364
        %v4393 = vadd.f32 %v4332, %v4365
        %v4394 = vadd.f32 %v4333, %v4366
        %v4395 = vadd.f32 %v4334, %v4367
        %v4396 = vadd.f32 %v4335, %v4368
        %v4397 = vadd.f32 %v4336, %v4369
        %v4398 = vadd.f32 %v4337, %v4370
        %v4399 = vadd.f32 %v4338, %v4371
        %v4400 = vadd.f32 %v4339, %v4372
        %v4401 = vadd.f32 %v4340, %v4373
        %v4402 = vadd.f32 %v4341, %v4374
        %v4403 = vadd.f32 %v4342, %v4375
        %v4404 = vadd.f32 %v4343, %v4376
        %v4405 = vadd.f32 %v4344, %v4377
        %v4406 = vld [vmem:[%s620 + $0xc] sm:$0x1]
        %v4407 = vlaneseq
        %v4408 = vshrl.u32 %v4407, 7
        %v4409 = vsub.s32 0, %v4408
        %v4410 = vrot.slane %v4406, %v4409
        %v4411 = vmul.f32 %v4256, %v4410
        %v4412 = vmul.f32 %v4257, %v4410
        %v4413 = vmul.f32 %v4258, %v4410
        %v4414 = vmul.f32 %v4259, %v4410
        %v4415 = vmul.f32 %v4260, %v4410
        %v4416 = vmul.f32 %v4261, %v4410
        %v4417 = vmul.f32 %v4262, %v4410
        %v4418 = vmul.f32 %v4263, %v4410
        %v4419 = vmul.f32 %v4264, %v4410
        %v4420 = vmul.f32 %v4265, %v4410
        %v4421 = vmul.f32 %v4266, %v4410
        %v4422 = vmul.f32 %v4267, %v4410
        %v4423 = vmul.f32 %v4268, %v4410
        %v4424 = vmul.f32 %v4269, %v4410
        %v4425 = vmul.f32 %v4270, %v4410
        %v4426 = vmul.f32 %v4271, %v4410
        %v4427 = vmul.f32 %v4272, %v4410
        %v4428 = vmul.f32 %v4273, %v4410
        %v4429 = vmul.f32 %v4274, %v4410
        %v4430 = vmul.f32 %v4275, %v4410
        %v4431 = vmul.f32 %v4276, %v4410
        %v4432 = vmul.f32 %v4277, %v4410
        %v4433 = vmul.f32 %v4278, %v4410
        %v4434 = vmul.f32 %v4279, %v4410
        %v4435 = vmul.f32 %v4280, %v4410
        %v4436 = vmul.f32 %v4281, %v4410
        %v4437 = vmul.f32 %v4282, %v4410
        %v4438 = vmul.f32 %v4283, %v4410
        %v4439 = vadd.f32 %v4378, %v4411
        %v4440 = vadd.f32 %v4379, %v4412
        %v4441 = vadd.f32 %v4380, %v4413
        %v4442 = vadd.f32 %v4381, %v4414
        %v4443 = vadd.f32 %v4382, %v4415
        %v4444 = vadd.f32 %v4383, %v4416
        %v4445 = vadd.f32 %v4384, %v4417
        %v4446 = vadd.f32 %v4385, %v4418
        %v4447 = vadd.f32 %v4386, %v4419
        %v4448 = vadd.f32 %v4387, %v4420
        %v4449 = vadd.f32 %v4388, %v4421
        %v4450 = vadd.f32 %v4389, %v4422
        %v4451 = vadd.f32 %v4390, %v4423
        %v4452 = vadd.f32 %v4391, %v4424
        %v4453 = vadd.f32 %v4392, %v4425
        %v4454 = vadd.f32 %v4393, %v4426
        %v4455 = vadd.f32 %v4394, %v4427
        %v4456 = vadd.f32 %v4395, %v4428
        %v4457 = vadd.f32 %v4396, %v4429
        %v4458 = vadd.f32 %v4397, %v4430
        %v4459 = vadd.f32 %v4398, %v4431
        %v4460 = vadd.f32 %v4399, %v4432
        %v4461 = vadd.f32 %v4400, %v4433
        %v4462 = vadd.f32 %v4401, %v4434
        %v4463 = vadd.f32 %v4402, %v4435
        %v4464 = vadd.f32 %v4403, %v4436
        %v4465 = vadd.f32 %v4404, %v4437
        %v4466 = vadd.f32 %v4405, %v4438
        %v4467 = vld [vmem:[%s433 + $0x18] sm:$0xfe]
        %v4468 = vld [vmem:[%s433 + $0x38] sm:$0x7f]
        %v4469 = vld [vmem:[%s433 + $0x58] sm:$0xfe]
        %v4470 = vld [vmem:[%s433 + $0x78] sm:$0x7f]
        %v4471 = vld [vmem:[%s433 + $0x98] sm:$0xfe]
        %v4472 = vld [vmem:[%s433 + $0xb8] sm:$0x7f]
        %v4473 = vld [vmem:[%s433 + $0xd8] sm:$0xfe]
        %v4474 = vld [vmem:[%s433 + $0xf8] sm:$0x7f]
        %v4475 = vld [vmem:[%s433 + $0x118] sm:$0xfe]
        %v4476 = vld [vmem:[%s433 + $0x138] sm:$0x7f]
        %v4477 = vld [vmem:[%s433 + $0x158] sm:$0xfe]
        %v4478 = vld [vmem:[%s433 + $0x178] sm:$0x7f]
        %v4479 = vld [vmem:[%s433 + $0x198] sm:$0xfe]
        %v4480 = vld [vmem:[%s433 + $0x1b8] sm:$0x7f]
        %v4481 = vld [vmem:[%s433 + $0x1d8] sm:$0xfe]
        %v4482 = vld [vmem:[%s433 + $0x1f8] sm:$0x7f]
        %v4483 = vld [vmem:[%s433 + $0x218] sm:$0xfe]
        %v4484 = vld [vmem:[%s433 + $0x238] sm:$0x7f]
        %v4485 = vld [vmem:[%s433 + $0x258] sm:$0xfe]
        %v4486 = vld [vmem:[%s433 + $0x278] sm:$0x7f]
        %v4487 = vld [vmem:[%s433 + $0x298] sm:$0xfe]
        %v4488 = vld [vmem:[%s433 + $0x2b8] sm:$0x7f]
        %v4489 = vld [vmem:[%s433 + $0x2d8] sm:$0xfe]
        %v4490 = vld [vmem:[%s433 + $0x2f8] sm:$0x7f]
        %v4491 = vld [vmem:[%s433 + $0x318] sm:$0xfe]
        %v4492 = vld [vmem:[%s433 + $0x338] sm:$0x7f]
        %v4493 = vld [vmem:[%s433 + $0x358] sm:$0xfe]
        %v4494 = vld [vmem:[%s433 + $0x378] sm:$0x7f]
        %v4495 = vld [vmem:[%s433 + $0x398] sm:$0xfe]
        %v4496 = vld [vmem:[%s433 + $0x3b8] sm:$0x7f]
        %v4497 = vld [vmem:[%s433 + $0x3d8] sm:$0xfe]
        %v4498 = vld [vmem:[%s433 + $0x3f8] sm:$0x7f]
        %v4499 = vld [vmem:[%s440 + $0xd] sm:$0x1]
        %v4500 = vlaneseq
        %v4501 = vshrl.u32 %v4500, 7
        %v4502 = vsub.s32 0, %v4501
        %v4503 = vrot.slane %v4499, %v4502
        %v4504 = vmul.f32 %v4467, %v4503
        %v4505 = vmul.f32 %v4468, %v4503
        %v4506 = vmul.f32 %v4469, %v4503
        %v4507 = vmul.f32 %v4470, %v4503
        %v4508 = vmul.f32 %v4471, %v4503
        %v4509 = vmul.f32 %v4472, %v4503
        %v4510 = vmul.f32 %v4473, %v4503
        %v4511 = vmul.f32 %v4474, %v4503
        %v4512 = vmul.f32 %v4475, %v4503
        %v4513 = vmul.f32 %v4476, %v4503
        %v4514 = vmul.f32 %v4477, %v4503
        %v4515 = vmul.f32 %v4478, %v4503
        %v4516 = vmul.f32 %v4479, %v4503
        %v4517 = vmul.f32 %v4480, %v4503
        %v4518 = vmul.f32 %v4481, %v4503
        %v4519 = vmul.f32 %v4482, %v4503
        %v4520 = vmul.f32 %v4483, %v4503
        %v4521 = vmul.f32 %v4484, %v4503
        %v4522 = vmul.f32 %v4485, %v4503
        %v4523 = vmul.f32 %v4486, %v4503
        %v4524 = vmul.f32 %v4487, %v4503
        %v4525 = vmul.f32 %v4488, %v4503
        %v4526 = vmul.f32 %v4489, %v4503
        %v4527 = vmul.f32 %v4490, %v4503
        %v4528 = vmul.f32 %v4491, %v4503
        %v4529 = vmul.f32 %v4492, %v4503
        %v4530 = vmul.f32 %v4493, %v4503
        %v4531 = vmul.f32 %v4494, %v4503
        %v4560 = vrot.slane %v4504, 1
        %v4561 = vrot.slane %v4505, 1
        %v4562 = vsel %vm775, %v4560, %v4561
        %v4563 = vrot.slane %v4506, 1
        %v4564 = vrot.slane %v4507, 1
        %v4565 = vsel %vm775, %v4563, %v4564
        %v4566 = vrot.slane %v4508, 1
        %v4567 = vrot.slane %v4509, 1
        %v4568 = vsel %vm775, %v4566, %v4567
        %v4569 = vrot.slane %v4510, 1
        %v4570 = vrot.slane %v4511, 1
        %v4571 = vsel %vm775, %v4569, %v4570
        %v4572 = vrot.slane %v4512, 1
        %v4573 = vrot.slane %v4513, 1
        %v4574 = vsel %vm775, %v4572, %v4573
        %v4575 = vrot.slane %v4514, 1
        %v4576 = vrot.slane %v4515, 1
        %v4577 = vsel %vm775, %v4575, %v4576
        %v4578 = vrot.slane %v4516, 1
        %v4579 = vrot.slane %v4517, 1
        %v4580 = vsel %vm775, %v4578, %v4579
        %v4581 = vrot.slane %v4518, 1
        %v4582 = vrot.slane %v4519, 1
        %v4583 = vsel %vm775, %v4581, %v4582
        %v4584 = vrot.slane %v4520, 1
        %v4585 = vrot.slane %v4521, 1
        %v4586 = vsel %vm775, %v4584, %v4585
        %v4587 = vrot.slane %v4522, 1
        %v4588 = vrot.slane %v4523, 1
        %v4589 = vsel %vm775, %v4587, %v4588
        %v4590 = vrot.slane %v4524, 1
        %v4591 = vrot.slane %v4525, 1
        %v4592 = vsel %vm775, %v4590, %v4591
        %v4593 = vrot.slane %v4526, 1
        %v4594 = vrot.slane %v4527, 1
        %v4595 = vsel %vm775, %v4593, %v4594
        %v4596 = vrot.slane %v4528, 1
        %v4597 = vrot.slane %v4529, 1
        %v4598 = vsel %vm775, %v4596, %v4597
        %v4599 = vrot.slane %v4530, 1
        %v4600 = vrot.slane %v4531, 1
        %v4601 = vsel %vm775, %v4599, %v4600
        %v4630 = vadd.f32 %v4439, %v4562
        %v4631 = vadd.f32 %v4440, %v4561
        %v4632 = vadd.f32 %v4441, %v4565
        %v4633 = vadd.f32 %v4442, %v4564
        %v4634 = vadd.f32 %v4443, %v4568
        %v4635 = vadd.f32 %v4444, %v4567
        %v4636 = vadd.f32 %v4445, %v4571
        %v4637 = vadd.f32 %v4446, %v4570
        %v4638 = vadd.f32 %v4447, %v4574
        %v4639 = vadd.f32 %v4448, %v4573
        %v4640 = vadd.f32 %v4449, %v4577
        %v4641 = vadd.f32 %v4450, %v4576
        %v4642 = vadd.f32 %v4451, %v4580
        %v4643 = vadd.f32 %v4452, %v4579
        %v4644 = vadd.f32 %v4453, %v4583
        %v4645 = vadd.f32 %v4454, %v4582
        %v4646 = vadd.f32 %v4455, %v4586
        %v4647 = vadd.f32 %v4456, %v4585
        %v4648 = vadd.f32 %v4457, %v4589
        %v4649 = vadd.f32 %v4458, %v4588
        %v4650 = vadd.f32 %v4459, %v4592
        %v4651 = vadd.f32 %v4460, %v4591
        %v4652 = vadd.f32 %v4461, %v4595
        %v4653 = vadd.f32 %v4462, %v4594
        %v4654 = vadd.f32 %v4463, %v4598
        %v4655 = vadd.f32 %v4464, %v4597
        %v4656 = vadd.f32 %v4465, %v4601
        %v4657 = vadd.f32 %v4466, %v4600
        %v4658 = vld [vmem:[%s558 + $0xd] sm:$0x1]
        %v4659 = vlaneseq
        %v4660 = vshrl.u32 %v4659, 7
        %v4661 = vsub.s32 0, %v4660
        %v4662 = vrot.slane %v4658, %v4661
        %v4663 = vmul.f32 %v4469, %v4662
        %v4664 = vmul.f32 %v4470, %v4662
        %v4665 = vmul.f32 %v4471, %v4662
        %v4666 = vmul.f32 %v4472, %v4662
        %v4667 = vmul.f32 %v4473, %v4662
        %v4668 = vmul.f32 %v4474, %v4662
        %v4669 = vmul.f32 %v4475, %v4662
        %v4670 = vmul.f32 %v4476, %v4662
        %v4671 = vmul.f32 %v4477, %v4662
        %v4672 = vmul.f32 %v4478, %v4662
        %v4673 = vmul.f32 %v4479, %v4662
        %v4674 = vmul.f32 %v4480, %v4662
        %v4675 = vmul.f32 %v4481, %v4662
        %v4676 = vmul.f32 %v4482, %v4662
        %v4677 = vmul.f32 %v4483, %v4662
        %v4678 = vmul.f32 %v4484, %v4662
        %v4679 = vmul.f32 %v4485, %v4662
        %v4680 = vmul.f32 %v4486, %v4662
        %v4681 = vmul.f32 %v4487, %v4662
        %v4682 = vmul.f32 %v4488, %v4662
        %v4683 = vmul.f32 %v4489, %v4662
        %v4684 = vmul.f32 %v4490, %v4662
        %v4685 = vmul.f32 %v4491, %v4662
        %v4686 = vmul.f32 %v4492, %v4662
        %v4687 = vmul.f32 %v4493, %v4662
        %v4688 = vmul.f32 %v4494, %v4662
        %v4689 = vmul.f32 %v4495, %v4662
        %v4690 = vmul.f32 %v4496, %v4662
        %v4719 = vrot.slane %v4663, 1
        %v4720 = vrot.slane %v4664, 1
        %v4721 = vsel %vm775, %v4719, %v4720
        %v4722 = vrot.slane %v4665, 1
        %v4723 = vrot.slane %v4666, 1
        %v4724 = vsel %vm775, %v4722, %v4723
        %v4725 = vrot.slane %v4667, 1
        %v4726 = vrot.slane %v4668, 1
        %v4727 = vsel %vm775, %v4725, %v4726
        %v4728 = vrot.slane %v4669, 1
        %v4729 = vrot.slane %v4670, 1
        %v4730 = vsel %vm775, %v4728, %v4729
        %v4731 = vrot.slane %v4671, 1
        %v4732 = vrot.slane %v4672, 1
        %v4733 = vsel %vm775, %v4731, %v4732
        %v4734 = vrot.slane %v4673, 1
        %v4735 = vrot.slane %v4674, 1
        %v4736 = vsel %vm775, %v4734, %v4735
        %v4737 = vrot.slane %v4675, 1
        %v4738 = vrot.slane %v4676, 1
        %v4739 = vsel %vm775, %v4737, %v4738
        %v4740 = vrot.slane %v4677, 1
        %v4741 = vrot.slane %v4678, 1
        %v4742 = vsel %vm775, %v4740, %v4741
        %v4743 = vrot.slane %v4679, 1
        %v4744 = vrot.slane %v4680, 1
        %v4745 = vsel %vm775, %v4743, %v4744
        %v4746 = vrot.slane %v4681, 1
        %v4747 = vrot.slane %v4682, 1
        %v4748 = vsel %vm775, %v4746, %v4747
        %v4749 = vrot.slane %v4683, 1
        %v4750 = vrot.slane %v4684, 1
        %v4751 = vsel %vm775, %v4749, %v4750
        %v4752 = vrot.slane %v4685, 1
        %v4753 = vrot.slane %v4686, 1
        %v4754 = vsel %vm775, %v4752, %v4753
        %v4755 = vrot.slane %v4687, 1
        %v4756 = vrot.slane %v4688, 1
        %v4757 = vsel %vm775, %v4755, %v4756
        %v4758 = vrot.slane %v4689, 1
        %v4759 = vrot.slane %v4690, 1
        %v4760 = vsel %vm775, %v4758, %v4759
        %v4789 = vadd.f32 %v4630, %v4721
        %v4790 = vadd.f32 %v4631, %v4720
        %v4791 = vadd.f32 %v4632, %v4724
        %v4792 = vadd.f32 %v4633, %v4723
        %v4793 = vadd.f32 %v4634, %v4727
        %v4794 = vadd.f32 %v4635, %v4726
        %v4795 = vadd.f32 %v4636, %v4730
        %v4796 = vadd.f32 %v4637, %v4729
        %v4797 = vadd.f32 %v4638, %v4733
        %v4798 = vadd.f32 %v4639, %v4732
        %v4799 = vadd.f32 %v4640, %v4736
        %v4800 = vadd.f32 %v4641, %v4735
        %v4801 = vadd.f32 %v4642, %v4739
        %v4802 = vadd.f32 %v4643, %v4738
        %v4803 = vadd.f32 %v4644, %v4742
        %v4804 = vadd.f32 %v4645, %v4741
        %v4805 = vadd.f32 %v4646, %v4745
        %v4806 = vadd.f32 %v4647, %v4744
        %v4807 = vadd.f32 %v4648, %v4748
        %v4808 = vadd.f32 %v4649, %v4747
        %v4809 = vadd.f32 %v4650, %v4751
        %v4810 = vadd.f32 %v4651, %v4750
        %v4811 = vadd.f32 %v4652, %v4754
        %v4812 = vadd.f32 %v4653, %v4753
        %v4813 = vadd.f32 %v4654, %v4757
        %v4814 = vadd.f32 %v4655, %v4756
        %v4815 = vadd.f32 %v4656, %v4760
        %v4816 = vadd.f32 %v4657, %v4759
        %v4817 = vld [vmem:[%s620 + $0xd] sm:$0x1]
        %v4818 = vlaneseq
        %v4819 = vshrl.u32 %v4818, 7
        %v4820 = vsub.s32 0, %v4819
        %v4821 = vrot.slane %v4817, %v4820
        %v4822 = vmul.f32 %v4471, %v4821
        %v4823 = vmul.f32 %v4472, %v4821
        %v4824 = vmul.f32 %v4473, %v4821
        %v4825 = vmul.f32 %v4474, %v4821
        %v4826 = vmul.f32 %v4475, %v4821
        %v4827 = vmul.f32 %v4476, %v4821
        %v4828 = vmul.f32 %v4477, %v4821
        %v4829 = vmul.f32 %v4478, %v4821
        %v4830 = vmul.f32 %v4479, %v4821
        %v4831 = vmul.f32 %v4480, %v4821
        %v4832 = vmul.f32 %v4481, %v4821
        %v4833 = vmul.f32 %v4482, %v4821
        %v4834 = vmul.f32 %v4483, %v4821
        %v4835 = vmul.f32 %v4484, %v4821
        %v4836 = vmul.f32 %v4485, %v4821
        %v4837 = vmul.f32 %v4486, %v4821
        %v4838 = vmul.f32 %v4487, %v4821
        %v4839 = vmul.f32 %v4488, %v4821
        %v4840 = vmul.f32 %v4489, %v4821
        %v4841 = vmul.f32 %v4490, %v4821
        %v4842 = vmul.f32 %v4491, %v4821
        %v4843 = vmul.f32 %v4492, %v4821
        %v4844 = vmul.f32 %v4493, %v4821
        %v4845 = vmul.f32 %v4494, %v4821
        %v4846 = vmul.f32 %v4495, %v4821
        %v4847 = vmul.f32 %v4496, %v4821
        %v4848 = vmul.f32 %v4497, %v4821
        %v4849 = vmul.f32 %v4498, %v4821
        %v4878 = vrot.slane %v4822, 1
        %v4879 = vrot.slane %v4823, 1
        %v4880 = vsel %vm775, %v4878, %v4879
        %v4881 = vrot.slane %v4824, 1
        %v4882 = vrot.slane %v4825, 1
        %v4883 = vsel %vm775, %v4881, %v4882
        %v4884 = vrot.slane %v4826, 1
        %v4885 = vrot.slane %v4827, 1
        %v4886 = vsel %vm775, %v4884, %v4885
        %v4887 = vrot.slane %v4828, 1
        %v4888 = vrot.slane %v4829, 1
        %v4889 = vsel %vm775, %v4887, %v4888
        %v4890 = vrot.slane %v4830, 1
        %v4891 = vrot.slane %v4831, 1
        %v4892 = vsel %vm775, %v4890, %v4891
        %v4893 = vrot.slane %v4832, 1
        %v4894 = vrot.slane %v4833, 1
        %v4895 = vsel %vm775, %v4893, %v4894
        %v4896 = vrot.slane %v4834, 1
        %v4897 = vrot.slane %v4835, 1
        %v4898 = vsel %vm775, %v4896, %v4897
        %v4899 = vrot.slane %v4836, 1
        %v4900 = vrot.slane %v4837, 1
        %v4901 = vsel %vm775, %v4899, %v4900
        %v4902 = vrot.slane %v4838, 1
        %v4903 = vrot.slane %v4839, 1
        %v4904 = vsel %vm775, %v4902, %v4903
        %v4905 = vrot.slane %v4840, 1
        %v4906 = vrot.slane %v4841, 1
        %v4907 = vsel %vm775, %v4905, %v4906
        %v4908 = vrot.slane %v4842, 1
        %v4909 = vrot.slane %v4843, 1
        %v4910 = vsel %vm775, %v4908, %v4909
        %v4911 = vrot.slane %v4844, 1
        %v4912 = vrot.slane %v4845, 1
        %v4913 = vsel %vm775, %v4911, %v4912
        %v4914 = vrot.slane %v4846, 1
        %v4915 = vrot.slane %v4847, 1
        %v4916 = vsel %vm775, %v4914, %v4915
        %v4917 = vrot.slane %v4848, 1
        %v4918 = vrot.slane %v4849, 1
        %v4919 = vsel %vm775, %v4917, %v4918
        %v4948 = vadd.f32 %v4789, %v4880
        %v4949 = vadd.f32 %v4790, %v4879
        %v4950 = vadd.f32 %v4791, %v4883
        %v4951 = vadd.f32 %v4792, %v4882
        %v4952 = vadd.f32 %v4793, %v4886
        %v4953 = vadd.f32 %v4794, %v4885
        %v4954 = vadd.f32 %v4795, %v4889
        %v4955 = vadd.f32 %v4796, %v4888
        %v4956 = vadd.f32 %v4797, %v4892
        %v4957 = vadd.f32 %v4798, %v4891
        %v4958 = vadd.f32 %v4799, %v4895
        %v4959 = vadd.f32 %v4800, %v4894
        %v4960 = vadd.f32 %v4801, %v4898
        %v4961 = vadd.f32 %v4802, %v4897
        %v4962 = vadd.f32 %v4803, %v4901
        %v4963 = vadd.f32 %v4804, %v4900
        %v4964 = vadd.f32 %v4805, %v4904
        %v4965 = vadd.f32 %v4806, %v4903
        %v4966 = vadd.f32 %v4807, %v4907
        %v4967 = vadd.f32 %v4808, %v4906
        %v4968 = vadd.f32 %v4809, %v4910
        %v4969 = vadd.f32 %v4810, %v4909
        %v4970 = vadd.f32 %v4811, %v4913
        %v4971 = vadd.f32 %v4812, %v4912
        %v4972 = vadd.f32 %v4813, %v4916
        %v4973 = vadd.f32 %v4814, %v4915
        %v4974 = vadd.f32 %v4815, %v4919
        %v4975 = vadd.f32 %v4816, %v4918
        %v4976 = vld [vmem:[%s433 + $0x18] sm:$0xfc]
        %v4977 = vld [vmem:[%s433 + $0x38] sm:$0xff]
        %v4978 = vld [vmem:[%s433 + $0x58] sm:$0xfc]
        %v4979 = vld [vmem:[%s433 + $0x78] sm:$0xff]
        %v4980 = vld [vmem:[%s433 + $0x98] sm:$0xfc]
        %v4981 = vld [vmem:[%s433 + $0xb8] sm:$0xff]
        %v4982 = vld [vmem:[%s433 + $0xd8] sm:$0xfc]
        %v4983 = vld [vmem:[%s433 + $0xf8] sm:$0xff]
        %v4984 = vld [vmem:[%s433 + $0x118] sm:$0xfc]
        %v4985 = vld [vmem:[%s433 + $0x138] sm:$0xff]
        %v4986 = vld [vmem:[%s433 + $0x158] sm:$0xfc]
        %v4987 = vld [vmem:[%s433 + $0x178] sm:$0xff]
        %v4988 = vld [vmem:[%s433 + $0x198] sm:$0xfc]
        %v4989 = vld [vmem:[%s433 + $0x1b8] sm:$0xff]
        %v4990 = vld [vmem:[%s433 + $0x1d8] sm:$0xfc]
        %v4991 = vld [vmem:[%s433 + $0x1f8] sm:$0xff]
        %v4992 = vld [vmem:[%s433 + $0x218] sm:$0xfc]
        %v4993 = vld [vmem:[%s433 + $0x238] sm:$0xff]
        %v4994 = vld [vmem:[%s433 + $0x258] sm:$0xfc]
        %v4995 = vld [vmem:[%s433 + $0x278] sm:$0xff]
        %v4996 = vld [vmem:[%s433 + $0x298] sm:$0xfc]
        %v4997 = vld [vmem:[%s433 + $0x2b8] sm:$0xff]
        %v4998 = vld [vmem:[%s433 + $0x2d8] sm:$0xfc]
        %v4999 = vld [vmem:[%s433 + $0x2f8] sm:$0xff]
        %v5000 = vld [vmem:[%s433 + $0x318] sm:$0xfc]
        %v5001 = vld [vmem:[%s433 + $0x338] sm:$0xff]
        %v5002 = vld [vmem:[%s433 + $0x358] sm:$0xfc]
        %v5003 = vld [vmem:[%s433 + $0x378] sm:$0xff]
        %v5004 = vld [vmem:[%s433 + $0x398] sm:$0xfc]
        %v5005 = vld [vmem:[%s433 + $0x3b8] sm:$0xff]
        %v5006 = vld [vmem:[%s433 + $0x3d8] sm:$0xfc]
        %v5007 = vld [vmem:[%s433 + $0x3f8] sm:$0xff]
        %v5008 = vld [vmem:[%s440 + $0xe] sm:$0x1]
        %v5009 = vlaneseq
        %v5010 = vshrl.u32 %v5009, 7
        %v5011 = vsub.s32 0, %v5010
        %v5012 = vrot.slane %v5008, %v5011
        %v5013 = vmul.f32 %v4976, %v5012
        %v5014 = vmul.f32 %v4977, %v5012
        %v5015 = vmul.f32 %v4978, %v5012
        %v5016 = vmul.f32 %v4979, %v5012
        %v5017 = vmul.f32 %v4980, %v5012
        %v5018 = vmul.f32 %v4981, %v5012
        %v5019 = vmul.f32 %v4982, %v5012
        %v5020 = vmul.f32 %v4983, %v5012
        %v5021 = vmul.f32 %v4984, %v5012
        %v5022 = vmul.f32 %v4985, %v5012
        %v5023 = vmul.f32 %v4986, %v5012
        %v5024 = vmul.f32 %v4987, %v5012
        %v5025 = vmul.f32 %v4988, %v5012
        %v5026 = vmul.f32 %v4989, %v5012
        %v5027 = vmul.f32 %v4990, %v5012
        %v5028 = vmul.f32 %v4991, %v5012
        %v5029 = vmul.f32 %v4992, %v5012
        %v5030 = vmul.f32 %v4993, %v5012
        %v5031 = vmul.f32 %v4994, %v5012
        %v5032 = vmul.f32 %v4995, %v5012
        %v5033 = vmul.f32 %v4996, %v5012
        %v5034 = vmul.f32 %v4997, %v5012
        %v5035 = vmul.f32 %v4998, %v5012
        %v5036 = vmul.f32 %v4999, %v5012
        %v5037 = vmul.f32 %v5000, %v5012
        %v5038 = vmul.f32 %v5001, %v5012
        %v5039 = vmul.f32 %v5002, %v5012
        %v5040 = vmul.f32 %v5003, %v5012
        %v5069 = vrot.slane %v5013, 2
        %v5070 = vrot.slane %v5014, 2
        %v5071 = vsel %vm1285, %v5069, %v5070
        %v5072 = vrot.slane %v5015, 2
        %v5073 = vrot.slane %v5016, 2
        %v5074 = vsel %vm1285, %v5072, %v5073
        %v5075 = vrot.slane %v5017, 2
        %v5076 = vrot.slane %v5018, 2
        %v5077 = vsel %vm1285, %v5075, %v5076
        %v5078 = vrot.slane %v5019, 2
        %v5079 = vrot.slane %v5020, 2
        %v5080 = vsel %vm1285, %v5078, %v5079
        %v5081 = vrot.slane %v5021, 2
        %v5082 = vrot.slane %v5022, 2
        %v5083 = vsel %vm1285, %v5081, %v5082
        %v5084 = vrot.slane %v5023, 2
        %v5085 = vrot.slane %v5024, 2
        %v5086 = vsel %vm1285, %v5084, %v5085
        %v5087 = vrot.slane %v5025, 2
        %v5088 = vrot.slane %v5026, 2
        %v5089 = vsel %vm1285, %v5087, %v5088
        %v5090 = vrot.slane %v5027, 2
        %v5091 = vrot.slane %v5028, 2
        %v5092 = vsel %vm1285, %v5090, %v5091
        %v5093 = vrot.slane %v5029, 2
        %v5094 = vrot.slane %v5030, 2
        %v5095 = vsel %vm1285, %v5093, %v5094
        %v5096 = vrot.slane %v5031, 2
        %v5097 = vrot.slane %v5032, 2
        %v5098 = vsel %vm1285, %v5096, %v5097
        %v5099 = vrot.slane %v5033, 2
        %v5100 = vrot.slane %v5034, 2
        %v5101 = vsel %vm1285, %v5099, %v5100
        %v5102 = vrot.slane %v5035, 2
        %v5103 = vrot.slane %v5036, 2
        %v5104 = vsel %vm1285, %v5102, %v5103
        %v5105 = vrot.slane %v5037, 2
        %v5106 = vrot.slane %v5038, 2
        %v5107 = vsel %vm1285, %v5105, %v5106
        %v5108 = vrot.slane %v5039, 2
        %v5109 = vrot.slane %v5040, 2
        %v5110 = vsel %vm1285, %v5108, %v5109
        %v5139 = vadd.f32 %v4948, %v5071
        %v5140 = vadd.f32 %v4949, %v5070
        %v5141 = vadd.f32 %v4950, %v5074
        %v5142 = vadd.f32 %v4951, %v5073
        %v5143 = vadd.f32 %v4952, %v5077
        %v5144 = vadd.f32 %v4953, %v5076
        %v5145 = vadd.f32 %v4954, %v5080
        %v5146 = vadd.f32 %v4955, %v5079
        %v5147 = vadd.f32 %v4956, %v5083
        %v5148 = vadd.f32 %v4957, %v5082
        %v5149 = vadd.f32 %v4958, %v5086
        %v5150 = vadd.f32 %v4959, %v5085
        %v5151 = vadd.f32 %v4960, %v5089
        %v5152 = vadd.f32 %v4961, %v5088
        %v5153 = vadd.f32 %v4962, %v5092
        %v5154 = vadd.f32 %v4963, %v5091
        %v5155 = vadd.f32 %v4964, %v5095
        %v5156 = vadd.f32 %v4965, %v5094
        %v5157 = vadd.f32 %v4966, %v5098
        %v5158 = vadd.f32 %v4967, %v5097
        %v5159 = vadd.f32 %v4968, %v5101
        %v5160 = vadd.f32 %v4969, %v5100
        %v5161 = vadd.f32 %v4970, %v5104
        %v5162 = vadd.f32 %v4971, %v5103
        %v5163 = vadd.f32 %v4972, %v5107
        %v5164 = vadd.f32 %v4973, %v5106
        %v5165 = vadd.f32 %v4974, %v5110
        %v5166 = vadd.f32 %v4975, %v5109
        %v5167 = vld [vmem:[%s558 + $0xe] sm:$0x1]
        %v5168 = vlaneseq
        %v5169 = vshrl.u32 %v5168, 7
        %v5170 = vsub.s32 0, %v5169
        %v5171 = vrot.slane %v5167, %v5170
        %v5172 = vmul.f32 %v4978, %v5171
        %v5173 = vmul.f32 %v4979, %v5171
        %v5174 = vmul.f32 %v4980, %v5171
        %v5175 = vmul.f32 %v4981, %v5171
        %v5176 = vmul.f32 %v4982, %v5171
        %v5177 = vmul.f32 %v4983, %v5171
        %v5178 = vmul.f32 %v4984, %v5171
        %v5179 = vmul.f32 %v4985, %v5171
        %v5180 = vmul.f32 %v4986, %v5171
        %v5181 = vmul.f32 %v4987, %v5171
        %v5182 = vmul.f32 %v4988, %v5171
        %v5183 = vmul.f32 %v4989, %v5171
        %v5184 = vmul.f32 %v4990, %v5171
        %v5185 = vmul.f32 %v4991, %v5171
        %v5186 = vmul.f32 %v4992, %v5171
        %v5187 = vmul.f32 %v4993, %v5171
        %v5188 = vmul.f32 %v4994, %v5171
        %v5189 = vmul.f32 %v4995, %v5171
        %v5190 = vmul.f32 %v4996, %v5171
        %v5191 = vmul.f32 %v4997, %v5171
        %v5192 = vmul.f32 %v4998, %v5171
        %v5193 = vmul.f32 %v4999, %v5171
        %v5194 = vmul.f32 %v5000, %v5171
        %v5195 = vmul.f32 %v5001, %v5171
        %v5196 = vmul.f32 %v5002, %v5171
        %v5197 = vmul.f32 %v5003, %v5171
        %v5198 = vmul.f32 %v5004, %v5171
        %v5199 = vmul.f32 %v5005, %v5171
        %v5228 = vrot.slane %v5172, 2
        %v5229 = vrot.slane %v5173, 2
        %v5230 = vsel %vm1285, %v5228, %v5229
        %v5231 = vrot.slane %v5174, 2
        %v5232 = vrot.slane %v5175, 2
        %v5233 = vsel %vm1285, %v5231, %v5232
        %v5234 = vrot.slane %v5176, 2
        %v5235 = vrot.slane %v5177, 2
        %v5236 = vsel %vm1285, %v5234, %v5235
        %v5237 = vrot.slane %v5178, 2
        %v5238 = vrot.slane %v5179, 2
        %v5239 = vsel %vm1285, %v5237, %v5238
        %v5240 = vrot.slane %v5180, 2
        %v5241 = vrot.slane %v5181, 2
        %v5242 = vsel %vm1285, %v5240, %v5241
        %v5243 = vrot.slane %v5182, 2
        %v5244 = vrot.slane %v5183, 2
        %v5245 = vsel %vm1285, %v5243, %v5244
        %v5246 = vrot.slane %v5184, 2
        %v5247 = vrot.slane %v5185, 2
        %v5248 = vsel %vm1285, %v5246, %v5247
        %v5249 = vrot.slane %v5186, 2
        %v5250 = vrot.slane %v5187, 2
        %v5251 = vsel %vm1285, %v5249, %v5250
        %v5252 = vrot.slane %v5188, 2
        %v5253 = vrot.slane %v5189, 2
        %v5254 = vsel %vm1285, %v5252, %v5253
        %v5255 = vrot.slane %v5190, 2
        %v5256 = vrot.slane %v5191, 2
        %v5257 = vsel %vm1285, %v5255, %v5256
        %v5258 = vrot.slane %v5192, 2
        %v5259 = vrot.slane %v5193, 2
        %v5260 = vsel %vm1285, %v5258, %v5259
        %v5261 = vrot.slane %v5194, 2
        %v5262 = vrot.slane %v5195, 2
        %v5263 = vsel %vm1285, %v5261, %v5262
        %v5264 = vrot.slane %v5196, 2
        %v5265 = vrot.slane %v5197, 2
        %v5266 = vsel %vm1285, %v5264, %v5265
        %v5267 = vrot.slane %v5198, 2
        %v5268 = vrot.slane %v5199, 2
        %v5269 = vsel %vm1285, %v5267, %v5268
        %v5298 = vadd.f32 %v5139, %v5230
        %v5299 = vadd.f32 %v5140, %v5229
        %v5300 = vadd.f32 %v5141, %v5233
        %v5301 = vadd.f32 %v5142, %v5232
        %v5302 = vadd.f32 %v5143, %v5236
        %v5303 = vadd.f32 %v5144, %v5235
        %v5304 = vadd.f32 %v5145, %v5239
        %v5305 = vadd.f32 %v5146, %v5238
        %v5306 = vadd.f32 %v5147, %v5242
        %v5307 = vadd.f32 %v5148, %v5241
        %v5308 = vadd.f32 %v5149, %v5245
        %v5309 = vadd.f32 %v5150, %v5244
        %v5310 = vadd.f32 %v5151, %v5248
        %v5311 = vadd.f32 %v5152, %v5247
        %v5312 = vadd.f32 %v5153, %v5251
        %v5313 = vadd.f32 %v5154, %v5250
        %v5314 = vadd.f32 %v5155, %v5254
        %v5315 = vadd.f32 %v5156, %v5253
        %v5316 = vadd.f32 %v5157, %v5257
        %v5317 = vadd.f32 %v5158, %v5256
        %v5318 = vadd.f32 %v5159, %v5260
        %v5319 = vadd.f32 %v5160, %v5259
        %v5320 = vadd.f32 %v5161, %v5263
        %v5321 = vadd.f32 %v5162, %v5262
        %v5322 = vadd.f32 %v5163, %v5266
        %v5323 = vadd.f32 %v5164, %v5265
        %v5324 = vadd.f32 %v5165, %v5269
        %v5325 = vadd.f32 %v5166, %v5268
        %v5326 = vld [vmem:[%s620 + $0xe] sm:$0x1]
        %v5327 = vlaneseq
        %v5328 = vshrl.u32 %v5327, 7
        %v5329 = vsub.s32 0, %v5328
        %v5330 = vrot.slane %v5326, %v5329
        %v5331 = vmul.f32 %v4980, %v5330
        %v5332 = vmul.f32 %v4981, %v5330
        %v5333 = vmul.f32 %v4982, %v5330
        %v5334 = vmul.f32 %v4983, %v5330
        %v5335 = vmul.f32 %v4984, %v5330
        %v5336 = vmul.f32 %v4985, %v5330
        %v5337 = vmul.f32 %v4986, %v5330
        %v5338 = vmul.f32 %v4987, %v5330
        %v5339 = vmul.f32 %v4988, %v5330
        %v5340 = vmul.f32 %v4989, %v5330
        %v5341 = vmul.f32 %v4990, %v5330
        %v5342 = vmul.f32 %v4991, %v5330
        %v5343 = vmul.f32 %v4992, %v5330
        %v5344 = vmul.f32 %v4993, %v5330
        %v5345 = vmul.f32 %v4994, %v5330
        %v5346 = vmul.f32 %v4995, %v5330
        %v5347 = vmul.f32 %v4996, %v5330
        %v5348 = vmul.f32 %v4997, %v5330
        %v5349 = vmul.f32 %v4998, %v5330
        %v5350 = vmul.f32 %v4999, %v5330
        %v5351 = vmul.f32 %v5000, %v5330
        %v5352 = vmul.f32 %v5001, %v5330
        %v5353 = vmul.f32 %v5002, %v5330
        %v5354 = vmul.f32 %v5003, %v5330
        %v5355 = vmul.f32 %v5004, %v5330
        %v5356 = vmul.f32 %v5005, %v5330
        %v5357 = vmul.f32 %v5006, %v5330
        %v5358 = vmul.f32 %v5007, %v5330
        %v5387 = vrot.slane %v5331, 2
        %v5388 = vrot.slane %v5332, 2
        %v5389 = vsel %vm1285, %v5387, %v5388
        %v5390 = vrot.slane %v5333, 2
        %v5391 = vrot.slane %v5334, 2
        %v5392 = vsel %vm1285, %v5390, %v5391
        %v5393 = vrot.slane %v5335, 2
        %v5394 = vrot.slane %v5336, 2
        %v5395 = vsel %vm1285, %v5393, %v5394
        %v5396 = vrot.slane %v5337, 2
        %v5397 = vrot.slane %v5338, 2
        %v5398 = vsel %vm1285, %v5396, %v5397
        %v5399 = vrot.slane %v5339, 2
        %v5400 = vrot.slane %v5340, 2
        %v5401 = vsel %vm1285, %v5399, %v5400
        %v5402 = vrot.slane %v5341, 2
        %v5403 = vrot.slane %v5342, 2
        %v5404 = vsel %vm1285, %v5402, %v5403
        %v5405 = vrot.slane %v5343, 2
        %v5406 = vrot.slane %v5344, 2
        %v5407 = vsel %vm1285, %v5405, %v5406
        %v5408 = vrot.slane %v5345, 2
        %v5409 = vrot.slane %v5346, 2
        %v5410 = vsel %vm1285, %v5408, %v5409
        %v5411 = vrot.slane %v5347, 2
        %v5412 = vrot.slane %v5348, 2
        %v5413 = vsel %vm1285, %v5411, %v5412
        %v5414 = vrot.slane %v5349, 2
        %v5415 = vrot.slane %v5350, 2
        %v5416 = vsel %vm1285, %v5414, %v5415
        %v5417 = vrot.slane %v5351, 2
        %v5418 = vrot.slane %v5352, 2
        %v5419 = vsel %vm1285, %v5417, %v5418
        %v5420 = vrot.slane %v5353, 2
        %v5421 = vrot.slane %v5354, 2
        %v5422 = vsel %vm1285, %v5420, %v5421
        %v5423 = vrot.slane %v5355, 2
        %v5424 = vrot.slane %v5356, 2
        %v5425 = vsel %vm1285, %v5423, %v5424
        %v5426 = vrot.slane %v5357, 2
        %v5427 = vrot.slane %v5358, 2
        %v5428 = vsel %vm1285, %v5426, %v5427
        %v5457 = vadd.f32 %v5298, %v5389
        %v5458 = vadd.f32 %v5299, %v5388
        %v5459 = vadd.f32 %v5300, %v5392
        %v5460 = vadd.f32 %v5301, %v5391
        %v5461 = vadd.f32 %v5302, %v5395
        %v5462 = vadd.f32 %v5303, %v5394
        %v5463 = vadd.f32 %v5304, %v5398
        %v5464 = vadd.f32 %v5305, %v5397
        %v5465 = vadd.f32 %v5306, %v5401
        %v5466 = vadd.f32 %v5307, %v5400
        %v5467 = vadd.f32 %v5308, %v5404
        %v5468 = vadd.f32 %v5309, %v5403
        %v5469 = vadd.f32 %v5310, %v5407
        %v5470 = vadd.f32 %v5311, %v5406
        %v5471 = vadd.f32 %v5312, %v5410
        %v5472 = vadd.f32 %v5313, %v5409
        %v5473 = vadd.f32 %v5314, %v5413
        %v5474 = vadd.f32 %v5315, %v5412
        %v5475 = vadd.f32 %v5316, %v5416
        %v5476 = vadd.f32 %v5317, %v5415
        %v5477 = vadd.f32 %v5318, %v5419
        %v5478 = vadd.f32 %v5319, %v5418
        %v5479 = vadd.f32 %v5320, %v5422
        %v5480 = vadd.f32 %v5321, %v5421
        %v5481 = vadd.f32 %v5322, %v5425
        %v5482 = vadd.f32 %v5323, %v5424
        %v5483 = vadd.f32 %v5324, %v5428
        %v5484 = vadd.f32 %v5325, %v5427
        %5485 = vst [vmem:[%s461 + $0x18] sm:$0xff] %v5457
        %5486 = vst [vmem:[%s461 + $0x38] sm:$0x3f] %v5458
        %5487 = vst [vmem:[%s461 + $0x58] sm:$0xff] %v5459
        %5488 = vst [vmem:[%s461 + $0x78] sm:$0x3f] %v5460
        %5489 = vst [vmem:[%s461 + $0x98] sm:$0xff] %v5461
        %5490 = vst [vmem:[%s461 + $0xb8] sm:$0x3f] %v5462
        %5491 = vst [vmem:[%s461 + $0xd8] sm:$0xff] %v5463
        %5492 = vst [vmem:[%s461 + $0xf8] sm:$0x3f] %v5464
        %5493 = vst [vmem:[%s461 + $0x118] sm:$0xff] %v5465
        %5494 = vst [vmem:[%s461 + $0x138] sm:$0x3f] %v5466
        %5495 = vst [vmem:[%s461 + $0x158] sm:$0xff] %v5467
        %5496 = vst [vmem:[%s461 + $0x178] sm:$0x3f] %v5468
        %5497 = vst [vmem:[%s461 + $0x198] sm:$0xff] %v5469
        %5498 = vst [vmem:[%s461 + $0x1b8] sm:$0x3f] %v5470
        %5499 = vst [vmem:[%s461 + $0x1d8] sm:$0xff] %v5471
        %5500 = vst [vmem:[%s461 + $0x1f8] sm:$0x3f] %v5472
        %5501 = vst [vmem:[%s461 + $0x218] sm:$0xff] %v5473
        %5502 = vst [vmem:[%s461 + $0x238] sm:$0x3f] %v5474
        %5503 = vst [vmem:[%s461 + $0x258] sm:$0xff] %v5475
        %5504 = vst [vmem:[%s461 + $0x278] sm:$0x3f] %v5476
        %5505 = vst [vmem:[%s461 + $0x298] sm:$0xff] %v5477
        %5506 = vst [vmem:[%s461 + $0x2b8] sm:$0x3f] %v5478
        %5507 = vst [vmem:[%s461 + $0x2d8] sm:$0xff] %v5479
        %5508 = vst [vmem:[%s461 + $0x2f8] sm:$0x3f] %v5480
        %5509 = vst [vmem:[%s461 + $0x318] sm:$0xff] %v5481
        %5510 = vst [vmem:[%s461 + $0x338] sm:$0x3f] %v5482
        %5511 = vst [vmem:[%s461 + $0x358] sm:$0xff] %v5483
        %5512 = vst [vmem:[%s461 + $0x378] sm:$0x3f] %v5484
        %s5513 = sand.u32 %s73, 1
        %s5514 = sand.u32 %s73, 1
        %s5515 = smul.addr %s5514, 896
        %s5516 = scalar_lea.vmem [#allocation4], %s5515
        // Predicated region
        $region75: #{depthwise_conv3x3.1} parent=65 // pred_check
          %p5517 = pneg %p83
        $region76: #{depthwise_conv3x3.1} parent=65 // pred_check_branch
          %5519 = sbr.rel (%p5517) target = $region78
        $region77: #{depthwise_conv3x3.1} parent=65 // pred_region
          %s5520 = smul.u32 4, %s13
          %s5521 = smul.addr %s5520, 8
          %s5522 = scalar_lea.vmem %s2, %s5521
          // Predicated region
          $region79: #{depthwise_conv3x3.1} parent=77 // pred_check
            _
          $region80: #{depthwise_conv3x3.1} parent=77 // pred_check_branch
            %5524 = sbr.rel (0) target = $region82
          $region81: #{depthwise_conv3x3.1} parent=77 // pred_region
            // Predicated region
            $region83: #{depthwise_conv3x3.1} parent=81 // pred_check
              _
            $region84: #{depthwise_conv3x3.1} parent=81 // pred_check_branch
              %5526 = sbr.rel (0) target = $region86
            $region85: #{depthwise_conv3x3.1} parent=81 // pred_region
              loop: start=0, step=1, limit=1
              $region87: #{depthwise_conv3x3.1} parent=85 // loop_pre_header
                _
              $region88: #{depthwise_conv3x3.1} parent=85 // loop_header
                %s5528 = sphi 0, %s5532
                %p5529 = scmp.ge.s32.totalorder %s5528, 1
                %s5533 = sphi %s5516, %s5516
                %s5534 = sphi %s5522, %s5522
              $region89: #{depthwise_conv3x3.1} parent=85 // loop_header_branch
                %5531 = sbr.rel (%p5529) target = $region93
              $region90: #{depthwise_conv3x3.1} parent=85 // loop_body
                %v5535 = vld [vmem:[%s5533] sm:$0xff]
                %5536 = vst [vmem:[%s5534] sm:$0xff] %v5535
                %v5537 = vld [vmem:[%s5533 + $0x8] sm:$0xff]
                %5538 = vst [vmem:[%s5534 + $0x8] sm:$0xff] %v5537
                %v5539 = vld [vmem:[%s5533 + $0x10] sm:$0xff]
                %5540 = vst [vmem:[%s5534 + $0x10] sm:$0xff] %v5539
                %v5541 = vld [vmem:[%s5533 + $0x18] sm:$0xff]
                %5542 = vst [vmem:[%s5534 + $0x18] sm:$0xff] %v5541
                %v5543 = vld [vmem:[%s5533 + $0x20] sm:$0xff]
                %5544 = vst [vmem:[%s5534 + $0x40] sm:$0xff] %v5543
                %v5545 = vld [vmem:[%s5533 + $0x28] sm:$0xff]
                %5546 = vst [vmem:[%s5534 + $0x48] sm:$0xff] %v5545
                %v5547 = vld [vmem:[%s5533 + $0x30] sm:$0xff]
                %5548 = vst [vmem:[%s5534 + $0x50] sm:$0xff] %v5547
                %v5549 = vld [vmem:[%s5533 + $0x38] sm:$0xff]
                %5550 = vst [vmem:[%s5534 + $0x58] sm:$0xff] %v5549
                %v5551 = vld [vmem:[%s5533 + $0x40] sm:$0xff]
                %5552 = vst [vmem:[%s5534 + $0x80] sm:$0xff] %v5551
                %v5553 = vld [vmem:[%s5533 + $0x48] sm:$0xff]
                %5554 = vst [vmem:[%s5534 + $0x88] sm:$0xff] %v5553
                %v5555 = vld [vmem:[%s5533 + $0x50] sm:$0xff]
                %5556 = vst [vmem:[%s5534 + $0x90] sm:$0xff] %v5555
                %v5557 = vld [vmem:[%s5533 + $0x58] sm:$0xff]
                %5558 = vst [vmem:[%s5534 + $0x98] sm:$0xff] %v5557
                %v5559 = vld [vmem:[%s5533 + $0x60] sm:$0xff]
                %5560 = vst [vmem:[%s5534 + $0xc0] sm:$0xff] %v5559
                %v5561 = vld [vmem:[%s5533 + $0x68] sm:$0xff]
                %5562 = vst [vmem:[%s5534 + $0xc8] sm:$0xff] %v5561
                %v5563 = vld [vmem:[%s5533 + $0x70] sm:$0xff]
                %5564 = vst [vmem:[%s5534 + $0xd0] sm:$0xff] %v5563
                %v5565 = vld [vmem:[%s5533 + $0x78] sm:$0xff]
                %5566 = vst [vmem:[%s5534 + $0xd8] sm:$0xff] %v5565
                %v5567 = vld [vmem:[%s5533 + $0x80] sm:$0xff]
                %5568 = vst [vmem:[%s5534 + $0x100] sm:$0xff] %v5567
                %v5569 = vld [vmem:[%s5533 + $0x88] sm:$0xff]
                %5570 = vst [vmem:[%s5534 + $0x108] sm:$0xff] %v5569
                %v5571 = vld [vmem:[%s5533 + $0x90] sm:$0xff]
                %5572 = vst [vmem:[%s5534 + $0x110] sm:$0xff] %v5571
                %v5573 = vld [vmem:[%s5533 + $0x98] sm:$0xff]
                %5574 = vst [vmem:[%s5534 + $0x118] sm:$0xff] %v5573
                %v5575 = vld [vmem:[%s5533 + $0xa0] sm:$0xff]
                %5576 = vst [vmem:[%s5534 + $0x140] sm:$0xff] %v5575
                %v5577 = vld [vmem:[%s5533 + $0xa8] sm:$0xff]
                %5578 = vst [vmem:[%s5534 + $0x148] sm:$0xff] %v5577
                %v5579 = vld [vmem:[%s5533 + $0xb0] sm:$0xff]
                %5580 = vst [vmem:[%s5534 + $0x150] sm:$0xff] %v5579
                %v5581 = vld [vmem:[%s5533 + $0xb8] sm:$0xff]
                %5582 = vst [vmem:[%s5534 + $0x158] sm:$0xff] %v5581
                %v5583 = vld [vmem:[%s5533 + $0xc0] sm:$0xff]
                %5584 = vst [vmem:[%s5534 + $0x180] sm:$0xff] %v5583
                %v5585 = vld [vmem:[%s5533 + $0xc8] sm:$0xff]
                %5586 = vst [vmem:[%s5534 + $0x188] sm:$0xff] %v5585
                %v5587 = vld [vmem:[%s5533 + $0xd0] sm:$0xff]
                %5588 = vst [vmem:[%s5534 + $0x190] sm:$0xff] %v5587
                %v5589 = vld [vmem:[%s5533 + $0xd8] sm:$0xff]
                %5590 = vst [vmem:[%s5534 + $0x198] sm:$0xff] %v5589
                %v5591 = vld [vmem:[%s5533 + $0xe0] sm:$0xff]
                %5592 = vst [vmem:[%s5534 + $0x1c0] sm:$0xff] %v5591
                %v5593 = vld [vmem:[%s5533 + $0xe8] sm:$0xff]
                %5594 = vst [vmem:[%s5534 + $0x1c8] sm:$0xff] %v5593
                %v5595 = vld [vmem:[%s5533 + $0xf0] sm:$0xff]
                %5596 = vst [vmem:[%s5534 + $0x1d0] sm:$0xff] %v5595
                %v5597 = vld [vmem:[%s5533 + $0xf8] sm:$0xff]
                %5598 = vst [vmem:[%s5534 + $0x1d8] sm:$0xff] %v5597
                %v5599 = vld [vmem:[%s5533 + $0x100] sm:$0xff]
                %5600 = vst [vmem:[%s5534 + $0x200] sm:$0xff] %v5599
                %v5601 = vld [vmem:[%s5533 + $0x108] sm:$0xff]
                %5602 = vst [vmem:[%s5534 + $0x208] sm:$0xff] %v5601
                %v5603 = vld [vmem:[%s5533 + $0x110] sm:$0xff]
                %5604 = vst [vmem:[%s5534 + $0x210] sm:$0xff] %v5603
                %v5605 = vld [vmem:[%s5533 + $0x118] sm:$0xff]
                %5606 = vst [vmem:[%s5534 + $0x218] sm:$0xff] %v5605
                %v5607 = vld [vmem:[%s5533 + $0x120] sm:$0xff]
                %5608 = vst [vmem:[%s5534 + $0x240] sm:$0xff] %v5607
                %v5609 = vld [vmem:[%s5533 + $0x128] sm:$0xff]
                %5610 = vst [vmem:[%s5534 + $0x248] sm:$0xff] %v5609
                %v5611 = vld [vmem:[%s5533 + $0x130] sm:$0xff]
                %5612 = vst [vmem:[%s5534 + $0x250] sm:$0xff] %v5611
                %v5613 = vld [vmem:[%s5533 + $0x138] sm:$0xff]
                %5614 = vst [vmem:[%s5534 + $0x258] sm:$0xff] %v5613
                %v5615 = vld [vmem:[%s5533 + $0x140] sm:$0xff]
                %5616 = vst [vmem:[%s5534 + $0x280] sm:$0xff] %v5615
                %v5617 = vld [vmem:[%s5533 + $0x148] sm:$0xff]
                %5618 = vst [vmem:[%s5534 + $0x288] sm:$0xff] %v5617
                %v5619 = vld [vmem:[%s5533 + $0x150] sm:$0xff]
                %5620 = vst [vmem:[%s5534 + $0x290] sm:$0xff] %v5619
                %v5621 = vld [vmem:[%s5533 + $0x158] sm:$0xff]
                %5622 = vst [vmem:[%s5534 + $0x298] sm:$0xff] %v5621
                %v5623 = vld [vmem:[%s5533 + $0x160] sm:$0xff]
                %5624 = vst [vmem:[%s5534 + $0x2c0] sm:$0xff] %v5623
                %v5625 = vld [vmem:[%s5533 + $0x168] sm:$0xff]
                %5626 = vst [vmem:[%s5534 + $0x2c8] sm:$0xff] %v5625
                %v5627 = vld [vmem:[%s5533 + $0x170] sm:$0xff]
                %5628 = vst [vmem:[%s5534 + $0x2d0] sm:$0xff] %v5627
                %v5629 = vld [vmem:[%s5533 + $0x178] sm:$0xff]
                %5630 = vst [vmem:[%s5534 + $0x2d8] sm:$0xff] %v5629
                %v5631 = vld [vmem:[%s5533 + $0x180] sm:$0xff]
                %5632 = vst [vmem:[%s5534 + $0x300] sm:$0xff] %v5631
                %v5633 = vld [vmem:[%s5533 + $0x188] sm:$0xff]
                %5634 = vst [vmem:[%s5534 + $0x308] sm:$0xff] %v5633
                %v5635 = vld [vmem:[%s5533 + $0x190] sm:$0xff]
                %5636 = vst [vmem:[%s5534 + $0x310] sm:$0xff] %v5635
                %v5637 = vld [vmem:[%s5533 + $0x198] sm:$0xff]
                %5638 = vst [vmem:[%s5534 + $0x318] sm:$0xff] %v5637
                %v5639 = vld [vmem:[%s5533 + $0x1a0] sm:$0xff]
                %5640 = vst [vmem:[%s5534 + $0x340] sm:$0xff] %v5639
                %v5641 = vld [vmem:[%s5533 + $0x1a8] sm:$0xff]
                %5642 = vst [vmem:[%s5534 + $0x348] sm:$0xff] %v5641
                %v5643 = vld [vmem:[%s5533 + $0x1b0] sm:$0xff]
                %5644 = vst [vmem:[%s5534 + $0x350] sm:$0xff] %v5643
                %v5645 = vld [vmem:[%s5533 + $0x1b8] sm:$0xff]
                %5646 = vst [vmem:[%s5534 + $0x358] sm:$0xff] %v5645
                %v5647 = vld [vmem:[%s5533 + $0x1c0] sm:$0xff]
                %5648 = vst [vmem:[%s5534 + $0x380] sm:$0xff] %v5647
                %v5649 = vld [vmem:[%s5533 + $0x1c8] sm:$0xff]
                %5650 = vst [vmem:[%s5534 + $0x388] sm:$0xff] %v5649
                %v5651 = vld [vmem:[%s5533 + $0x1d0] sm:$0xff]
                %5652 = vst [vmem:[%s5534 + $0x390] sm:$0xff] %v5651
                %v5653 = vld [vmem:[%s5533 + $0x1d8] sm:$0xff]
                %5654 = vst [vmem:[%s5534 + $0x398] sm:$0xff] %v5653
                %v5655 = vld [vmem:[%s5533 + $0x1e0] sm:$0xff]
                %5656 = vst [vmem:[%s5534 + $0x3c0] sm:$0xff] %v5655
                %v5657 = vld [vmem:[%s5533 + $0x1e8] sm:$0xff]
                %5658 = vst [vmem:[%s5534 + $0x3c8] sm:$0xff] %v5657
                %v5659 = vld [vmem:[%s5533 + $0x1f0] sm:$0xff]
                %5660 = vst [vmem:[%s5534 + $0x3d0] sm:$0xff] %v5659
                %v5661 = vld [vmem:[%s5533 + $0x1f8] sm:$0xff]
                %5662 = vst [vmem:[%s5534 + $0x3d8] sm:$0xff] %v5661
                %v5663 = vld [vmem:[%s5533 + $0x200] sm:$0xff]
                %5664 = vst [vmem:[%s5534 + $0x400] sm:$0xff] %v5663
                %v5665 = vld [vmem:[%s5533 + $0x208] sm:$0xff]
                %5666 = vst [vmem:[%s5534 + $0x408] sm:$0xff] %v5665
                %v5667 = vld [vmem:[%s5533 + $0x210] sm:$0xff]
                %5668 = vst [vmem:[%s5534 + $0x410] sm:$0xff] %v5667
                %v5669 = vld [vmem:[%s5533 + $0x218] sm:$0xff]
                %5670 = vst [vmem:[%s5534 + $0x418] sm:$0xff] %v5669
                %v5671 = vld [vmem:[%s5533 + $0x220] sm:$0xff]
                %5672 = vst [vmem:[%s5534 + $0x440] sm:$0xff] %v5671
                %v5673 = vld [vmem:[%s5533 + $0x228] sm:$0xff]
                %5674 = vst [vmem:[%s5534 + $0x448] sm:$0xff] %v5673
                %v5675 = vld [vmem:[%s5533 + $0x230] sm:$0xff]
                %5676 = vst [vmem:[%s5534 + $0x450] sm:$0xff] %v5675
                %v5677 = vld [vmem:[%s5533 + $0x238] sm:$0xff]
                %5678 = vst [vmem:[%s5534 + $0x458] sm:$0xff] %v5677
                %v5679 = vld [vmem:[%s5533 + $0x240] sm:$0xff]
                %5680 = vst [vmem:[%s5534 + $0x480] sm:$0xff] %v5679
                %v5681 = vld [vmem:[%s5533 + $0x248] sm:$0xff]
                %5682 = vst [vmem:[%s5534 + $0x488] sm:$0xff] %v5681
                %v5683 = vld [vmem:[%s5533 + $0x250] sm:$0xff]
                %5684 = vst [vmem:[%s5534 + $0x490] sm:$0xff] %v5683
                %v5685 = vld [vmem:[%s5533 + $0x258] sm:$0xff]
                %5686 = vst [vmem:[%s5534 + $0x498] sm:$0xff] %v5685
                %v5687 = vld [vmem:[%s5533 + $0x260] sm:$0xff]
                %5688 = vst [vmem:[%s5534 + $0x4c0] sm:$0xff] %v5687
                %v5689 = vld [vmem:[%s5533 + $0x268] sm:$0xff]
                %5690 = vst [vmem:[%s5534 + $0x4c8] sm:$0xff] %v5689
                %v5691 = vld [vmem:[%s5533 + $0x270] sm:$0xff]
                %5692 = vst [vmem:[%s5534 + $0x4d0] sm:$0xff] %v5691
                %v5693 = vld [vmem:[%s5533 + $0x278] sm:$0xff]
                %5694 = vst [vmem:[%s5534 + $0x4d8] sm:$0xff] %v5693
                %v5695 = vld [vmem:[%s5533 + $0x280] sm:$0xff]
                %5696 = vst [vmem:[%s5534 + $0x500] sm:$0xff] %v5695
                %v5697 = vld [vmem:[%s5533 + $0x288] sm:$0xff]
                %5698 = vst [vmem:[%s5534 + $0x508] sm:$0xff] %v5697
                %v5699 = vld [vmem:[%s5533 + $0x290] sm:$0xff]
                %5700 = vst [vmem:[%s5534 + $0x510] sm:$0xff] %v5699
                %v5701 = vld [vmem:[%s5533 + $0x298] sm:$0xff]
                %5702 = vst [vmem:[%s5534 + $0x518] sm:$0xff] %v5701
                %v5703 = vld [vmem:[%s5533 + $0x2a0] sm:$0xff]
                %5704 = vst [vmem:[%s5534 + $0x540] sm:$0xff] %v5703
                %v5705 = vld [vmem:[%s5533 + $0x2a8] sm:$0xff]
                %5706 = vst [vmem:[%s5534 + $0x548] sm:$0xff] %v5705
                %v5707 = vld [vmem:[%s5533 + $0x2b0] sm:$0xff]
                %5708 = vst [vmem:[%s5534 + $0x550] sm:$0xff] %v5707
                %v5709 = vld [vmem:[%s5533 + $0x2b8] sm:$0xff]
                %5710 = vst [vmem:[%s5534 + $0x558] sm:$0xff] %v5709
                %v5711 = vld [vmem:[%s5533 + $0x2c0] sm:$0xff]
                %5712 = vst [vmem:[%s5534 + $0x580] sm:$0xff] %v5711
                %v5713 = vld [vmem:[%s5533 + $0x2c8] sm:$0xff]
                %5714 = vst [vmem:[%s5534 + $0x588] sm:$0xff] %v5713
                %v5715 = vld [vmem:[%s5533 + $0x2d0] sm:$0xff]
                %5716 = vst [vmem:[%s5534 + $0x590] sm:$0xff] %v5715
                %v5717 = vld [vmem:[%s5533 + $0x2d8] sm:$0xff]
                %5718 = vst [vmem:[%s5534 + $0x598] sm:$0xff] %v5717
                %v5719 = vld [vmem:[%s5533 + $0x2e0] sm:$0xff]
                %5720 = vst [vmem:[%s5534 + $0x5c0] sm:$0xff] %v5719
                %v5721 = vld [vmem:[%s5533 + $0x2e8] sm:$0xff]
                %5722 = vst [vmem:[%s5534 + $0x5c8] sm:$0xff] %v5721
                %v5723 = vld [vmem:[%s5533 + $0x2f0] sm:$0xff]
                %5724 = vst [vmem:[%s5534 + $0x5d0] sm:$0xff] %v5723
                %v5725 = vld [vmem:[%s5533 + $0x2f8] sm:$0xff]
                %5726 = vst [vmem:[%s5534 + $0x5d8] sm:$0xff] %v5725
                %v5727 = vld [vmem:[%s5533 + $0x300] sm:$0xff]
                %5728 = vst [vmem:[%s5534 + $0x600] sm:$0xff] %v5727
                %v5729 = vld [vmem:[%s5533 + $0x308] sm:$0xff]
                %5730 = vst [vmem:[%s5534 + $0x608] sm:$0xff] %v5729
                %v5731 = vld [vmem:[%s5533 + $0x310] sm:$0xff]
                %5732 = vst [vmem:[%s5534 + $0x610] sm:$0xff] %v5731
                %v5733 = vld [vmem:[%s5533 + $0x318] sm:$0xff]
                %5734 = vst [vmem:[%s5534 + $0x618] sm:$0xff] %v5733
                %v5735 = vld [vmem:[%s5533 + $0x320] sm:$0xff]
                %5736 = vst [vmem:[%s5534 + $0x640] sm:$0xff] %v5735
                %v5737 = vld [vmem:[%s5533 + $0x328] sm:$0xff]
                %5738 = vst [vmem:[%s5534 + $0x648] sm:$0xff] %v5737
                %v5739 = vld [vmem:[%s5533 + $0x330] sm:$0xff]
                %5740 = vst [vmem:[%s5534 + $0x650] sm:$0xff] %v5739
                %v5741 = vld [vmem:[%s5533 + $0x338] sm:$0xff]
                %5742 = vst [vmem:[%s5534 + $0x658] sm:$0xff] %v5741
                %v5743 = vld [vmem:[%s5533 + $0x340] sm:$0xff]
                %5744 = vst [vmem:[%s5534 + $0x680] sm:$0xff] %v5743
                %v5745 = vld [vmem:[%s5533 + $0x348] sm:$0xff]
                %5746 = vst [vmem:[%s5534 + $0x688] sm:$0xff] %v5745
                %v5747 = vld [vmem:[%s5533 + $0x350] sm:$0xff]
                %5748 = vst [vmem:[%s5534 + $0x690] sm:$0xff] %v5747
                %v5749 = vld [vmem:[%s5533 + $0x358] sm:$0xff]
                %5750 = vst [vmem:[%s5534 + $0x698] sm:$0xff] %v5749
                %v5751 = vld [vmem:[%s5533 + $0x360] sm:$0xff]
                %5752 = vst [vmem:[%s5534 + $0x6c0] sm:$0xff] %v5751
                %v5753 = vld [vmem:[%s5533 + $0x368] sm:$0xff]
                %5754 = vst [vmem:[%s5534 + $0x6c8] sm:$0xff] %v5753
                %v5755 = vld [vmem:[%s5533 + $0x370] sm:$0xff]
                %5756 = vst [vmem:[%s5534 + $0x6d0] sm:$0xff] %v5755
                %v5757 = vld [vmem:[%s5533 + $0x378] sm:$0xff]
                %5758 = vst [vmem:[%s5534 + $0x6d8] sm:$0xff] %v5757
              $region91: #{depthwise_conv3x3.1} parent=85 // loop_footer
                %s5532 = sadd.s32 1, %s5528
              $region92: #{depthwise_conv3x3.1} parent=85 // loop_footer_branch
                %5527 = sbr.rel target = $region88
              $region93: #{depthwise_conv3x3.1} parent=85 // loop_exit
                _
            $region86: #{depthwise_conv3x3.1} parent=81 // pred_fallthru
              _
            // Predicated region
            $region94: #{depthwise_conv3x3.1} parent=81 // pred_check
              _
            $region95: #{depthwise_conv3x3.1} parent=81 // pred_check_branch
              %5760 = sbr.rel target = $region97
            $region96: #{depthwise_conv3x3.1} parent=81 // pred_region
              _
            $region97: #{depthwise_conv3x3.1} parent=81 // pred_fallthru
              _
          $region82: #{depthwise_conv3x3.1} parent=77 // pred_fallthru
            _
          %5761 = vnop
        $region78: #{depthwise_conv3x3.1} parent=65 // pred_fallthru
          _
      $region66: #{depthwise_conv3x3.1} parent=5 // pred_fallthru
        _
      %p5762 = scmp.le.s32.totalorder 2, %s8
      // Predicated region
      $region98: #{depthwise_conv3x3.1} parent=5 // pred_check
        %p5763 = pneg %p5762
      $region99: #{depthwise_conv3x3.1} parent=5 // pred_check_branch
        %5765 = sbr.rel (%p5763) target = $region101
      $region100: #{depthwise_conv3x3.1} parent=5 // pred_region
        %s5766 = ssub.s32 %s8, 2
        // Predicated region
        $region102: #{depthwise_conv3x3.1} parent=100 // pred_check
          %p5767 = pneg %p89
        $region103: #{depthwise_conv3x3.1} parent=100 // pred_check_branch
          %5769 = sbr.rel (%p5767) target = $region105
        $region104: #{depthwise_conv3x3.1} parent=100 // pred_region
          %s5770 = sand.u32 %s74, 1
          %s5771 = sand.u32 %s74, 1
          %s5772 = smul.addr %s5771, 896
          %s5773 = scalar_lea.vmem [#allocation4], %s5772
        $region105: #{depthwise_conv3x3.1} parent=100 // pred_fallthru
          _
      $region101: #{depthwise_conv3x3.1} parent=5 // pred_fallthru
        _
    $region6: #{depthwise_conv3x3.1} parent=1 // loop_footer
      %s12 = sadd.s32 1, %s8
    $region7: #{depthwise_conv3x3.1} parent=1 // loop_footer_branch
      %7 = sbr.rel target = $region3
    $region8: #{depthwise_conv3x3.1} parent=1 // loop_exit
      _

</llo_original>
